<compile_context>
chip_gen: v6e
topology: v6e:2x2x1
jax: 0.10.0
libtpu: 0.0.40
codegen_flags: <defaults>
</compile_context>

<pallas_src>
import functools

import jax
import jax.numpy as jnp
from jax.experimental import pallas as pl
from jax.experimental.pallas import tpu as pltpu


def _make_tap_masks(h, w):
    """(9, H*W) f32 0/1 masks: mask[dy*3+dx, p]==1 iff the (dy,dx) tap source
    pixel for output pixel p lies inside the image (i.e. not in the zero pad)."""
    rows = jnp.repeat(jnp.arange(h), w)     # (H*W,)
    cols = jnp.tile(jnp.arange(w), h)       # (H*W,)
    masks = []
    for dy in range(3):
        for dx in range(3):
            ok = jnp.ones((h * w,), dtype=bool)
            if dy == 0:
                ok = ok & (rows >= 1)
            if dy == 2:
                ok = ok & (rows <= h - 2)
            if dx == 0:
                ok = ok & (cols >= 1)
            if dx == 2:
                ok = ok & (cols <= w - 2)
            masks.append(ok)
    return jnp.stack(masks).astype(jnp.float32)


def _resblock_kernel(x_ref, w1_ref, b1_ref, w2_ref, b2_ref, m_ref, o_ref, *,
                     width, res_scale):
    # x_ref : (1, C, H*W) f32   channel-major, flat spatial (lane-dense)
    # w*_ref: (9, C, C)   bf16  per-tap (dy*3+dx, Cout, Cin) matrices
    # b*_ref: (C, 1)      f32
    # m_ref : (9, H*W)    f32   0/1 border masks (== zero-padding semantics)
    # o_ref : (1, C, H*W) f32
    _, _, HW = x_ref.shape
    x = x_ref[0]              # (C, HW) f32 -- identity branch stays f32
    masks = m_ref[...]        # (9, HW) f32

    def conv3x3(inp, w_ref, b_ref):
        # out[o, p] = b[o] + sum_{dy,dx,c} w[dy,dx,o,c] * src(inp)[c, p],
        # where src is the flat-spatial shift by (dy-1)*W + (dx-1); taps that
        # fall outside the image are zeroed by the precomputed masks, which is
        # exactly PyTorch's padding=1 zero padding.
        acc = None
        for dy in range(3):
            for dx in range(3):
                t = dy * 3 + dx
                off = (dy - 1) * width + (dx - 1)
                # result[p] = inp[p + off]  (wrapped lanes are masked away)
                v = inp if off == 0 else pltpu.roll(inp, (-off) % HW, axis=1)
                if t != 4:                        # center tap needs no mask
                    v = v * masks[t:t + 1, :]     # f32 0/1, broadcast over C
                term = jnp.dot(w_ref[t], v.astype(jnp.bfloat16),
                               preferred_element_type=jnp.float32)
                acc = term if acc is None else acc + term
        return acc + b_ref[...]                   # (C, HW) f32

    act = jnp.maximum(conv3x3(x, w1_ref, b1_ref), 0.0)       # conv1 + ReLU
    out = conv3x3(act, w2_ref, b2_ref)                        # conv2
    o_ref[0] = (x + out * res_scale).astype(o_ref.dtype)      # residual add


def residual_block_no_bn(x_nchw, w1, b1, w2, b2, res_scale=1.0):
    """x_nchw: (N, C, H, W); w*: (Cout, Cin, 3, 3) PyTorch OIHW; b*: (Cout,)."""
    N, C, H, W = x_nchw.shape
    HW = H * W

    # Free (contiguous) reshape to channel-major flat-spatial; no transposes.
    x_flat = x_nchw.reshape(N, C, HW)

    # OIHW -> (tap=dy*3+dx, Cout, Cin), bf16 MXU operands.
    def prep_w(w):
        return jnp.transpose(w, (2, 3, 0, 1)).reshape(9, C, C).astype(jnp.bfloat16)

    w1_r, w2_r = prep_w(w1), prep_w(w2)
    b1_r = b1.reshape(C, 1).astype(jnp.float32)
    b2_r = b2.reshape(C, 1).astype(jnp.float32)
    masks = _make_tap_masks(H, W)                 # (9, HW) f32

    kernel = functools.partial(_resblock_kernel, width=W,
                               res_scale=float(res_scale))

    out_flat = pl.pallas_call(
        kernel,
        out_shape=jax.ShapeDtypeStruct((N, C, HW), x_nchw.dtype),
        grid_spec=pltpu.PrefetchScalarGridSpec(
            num_scalar_prefetch=0,
            grid=(N,),
            in_specs=[
                pl.BlockSpec((1, C, HW), lambda n: (n, 0, 0)),   # x (per image)
                pl.BlockSpec((9, C, C), lambda n: (0, 0, 0)),    # w1 taps
                pl.BlockSpec((C, 1), lambda n: (0, 0)),          # b1
                pl.BlockSpec((9, C, C), lambda n: (0, 0, 0)),    # w2 taps
                pl.BlockSpec((C, 1), lambda n: (0, 0)),          # b2
                pl.BlockSpec((9, HW), lambda n: (0, 0)),         # border masks
            ],
            out_specs=pl.BlockSpec((1, C, HW), lambda n: (n, 0, 0)),
        ),
        compiler_params=pltpu.CompilerParams(
            dimension_semantics=("parallel",),
            vmem_limit_bytes=32 * 1024 * 1024),
    )(x_flat, w1_r, b1_r, w2_r, b2_r, masks)

    return out_flat.reshape(N, C, H, W)


def _reference_forward(x_nchw, w1, b1, w2, b2, res_scale):
    """Pure-JAX reference (matches PyTorch nn.Conv2d semantics)."""
    def conv(x, w, b):
        y = jax.lax.conv_general_dilated(
            x, w, window_strides=(1, 1), padding=((1, 1), (1, 1)),
            dimension_numbers=('NCHW', 'OIHW', 'NCHW'))
        return y + b[None, :, None, None]
    h = jax.nn.relu(conv(x_nchw, w1, b1))
    out = conv(h, w2, b2)
    return x_nchw + out * res_scale


if __name__ == "__main__":
    key = jax.random.PRNGKey(0)
    N, C, H, W = 2, 64, 16, 16   # mid_channels=64 (module default), small spatial
    res_scale = 1.0

    k_x, k_w1, k_w2 = jax.random.split(key, 3)
    x = jax.random.normal(k_x, (N, C, H, W), dtype=jnp.float32)

    # default_init_weights: kaiming_normal(fan_in, relu) * 0.1, bias = 0
    fan_in = C * 3 * 3
    std = (2.0 / fan_in) ** 0.5
    w1 = jax.random.normal(k_w1, (C, C, 3, 3), dtype=jnp.float32) * std * 0.1
    w2 = jax.random.normal(k_w2, (C, C, 3, 3), dtype=jnp.float32) * std * 0.1
    b1 = jnp.zeros((C,), jnp.float32)
    b2 = jnp.zeros((C,), jnp.float32)

    out = residual_block_no_bn(x, w1, b1, w2, b2, res_scale)
    out = jax.block_until_ready(out)

    ref = _reference_forward(x, w1, b1, w2, b2, res_scale)
    assert out.shape == (N, C, H, W)
    # bf16 MXU operands (with f32 accumulation) introduce ~1e-4-level deviation.
    assert jnp.allclose(out, ref, rtol=2e-3, atol=2e-3), "mismatch vs reference"

    print("KERNEL_OK")
</pallas_src>

<mosaic_0001>
module attributes {stable_mosaic.version = 11 : i64} {
  func.func @_resblock_kernel(%arg0: i32, %arg1: memref<1x64x256xf32, #tpu.memory_space<vmem>>, %arg2: memref<9x64x64xbf16, #tpu.memory_space<vmem>>, %arg3: memref<64x1xf32, #tpu.memory_space<vmem>>, %arg4: memref<9x64x64xbf16, #tpu.memory_space<vmem>>, %arg5: memref<64x1xf32, #tpu.memory_space<vmem>>, %arg6: memref<9x256xf32, #tpu.memory_space<vmem>>, %arg7: memref<1x64x256xf32, #tpu.memory_space<vmem>>) attributes {dimension_semantics = [#tpu.dimension_semantics<parallel>], iteration_bounds = array<i64: 2>, scalar_prefetch = 0 : i64, scratch_operands = 0 : i64, tpu.core_type = #tpu.core_type<tc>, window_params = [{transform_indices = @transform_0, window_bounds = array<i64: 1, 64, 256>}, {pipeline_mode = #tpu.pipeline_mode<synchronous>, transform_indices = @transform_1, window_bounds = array<i64: 9, 64, 64>}, {pipeline_mode = #tpu.pipeline_mode<synchronous>, transform_indices = @transform_2, window_bounds = array<i64: 64, 1>}, {pipeline_mode = #tpu.pipeline_mode<synchronous>, transform_indices = @transform_3, window_bounds = array<i64: 9, 64, 64>}, {pipeline_mode = #tpu.pipeline_mode<synchronous>, transform_indices = @transform_4, window_bounds = array<i64: 64, 1>}, {pipeline_mode = #tpu.pipeline_mode<synchronous>, transform_indices = @transform_5, window_bounds = array<i64: 9, 256>}, {transform_indices = @transform_6, window_bounds = array<i64: 1, 64, 256>}]} {
    %c0 = arith.constant 0 : index
    %c0_0 = arith.constant 0 : index
    %c0_1 = arith.constant 0 : index
    %0 = vector.load %arg1[%c0, %c0_0, %c0_1] : memref<1x64x256xf32, #tpu.memory_space<vmem>>, vector<1x64x256xf32>
    %1 = vector.shape_cast %0 : vector<1x64x256xf32> to vector<64x256xf32>
    %c0_2 = arith.constant 0 : index
    %c0_3 = arith.constant 0 : index
    %2 = vector.load %arg6[%c0_2, %c0_3] : memref<9x256xf32, #tpu.memory_space<vmem>>, vector<9x256xf32>
    %c17_i32 = arith.constant 17 : i32
    %3 = tpu.dynamic_rotate %1 by %c17_i32 dim 1 : vector<64x256xf32>, i32 -> vector<64x256xf32>
    %4 = vector.extract_strided_slice %2 {offsets = [0, 0], sizes = [1, 256], strides = [1, 1]} : vector<9x256xf32> to vector<1x256xf32>
    %5 = vector.broadcast %4 : vector<1x256xf32> to vector<64x256xf32>
    %6 = arith.mulf %3, %5 : vector<64x256xf32>
    %c0_4 = arith.constant 0 : index
    %c0_5 = arith.constant 0 : index
    %c0_6 = arith.constant 0 : index
    %7 = vector.load %arg2[%c0_4, %c0_5, %c0_6] : memref<9x64x64xbf16, #tpu.memory_space<vmem>>, vector<1x64x64xbf16>
    %8 = vector.shape_cast %7 : vector<1x64x64xbf16> to vector<64x64xbf16>
    %9 = arith.truncf %6 : vector<64x256xf32> to vector<64x256xbf16>
    %cst = arith.constant dense<0.000000e+00> : vector<64x256xf32>
    %10 = tpu.matmul %8, %9, %cst {dimension_numbers = #tpu.dot_dimension_numbers<[1], [0], [0], [1], [0, 0, 1, 1], [], []>} : vector<64x64xbf16>, vector<64x256xbf16>, vector<64x256xf32> -> vector<64x256xf32>
    %c16_i32 = arith.constant 16 : i32
    %11 = tpu.dynamic_rotate %1 by %c16_i32 dim 1 : vector<64x256xf32>, i32 -> vector<64x256xf32>
    %12 = vector.extract_strided_slice %2 {offsets = [1, 0], sizes = [1, 256], strides = [1, 1]} : vector<9x256xf32> to vector<1x256xf32>
    %13 = vector.broadcast %12 : vector<1x256xf32> to vector<64x256xf32>
    %14 = arith.mulf %11, %13 : vector<64x256xf32>
    %c1 = arith.constant 1 : index
    %c0_7 = arith.constant 0 : index
    %c0_8 = arith.constant 0 : index
    %15 = vector.load %arg2[%c1, %c0_7, %c0_8] : memref<9x64x64xbf16, #tpu.memory_space<vmem>>, vector<1x64x64xbf16>
    %16 = vector.shape_cast %15 : vector<1x64x64xbf16> to vector<64x64xbf16>
    %17 = arith.truncf %14 : vector<64x256xf32> to vector<64x256xbf16>
    %cst_9 = arith.constant dense<0.000000e+00> : vector<64x256xf32>
    %18 = tpu.matmul %16, %17, %cst_9 {dimension_numbers = #tpu.dot_dimension_numbers<[1], [0], [0], [1], [0, 0, 1, 1], [], []>} : vector<64x64xbf16>, vector<64x256xbf16>, vector<64x256xf32> -> vector<64x256xf32>
    %19 = arith.addf %10, %18 : vector<64x256xf32>
    %c15_i32 = arith.constant 15 : i32
    %20 = tpu.dynamic_rotate %1 by %c15_i32 dim 1 : vector<64x256xf32>, i32 -> vector<64x256xf32>
    %21 = vector.extract_strided_slice %2 {offsets = [2, 0], sizes = [1, 256], strides = [1, 1]} : vector<9x256xf32> to vector<1x256xf32>
    %22 = vector.broadcast %21 : vector<1x256xf32> to vector<64x256xf32>
    %23 = arith.mulf %20, %22 : vector<64x256xf32>
    %c2 = arith.constant 2 : index
    %c0_10 = arith.constant 0 : index
    %c0_11 = arith.constant 0 : index
    %24 = vector.load %arg2[%c2, %c0_10, %c0_11] : memref<9x64x64xbf16, #tpu.memory_space<vmem>>, vector<1x64x64xbf16>
    %25 = vector.shape_cast %24 : vector<1x64x64xbf16> to vector<64x64xbf16>
    %26 = arith.truncf %23 : vector<64x256xf32> to vector<64x256xbf16>
    %cst_12 = arith.constant dense<0.000000e+00> : vector<64x256xf32>
    %27 = tpu.matmul %25, %26, %cst_12 {dimension_numbers = #tpu.dot_dimension_numbers<[1], [0], [0], [1], [0, 0, 1, 1], [], []>} : vector<64x64xbf16>, vector<64x256xbf16>, vector<64x256xf32> -> vector<64x256xf32>
    %28 = arith.addf %19, %27 : vector<64x256xf32>
    %c1_i32 = arith.constant 1 : i32
    %29 = tpu.dynamic_rotate %1 by %c1_i32 dim 1 : vector<64x256xf32>, i32 -> vector<64x256xf32>
    %30 = vector.extract_strided_slice %2 {offsets = [3, 0], sizes = [1, 256], strides = [1, 1]} : vector<9x256xf32> to vector<1x256xf32>
    %31 = vector.broadcast %30 : vector<1x256xf32> to vector<64x256xf32>
    %32 = arith.mulf %29, %31 : vector<64x256xf32>
    %c3 = arith.constant 3 : index
    %c0_13 = arith.constant 0 : index
    %c0_14 = arith.constant 0 : index
    %33 = vector.load %arg2[%c3, %c0_13, %c0_14] : memref<9x64x64xbf16, #tpu.memory_space<vmem>>, vector<1x64x64xbf16>
    %34 = vector.shape_cast %33 : vector<1x64x64xbf16> to vector<64x64xbf16>
    %35 = arith.truncf %32 : vector<64x256xf32> to vector<64x256xbf16>
    %cst_15 = arith.constant dense<0.000000e+00> : vector<64x256xf32>
    %36 = tpu.matmul %34, %35, %cst_15 {dimension_numbers = #tpu.dot_dimension_numbers<[1], [0], [0], [1], [0, 0, 1, 1], [], []>} : vector<64x64xbf16>, vector<64x256xbf16>, vector<64x256xf32> -> vector<64x256xf32>
    %37 = arith.addf %28, %36 : vector<64x256xf32>
    %c4 = arith.constant 4 : index
    %c0_16 = arith.constant 0 : index
    %c0_17 = arith.constant 0 : index
    %38 = vector.load %arg2[%c4, %c0_16, %c0_17] : memref<9x64x64xbf16, #tpu.memory_space<vmem>>, vector<1x64x64xbf16>
    %39 = vector.shape_cast %38 : vector<1x64x64xbf16> to vector<64x64xbf16>
    %40 = arith.truncf %1 : vector<64x256xf32> to vector<64x256xbf16>
    %cst_18 = arith.constant dense<0.000000e+00> : vector<64x256xf32>
    %41 = tpu.matmul %39, %40, %cst_18 {dimension_numbers = #tpu.dot_dimension_numbers<[1], [0], [0], [1], [0, 0, 1, 1], [], []>} : vector<64x64xbf16>, vector<64x256xbf16>, vector<64x256xf32> -> vector<64x256xf32>
    %42 = arith.addf %37, %41 : vector<64x256xf32>
    %c255_i32 = arith.constant 255 : i32
    %43 = tpu.dynamic_rotate %1 by %c255_i32 dim 1 : vector<64x256xf32>, i32 -> vector<64x256xf32>
    %44 = vector.extract_strided_slice %2 {offsets = [5, 0], sizes = [1, 256], strides = [1, 1]} : vector<9x256xf32> to vector<1x256xf32>
    %45 = vector.broadcast %44 : vector<1x256xf32> to vector<64x256xf32>
    %46 = arith.mulf %43, %45 : vector<64x256xf32>
    %c5 = arith.constant 5 : index
    %c0_19 = arith.constant 0 : index
    %c0_20 = arith.constant 0 : index
    %47 = vector.load %arg2[%c5, %c0_19, %c0_20] : memref<9x64x64xbf16, #tpu.memory_space<vmem>>, vector<1x64x64xbf16>
    %48 = vector.shape_cast %47 : vector<1x64x64xbf16> to vector<64x64xbf16>
    %49 = arith.truncf %46 : vector<64x256xf32> to vector<64x256xbf16>
    %cst_21 = arith.constant dense<0.000000e+00> : vector<64x256xf32>
    %50 = tpu.matmul %48, %49, %cst_21 {dimension_numbers = #tpu.dot_dimension_numbers<[1], [0], [0], [1], [0, 0, 1, 1], [], []>} : vector<64x64xbf16>, vector<64x256xbf16>, vector<64x256xf32> -> vector<64x256xf32>
    %51 = arith.addf %42, %50 : vector<64x256xf32>
    %c241_i32 = arith.constant 241 : i32
    %52 = tpu.dynamic_rotate %1 by %c241_i32 dim 1 : vector<64x256xf32>, i32 -> vector<64x256xf32>
    %53 = vector.extract_strided_slice %2 {offsets = [6, 0], sizes = [1, 256], strides = [1, 1]} : vector<9x256xf32> to vector<1x256xf32>
    %54 = vector.broadcast %53 : vector<1x256xf32> to vector<64x256xf32>
    %55 = arith.mulf %52, %54 : vector<64x256xf32>
    %c6 = arith.constant 6 : index
    %c0_22 = arith.constant 0 : index
    %c0_23 = arith.constant 0 : index
    %56 = vector.load %arg2[%c6, %c0_22, %c0_23] : memref<9x64x64xbf16, #tpu.memory_space<vmem>>, vector<1x64x64xbf16>
    %57 = vector.shape_cast %56 : vector<1x64x64xbf16> to vector<64x64xbf16>
    %58 = arith.truncf %55 : vector<64x256xf32> to vector<64x256xbf16>
    %cst_24 = arith.constant dense<0.000000e+00> : vector<64x256xf32>
    %59 = tpu.matmul %57, %58, %cst_24 {dimension_numbers = #tpu.dot_dimension_numbers<[1], [0], [0], [1], [0, 0, 1, 1], [], []>} : vector<64x64xbf16>, vector<64x256xbf16>, vector<64x256xf32> -> vector<64x256xf32>
    %60 = arith.addf %51, %59 : vector<64x256xf32>
    %c240_i32 = arith.constant 240 : i32
    %61 = tpu.dynamic_rotate %1 by %c240_i32 dim 1 : vector<64x256xf32>, i32 -> vector<64x256xf32>
    %62 = vector.extract_strided_slice %2 {offsets = [7, 0], sizes = [1, 256], strides = [1, 1]} : vector<9x256xf32> to vector<1x256xf32>
    %63 = vector.broadcast %62 : vector<1x256xf32> to vector<64x256xf32>
    %64 = arith.mulf %61, %63 : vector<64x256xf32>
    %c7 = arith.constant 7 : index
    %c0_25 = arith.constant 0 : index
    %c0_26 = arith.constant 0 : index
    %65 = vector.load %arg2[%c7, %c0_25, %c0_26] : memref<9x64x64xbf16, #tpu.memory_space<vmem>>, vector<1x64x64xbf16>
    %66 = vector.shape_cast %65 : vector<1x64x64xbf16> to vector<64x64xbf16>
    %67 = arith.truncf %64 : vector<64x256xf32> to vector<64x256xbf16>
    %cst_27 = arith.constant dense<0.000000e+00> : vector<64x256xf32>
    %68 = tpu.matmul %66, %67, %cst_27 {dimension_numbers = #tpu.dot_dimension_numbers<[1], [0], [0], [1], [0, 0, 1, 1], [], []>} : vector<64x64xbf16>, vector<64x256xbf16>, vector<64x256xf32> -> vector<64x256xf32>
    %69 = arith.addf %60, %68 : vector<64x256xf32>
    %c239_i32 = arith.constant 239 : i32
    %70 = tpu.dynamic_rotate %1 by %c239_i32 dim 1 : vector<64x256xf32>, i32 -> vector<64x256xf32>
    %71 = vector.extract_strided_slice %2 {offsets = [8, 0], sizes = [1, 256], strides = [1, 1]} : vector<9x256xf32> to vector<1x256xf32>
    %72 = vector.broadcast %71 : vector<1x256xf32> to vector<64x256xf32>
    %73 = arith.mulf %70, %72 : vector<64x256xf32>
    %c8 = arith.constant 8 : index
    %c0_28 = arith.constant 0 : index
    %c0_29 = arith.constant 0 : index
    %74 = vector.load %arg2[%c8, %c0_28, %c0_29] : memref<9x64x64xbf16, #tpu.memory_space<vmem>>, vector<1x64x64xbf16>
    %75 = vector.shape_cast %74 : vector<1x64x64xbf16> to vector<64x64xbf16>
    %76 = arith.truncf %73 : vector<64x256xf32> to vector<64x256xbf16>
    %cst_30 = arith.constant dense<0.000000e+00> : vector<64x256xf32>
    %77 = tpu.matmul %75, %76, %cst_30 {dimension_numbers = #tpu.dot_dimension_numbers<[1], [0], [0], [1], [0, 0, 1, 1], [], []>} : vector<64x64xbf16>, vector<64x256xbf16>, vector<64x256xf32> -> vector<64x256xf32>
    %78 = arith.addf %69, %77 : vector<64x256xf32>
    %c0_31 = arith.constant 0 : index
    %c0_32 = arith.constant 0 : index
    %79 = vector.load %arg3[%c0_31, %c0_32] : memref<64x1xf32, #tpu.memory_space<vmem>>, vector<64x1xf32>
    %80 = vector.broadcast %79 : vector<64x1xf32> to vector<64x256xf32>
    %81 = arith.addf %78, %80 : vector<64x256xf32>
    %cst_33 = arith.constant 0.000000e+00 : f32
    %82 = vector.broadcast %cst_33 : f32 to vector<64x256xf32>
    %83 = arith.maximumf %81, %82 : vector<64x256xf32>
    %c17_i32_34 = arith.constant 17 : i32
    %84 = tpu.dynamic_rotate %83 by %c17_i32_34 dim 1 : vector<64x256xf32>, i32 -> vector<64x256xf32>
    %85 = vector.extract_strided_slice %2 {offsets = [0, 0], sizes = [1, 256], strides = [1, 1]} : vector<9x256xf32> to vector<1x256xf32>
    %86 = vector.broadcast %85 : vector<1x256xf32> to vector<64x256xf32>
    %87 = arith.mulf %84, %86 : vector<64x256xf32>
    %c0_35 = arith.constant 0 : index
    %c0_36 = arith.constant 0 : index
    %c0_37 = arith.constant 0 : index
    %88 = vector.load %arg4[%c0_35, %c0_36, %c0_37] : memref<9x64x64xbf16, #tpu.memory_space<vmem>>, vector<1x64x64xbf16>
    %89 = vector.shape_cast %88 : vector<1x64x64xbf16> to vector<64x64xbf16>
    %90 = arith.truncf %87 : vector<64x256xf32> to vector<64x256xbf16>
    %cst_38 = arith.constant dense<0.000000e+00> : vector<64x256xf32>
    %91 = tpu.matmul %89, %90, %cst_38 {dimension_numbers = #tpu.dot_dimension_numbers<[1], [0], [0], [1], [0, 0, 1, 1], [], []>} : vector<64x64xbf16>, vector<64x256xbf16>, vector<64x256xf32> -> vector<64x256xf32>
    %c16_i32_39 = arith.constant 16 : i32
    %92 = tpu.dynamic_rotate %83 by %c16_i32_39 dim 1 : vector<64x256xf32>, i32 -> vector<64x256xf32>
    %93 = vector.extract_strided_slice %2 {offsets = [1, 0], sizes = [1, 256], strides = [1, 1]} : vector<9x256xf32> to vector<1x256xf32>
    %94 = vector.broadcast %93 : vector<1x256xf32> to vector<64x256xf32>
    %95 = arith.mulf %92, %94 : vector<64x256xf32>
    %c1_40 = arith.constant 1 : index
    %c0_41 = arith.constant 0 : index
    %c0_42 = arith.constant 0 : index
    %96 = vector.load %arg4[%c1_40, %c0_41, %c0_42] : memref<9x64x64xbf16, #tpu.memory_space<vmem>>, vector<1x64x64xbf16>
    %97 = vector.shape_cast %96 : vector<1x64x64xbf16> to vector<64x64xbf16>
    %98 = arith.truncf %95 : vector<64x256xf32> to vector<64x256xbf16>
    %cst_43 = arith.constant dense<0.000000e+00> : vector<64x256xf32>
    %99 = tpu.matmul %97, %98, %cst_43 {dimension_numbers = #tpu.dot_dimension_numbers<[1], [0], [0], [1], [0, 0, 1, 1], [], []>} : vector<64x64xbf16>, vector<64x256xbf16>, vector<64x256xf32> -> vector<64x256xf32>
    %100 = arith.addf %91, %99 : vector<64x256xf32>
    %c15_i32_44 = arith.constant 15 : i32
    %101 = tpu.dynamic_rotate %83 by %c15_i32_44 dim 1 : vector<64x256xf32>, i32 -> vector<64x256xf32>
    %102 = vector.extract_strided_slice %2 {offsets = [2, 0], sizes = [1, 256], strides = [1, 1]} : vector<9x256xf32> to vector<1x256xf32>
    %103 = vector.broadcast %102 : vector<1x256xf32> to vector<64x256xf32>
    %104 = arith.mulf %101, %103 : vector<64x256xf32>
    %c2_45 = arith.constant 2 : index
    %c0_46 = arith.constant 0 : index
    %c0_47 = arith.constant 0 : index
    %105 = vector.load %arg4[%c2_45, %c0_46, %c0_47] : memref<9x64x64xbf16, #tpu.memory_space<vmem>>, vector<1x64x64xbf16>
    %106 = vector.shape_cast %105 : vector<1x64x64xbf16> to vector<64x64xbf16>
    %107 = arith.truncf %104 : vector<64x256xf32> to vector<64x256xbf16>
    %cst_48 = arith.constant dense<0.000000e+00> : vector<64x256xf32>
    %108 = tpu.matmul %106, %107, %cst_48 {dimension_numbers = #tpu.dot_dimension_numbers<[1], [0], [0], [1], [0, 0, 1, 1], [], []>} : vector<64x64xbf16>, vector<64x256xbf16>, vector<64x256xf32> -> vector<64x256xf32>
    %109 = arith.addf %100, %108 : vector<64x256xf32>
    %c1_i32_49 = arith.constant 1 : i32
    %110 = tpu.dynamic_rotate %83 by %c1_i32_49 dim 1 : vector<64x256xf32>, i32 -> vector<64x256xf32>
    %111 = vector.extract_strided_slice %2 {offsets = [3, 0], sizes = [1, 256], strides = [1, 1]} : vector<9x256xf32> to vector<1x256xf32>
    %112 = vector.broadcast %111 : vector<1x256xf32> to vector<64x256xf32>
    %113 = arith.mulf %110, %112 : vector<64x256xf32>
    %c3_50 = arith.constant 3 : index
    %c0_51 = arith.constant 0 : index
    %c0_52 = arith.constant 0 : index
    %114 = vector.load %arg4[%c3_50, %c0_51, %c0_52] : memref<9x64x64xbf16, #tpu.memory_space<vmem>>, vector<1x64x64xbf16>
    %115 = vector.shape_cast %114 : vector<1x64x64xbf16> to vector<64x64xbf16>
    %116 = arith.truncf %113 : vector<64x256xf32> to vector<64x256xbf16>
    %cst_53 = arith.constant dense<0.000000e+00> : vector<64x256xf32>
    %117 = tpu.matmul %115, %116, %cst_53 {dimension_numbers = #tpu.dot_dimension_numbers<[1], [0], [0], [1], [0, 0, 1, 1], [], []>} : vector<64x64xbf16>, vector<64x256xbf16>, vector<64x256xf32> -> vector<64x256xf32>
    %118 = arith.addf %109, %117 : vector<64x256xf32>
    %c4_54 = arith.constant 4 : index
    %c0_55 = arith.constant 0 : index
    %c0_56 = arith.constant 0 : index
    %119 = vector.load %arg4[%c4_54, %c0_55, %c0_56] : memref<9x64x64xbf16, #tpu.memory_space<vmem>>, vector<1x64x64xbf16>
    %120 = vector.shape_cast %119 : vector<1x64x64xbf16> to vector<64x64xbf16>
    %121 = arith.truncf %83 : vector<64x256xf32> to vector<64x256xbf16>
    %cst_57 = arith.constant dense<0.000000e+00> : vector<64x256xf32>
    %122 = tpu.matmul %120, %121, %cst_57 {dimension_numbers = #tpu.dot_dimension_numbers<[1], [0], [0], [1], [0, 0, 1, 1], [], []>} : vector<64x64xbf16>, vector<64x256xbf16>, vector<64x256xf32> -> vector<64x256xf32>
    %123 = arith.addf %118, %122 : vector<64x256xf32>
    %c255_i32_58 = arith.constant 255 : i32
    %124 = tpu.dynamic_rotate %83 by %c255_i32_58 dim 1 : vector<64x256xf32>, i32 -> vector<64x256xf32>
    %125 = vector.extract_strided_slice %2 {offsets = [5, 0], sizes = [1, 256], strides = [1, 1]} : vector<9x256xf32> to vector<1x256xf32>
    %126 = vector.broadcast %125 : vector<1x256xf32> to vector<64x256xf32>
    %127 = arith.mulf %124, %126 : vector<64x256xf32>
    %c5_59 = arith.constant 5 : index
    %c0_60 = arith.constant 0 : index
    %c0_61 = arith.constant 0 : index
    %128 = vector.load %arg4[%c5_59, %c0_60, %c0_61] : memref<9x64x64xbf16, #tpu.memory_space<vmem>>, vector<1x64x64xbf16>
    %129 = vector.shape_cast %128 : vector<1x64x64xbf16> to vector<64x64xbf16>
    %130 = arith.truncf %127 : vector<64x256xf32> to vector<64x256xbf16>
    %cst_62 = arith.constant dense<0.000000e+00> : vector<64x256xf32>
    %131 = tpu.matmul %129, %130, %cst_62 {dimension_numbers = #tpu.dot_dimension_numbers<[1], [0], [0], [1], [0, 0, 1, 1], [], []>} : vector<64x64xbf16>, vector<64x256xbf16>, vector<64x256xf32> -> vector<64x256xf32>
    %132 = arith.addf %123, %131 : vector<64x256xf32>
    %c241_i32_63 = arith.constant 241 : i32
    %133 = tpu.dynamic_rotate %83 by %c241_i32_63 dim 1 : vector<64x256xf32>, i32 -> vector<64x256xf32>
    %134 = vector.extract_strided_slice %2 {offsets = [6, 0], sizes = [1, 256], strides = [1, 1]} : vector<9x256xf32> to vector<1x256xf32>
    %135 = vector.broadcast %134 : vector<1x256xf32> to vector<64x256xf32>
    %136 = arith.mulf %133, %135 : vector<64x256xf32>
    %c6_64 = arith.constant 6 : index
    %c0_65 = arith.constant 0 : index
    %c0_66 = arith.constant 0 : index
    %137 = vector.load %arg4[%c6_64, %c0_65, %c0_66] : memref<9x64x64xbf16, #tpu.memory_space<vmem>>, vector<1x64x64xbf16>
    %138 = vector.shape_cast %137 : vector<1x64x64xbf16> to vector<64x64xbf16>
    %139 = arith.truncf %136 : vector<64x256xf32> to vector<64x256xbf16>
    %cst_67 = arith.constant dense<0.000000e+00> : vector<64x256xf32>
    %140 = tpu.matmul %138, %139, %cst_67 {dimension_numbers = #tpu.dot_dimension_numbers<[1], [0], [0], [1], [0, 0, 1, 1], [], []>} : vector<64x64xbf16>, vector<64x256xbf16>, vector<64x256xf32> -> vector<64x256xf32>
    %141 = arith.addf %132, %140 : vector<64x256xf32>
    %c240_i32_68 = arith.constant 240 : i32
    %142 = tpu.dynamic_rotate %83 by %c240_i32_68 dim 1 : vector<64x256xf32>, i32 -> vector<64x256xf32>
    %143 = vector.extract_strided_slice %2 {offsets = [7, 0], sizes = [1, 256], strides = [1, 1]} : vector<9x256xf32> to vector<1x256xf32>
    %144 = vector.broadcast %143 : vector<1x256xf32> to vector<64x256xf32>
    %145 = arith.mulf %142, %144 : vector<64x256xf32>
    %c7_69 = arith.constant 7 : index
    %c0_70 = arith.constant 0 : index
    %c0_71 = arith.constant 0 : index
    %146 = vector.load %arg4[%c7_69, %c0_70, %c0_71] : memref<9x64x64xbf16, #tpu.memory_space<vmem>>, vector<1x64x64xbf16>
    %147 = vector.shape_cast %146 : vector<1x64x64xbf16> to vector<64x64xbf16>
    %148 = arith.truncf %145 : vector<64x256xf32> to vector<64x256xbf16>
    %cst_72 = arith.constant dense<0.000000e+00> : vector<64x256xf32>
    %149 = tpu.matmul %147, %148, %cst_72 {dimension_numbers = #tpu.dot_dimension_numbers<[1], [0], [0], [1], [0, 0, 1, 1], [], []>} : vector<64x64xbf16>, vector<64x256xbf16>, vector<64x256xf32> -> vector<64x256xf32>
    %150 = arith.addf %141, %149 : vector<64x256xf32>
    %c239_i32_73 = arith.constant 239 : i32
    %151 = tpu.dynamic_rotate %83 by %c239_i32_73 dim 1 : vector<64x256xf32>, i32 -> vector<64x256xf32>
    %152 = vector.extract_strided_slice %2 {offsets = [8, 0], sizes = [1, 256], strides = [1, 1]} : vector<9x256xf32> to vector<1x256xf32>
    %153 = vector.broadcast %152 : vector<1x256xf32> to vector<64x256xf32>
    %154 = arith.mulf %151, %153 : vector<64x256xf32>
    %c8_74 = arith.constant 8 : index
    %c0_75 = arith.constant 0 : index
    %c0_76 = arith.constant 0 : index
    %155 = vector.load %arg4[%c8_74, %c0_75, %c0_76] : memref<9x64x64xbf16, #tpu.memory_space<vmem>>, vector<1x64x64xbf16>
    %156 = vector.shape_cast %155 : vector<1x64x64xbf16> to vector<64x64xbf16>
    %157 = arith.truncf %154 : vector<64x256xf32> to vector<64x256xbf16>
    %cst_77 = arith.constant dense<0.000000e+00> : vector<64x256xf32>
    %158 = tpu.matmul %156, %157, %cst_77 {dimension_numbers = #tpu.dot_dimension_numbers<[1], [0], [0], [1], [0, 0, 1, 1], [], []>} : vector<64x64xbf16>, vector<64x256xbf16>, vector<64x256xf32> -> vector<64x256xf32>
    %159 = arith.addf %150, %158 : vector<64x256xf32>
    %c0_78 = arith.constant 0 : index
    %c0_79 = arith.constant 0 : index
    %160 = vector.load %arg5[%c0_78, %c0_79] : memref<64x1xf32, #tpu.memory_space<vmem>>, vector<64x1xf32>
    %161 = vector.broadcast %160 : vector<64x1xf32> to vector<64x256xf32>
    %162 = arith.addf %159, %161 : vector<64x256xf32>
    %cst_80 = arith.constant 1.000000e+00 : f32
    %163 = vector.broadcast %cst_80 : f32 to vector<64x256xf32>
    %164 = arith.mulf %162, %163 : vector<64x256xf32>
    %165 = arith.addf %1, %164 : vector<64x256xf32>
    %c0_81 = arith.constant 0 : index
    %c0_82 = arith.constant 0 : index
    %c0_83 = arith.constant 0 : index
    %166 = vector.load %arg7[%c0_81, %c0_82, %c0_83] : memref<1x64x256xf32, #tpu.memory_space<vmem>>, vector<1x64x256xf32>
    %167 = vector.shape_cast %166 : vector<1x64x256xf32> to vector<64x256xf32>
    %168 = vector.shape_cast %165 : vector<64x256xf32> to vector<1x64x256xf32>
    tpu.vector_store %arg7[%c0_81, %c0_82, %c0_83], %168 {strides = array<i32>} : memref<1x64x256xf32, #tpu.memory_space<vmem>>, vector<1x64x256xf32>,
    return
  }
  func.func @transform_0(%arg0: i32) -> (i32, i32, i32) {
    %c0_i32 = arith.constant 0 : i32
    %c0_i32_0 = arith.constant 0 : i32
    %c0_i32_1 = arith.constant 0 : i32
    return %arg0, %c0_i32, %c0_i32_0 : i32, i32, i32
  }
  func.func @transform_1(%arg0: i32) -> (i32, i32, i32) {
    %c0_i32 = arith.constant 0 : i32
    %c0_i32_0 = arith.constant 0 : i32
    %c0_i32_1 = arith.constant 0 : i32
    %c0_i32_2 = arith.constant 0 : i32
    return %c0_i32, %c0_i32_0, %c0_i32_1 : i32, i32, i32
  }
  func.func @transform_2(%arg0: i32) -> (i32, i32) {
    %c0_i32 = arith.constant 0 : i32
    %c0_i32_0 = arith.constant 0 : i32
    %c0_i32_1 = arith.constant 0 : i32
    return %c0_i32, %c0_i32_0 : i32, i32
  }
  func.func @transform_3(%arg0: i32) -> (i32, i32, i32) {
    %c0_i32 = arith.constant 0 : i32
    %c0_i32_0 = arith.constant 0 : i32
    %c0_i32_1 = arith.constant 0 : i32
    %c0_i32_2 = arith.constant 0 : i32
    return %c0_i32, %c0_i32_0, %c0_i32_1 : i32, i32, i32
  }
  func.func @transform_4(%arg0: i32) -> (i32, i32) {
    %c0_i32 = arith.constant 0 : i32
    %c0_i32_0 = arith.constant 0 : i32
    %c0_i32_1 = arith.constant 0 : i32
    return %c0_i32, %c0_i32_0 : i32, i32
  }
  func.func @transform_5(%arg0: i32) -> (i32, i32) {
    %c0_i32 = arith.constant 0 : i32
    %c0_i32_0 = arith.constant 0 : i32
    %c0_i32_1 = arith.constant 0 : i32
    return %c0_i32, %c0_i32_0 : i32, i32
  }
  func.func @transform_6(%arg0: i32) -> (i32, i32, i32) {
    %c0_i32 = arith.constant 0 : i32
    %c0_i32_0 = arith.constant 0 : i32
    %c0_i32_1 = arith.constant 0 : i32
    return %arg0, %c0_i32, %c0_i32_0 : i32, i32, i32
  }
}

</mosaic_0001>

<llo_original>
// kernel: tpu_custom_call.1
$region0: #{tpu_custom_call.1}
  #allocation0 [shape = 'u32[]', space=smem, size = 0x4, offset = 0x4, fixed_abs, tag = 'smem constant byte address 0x4 - core index']
  #allocation1 [shape = 'u32[144,128]{1,0:T(1,128)}', space=vmem, size = 0x12000, scoped, tag = 'internal scratch']
  %s0 = inlined_call_operand.hbm [shape: f32[2,64,256], index: 0, kind: input, shape index: {}]
  %s1 = inlined_call_operand.hbm [shape: bf16[9,64,64], index: 1, kind: input, shape index: {}]
  %s2 = inlined_call_operand.vmem [shape: f32[64,1], index: 2, kind: input, shape index: {}]
  %s3 = inlined_call_operand.hbm [shape: bf16[9,64,64], index: 3, kind: input, shape index: {}]
  %s4 = inlined_call_operand.vmem [shape: f32[64,1], index: 4, kind: input, shape index: {}]
  %s5 = inlined_call_operand.vmem [shape: f32[9,256], index: 5, kind: input, shape index: {}]
  %s6 = inlined_call_operand.hbm [shape: f32[2,64,256], index: 6, kind: output, shape index: {}]
  %s7 = sld [smem:[#allocation0]]
  $region69: #{tpu_custom_call.1} parent=0
    _
  %s9 = ssub.s32 1, %s7
  %s10 = scalar_select 0, %s9, %s7
  $region1: #{tpu_custom_call.1} parent=0
    #allocation2 [shape = 'u8[131072]{0}', space=vmem, size = 0x20000, scoped, tag = 'input window, operand 0']
    #allocation3 [shape = 's32[2]{0}', space=sflag, size = 0x8, scoped, tag = 'scoped memory for tpu_custom_call.1']
    #allocation4 [shape = 's32[2]{0}', space=sflag, size = 0x8, scoped, tag = 'scoped memory for tpu_custom_call.1']
    #allocation5 [shape = 'u8[147456]{0}', space=vmem, size = 0x24000, scoped, tag = 'input window, operand 1, single buffered']
    #allocation6 [shape = 's32[1]{0}', space=sflag, size = 0x4, scoped, tag = 'scoped memory for tpu_custom_call.1']
    #allocation7 [shape = 'u8[147456]{0}', space=vmem, size = 0x24000, scoped, tag = 'input window, operand 3, single buffered']
    #allocation8 [shape = 'u8[131072]{0}', space=vmem, size = 0x20000, scoped, tag = 'output window, operand 0']
    %11 = vsyncpa [#allocation3], 0
    %s12 = scalar_lea.sflag [#allocation3], 1
    %13 = vsyncpa %s12, 0
    %14 = vsyncpa [#allocation6], 0
    %15 = vsyncpa [#allocation4], 0
    %s16 = scalar_lea.sflag [#allocation4], 1
    %17 = vsyncpa %s16, 0
    loop: start=0, step=1, limit=4
    $region2: #{tpu_custom_call.1} parent=1 // loop_pre_header
      _
    $region3: #{tpu_custom_call.1} parent=1 // loop_header
      %s19 = sphi 0, %s23
      %p20 = scmp.ge.s32.totalorder %s19, 4
      %s29 = sphi 0, %s31
      %s32 = sphi 0, %s29
      %s33 = sphi 0, %s32
      %s49 = sphi 0, %s33
      %s53 = sphi 0, %s53
      %s55 = sphi 0, %s53
      %s56 = sphi 0, %s55
      %s70 = sphi 0, %s56
      %s74 = sphi 0, %s74
      %s76 = sphi 0, %s74
      %s77 = sphi 0, %s76
      %s91 = sphi 0, %s77
      %s95 = sphi 0, %s95
      %s97 = sphi 0, %s95
      %s98 = sphi 0, %s97
      %s112 = sphi 0, %s98
      %s116 = sphi 0, %s116
      %s118 = sphi 0, %s116
      %s119 = sphi 0, %s118
      %s133 = sphi 0, %s119
      %s137 = sphi 0, %s137
      %s139 = sphi 0, %s137
      %s140 = sphi 0, %s139
      %s154 = sphi 0, %s140
      %s160 = sphi 0, %s162
      %s163 = sphi 0, %s160
      %s164 = sphi 0, %s163
      %s180 = sphi 0, %s164
    $region4: #{tpu_custom_call.1} parent=1 // loop_header_branch
      %22 = sbr.rel (%p20) target = $region8
    $region5: #{tpu_custom_call.1} parent=1 // loop_body
      %s24 = ssub.s32 %s19, 1
      %s25 = ssub.s32 %s19, 2
      %s26 = sadd.s32 %s19, 1
      %s27 = ssub.s32 %s19, %s26
      %p28 = scmp.eq.s32.totalorder %s27, 0
      %s30 = sadd.s32 %s29, 1
      %s31 = scalar_select %p28, %s29, %s30
      %p34 = pneg %p28
      %p35 = scmp.eq.s32.totalorder %s19, 1
      %p36 = por %p34, %p35
      %p37 = scmp.ne.s32.totalorder %s29, %s32
      %p38 = scmp.eq.s32.totalorder %s19, 0
      %p39 = por %p37, %p38
      %p40 = scmp.ne.s32.totalorder %s29, %s32
      %p41 = scmp.eq.s32.totalorder %s24, 1
      %p42 = por %p40, %p41
      %p43 = scmp.ne.s32.totalorder %s32, %s33
      %p44 = scmp.eq.s32.totalorder %s24, 0
      %p45 = por %p43, %p44
      %p46 = scmp.ne.s32.totalorder %s32, %s33
      %p47 = scmp.eq.s32.totalorder %s25, 1
      %p48 = por %p46, %p47
      %p50 = scmp.ne.s32.totalorder %s33, %s49
      %p51 = scmp.eq.s32.totalorder %s25, 0
      %p52 = por %p50, %p51
      %s54 = sadd.s32 %s53, 1
      %p57 = scmp.eq.s32.totalorder %s19, 1
      %p58 = scmp.ne.s32.totalorder %s53, %s55
      %p59 = scmp.eq.s32.totalorder %s19, 0
      %p60 = por %p58, %p59
      %p61 = scmp.ne.s32.totalorder %s53, %s55
      %p62 = scmp.eq.s32.totalorder %s24, 1
      %p63 = por %p61, %p62
      %p64 = scmp.ne.s32.totalorder %s55, %s56
      %p65 = scmp.eq.s32.totalorder %s24, 0
      %p66 = por %p64, %p65
      %p67 = scmp.ne.s32.totalorder %s55, %s56
      %p68 = scmp.eq.s32.totalorder %s25, 1
      %p69 = por %p67, %p68
      %p71 = scmp.ne.s32.totalorder %s56, %s70
      %p72 = scmp.eq.s32.totalorder %s25, 0
      %p73 = por %p71, %p72
      %s75 = sadd.s32 %s74, 1
      %p78 = scmp.eq.s32.totalorder %s19, 1
      %p79 = scmp.ne.s32.totalorder %s74, %s76
      %p80 = scmp.eq.s32.totalorder %s19, 0
      %p81 = por %p79, %p80
      %p82 = scmp.ne.s32.totalorder %s74, %s76
      %p83 = scmp.eq.s32.totalorder %s24, 1
      %p84 = por %p82, %p83
      %p85 = scmp.ne.s32.totalorder %s76, %s77
      %p86 = scmp.eq.s32.totalorder %s24, 0
      %p87 = por %p85, %p86
      %p88 = scmp.ne.s32.totalorder %s76, %s77
      %p89 = scmp.eq.s32.totalorder %s25, 1
      %p90 = por %p88, %p89
      %p92 = scmp.ne.s32.totalorder %s77, %s91
      %p93 = scmp.eq.s32.totalorder %s25, 0
      %p94 = por %p92, %p93
      %s96 = sadd.s32 %s95, 1
      %p99 = scmp.eq.s32.totalorder %s19, 1
      %p100 = scmp.ne.s32.totalorder %s95, %s97
      %p101 = scmp.eq.s32.totalorder %s19, 0
      %p102 = por %p100, %p101
      %p103 = scmp.ne.s32.totalorder %s95, %s97
      %p104 = scmp.eq.s32.totalorder %s24, 1
      %p105 = por %p103, %p104
      %p106 = scmp.ne.s32.totalorder %s97, %s98
      %p107 = scmp.eq.s32.totalorder %s24, 0
      %p108 = por %p106, %p107
      %p109 = scmp.ne.s32.totalorder %s97, %s98
      %p110 = scmp.eq.s32.totalorder %s25, 1
      %p111 = por %p109, %p110
      %p113 = scmp.ne.s32.totalorder %s98, %s112
      %p114 = scmp.eq.s32.totalorder %s25, 0
      %p115 = por %p113, %p114
      %s117 = sadd.s32 %s116, 1
      %p120 = scmp.eq.s32.totalorder %s19, 1
      %p121 = scmp.ne.s32.totalorder %s116, %s118
      %p122 = scmp.eq.s32.totalorder %s19, 0
      %p123 = por %p121, %p122
      %p124 = scmp.ne.s32.totalorder %s116, %s118
      %p125 = scmp.eq.s32.totalorder %s24, 1
      %p126 = por %p124, %p125
      %p127 = scmp.ne.s32.totalorder %s118, %s119
      %p128 = scmp.eq.s32.totalorder %s24, 0
      %p129 = por %p127, %p128
      %p130 = scmp.ne.s32.totalorder %s118, %s119
      %p131 = scmp.eq.s32.totalorder %s25, 1
      %p132 = por %p130, %p131
      %p134 = scmp.ne.s32.totalorder %s119, %s133
      %p135 = scmp.eq.s32.totalorder %s25, 0
      %p136 = por %p134, %p135
      %s138 = sadd.s32 %s137, 1
      %p141 = scmp.eq.s32.totalorder %s19, 1
      %p142 = scmp.ne.s32.totalorder %s137, %s139
      %p143 = scmp.eq.s32.totalorder %s19, 0
      %p144 = por %p142, %p143
      %p145 = scmp.ne.s32.totalorder %s137, %s139
      %p146 = scmp.eq.s32.totalorder %s24, 1
      %p147 = por %p145, %p146
      %p148 = scmp.ne.s32.totalorder %s139, %s140
      %p149 = scmp.eq.s32.totalorder %s24, 0
      %p150 = por %p148, %p149
      %p151 = scmp.ne.s32.totalorder %s139, %s140
      %p152 = scmp.eq.s32.totalorder %s25, 1
      %p153 = por %p151, %p152
      %p155 = scmp.ne.s32.totalorder %s140, %s154
      %p156 = scmp.eq.s32.totalorder %s25, 0
      %p157 = por %p155, %p156
      %s158 = ssub.s32 %s19, %s26
      %p159 = scmp.eq.s32.totalorder %s158, 0
      %s161 = sadd.s32 %s160, 1
      %s162 = scalar_select %p159, %s160, %s161
      %p165 = pneg %p159
      %p166 = scmp.eq.s32.totalorder %s19, 1
      %p167 = por %p165, %p166
      %p168 = scmp.ne.s32.totalorder %s160, %s163
      %p169 = scmp.eq.s32.totalorder %s19, 0
      %p170 = por %p168, %p169
      %p171 = scmp.ne.s32.totalorder %s160, %s163
      %p172 = scmp.eq.s32.totalorder %s24, 1
      %p173 = por %p171, %p172
      %p174 = scmp.ne.s32.totalorder %s163, %s164
      %p175 = scmp.eq.s32.totalorder %s24, 0
      %p176 = por %p174, %p175
      %p177 = scmp.ne.s32.totalorder %s163, %s164
      %p178 = scmp.eq.s32.totalorder %s25, 1
      %p179 = por %p177, %p178
      %p181 = scmp.ne.s32.totalorder %s164, %s180
      %p182 = scmp.eq.s32.totalorder %s25, 0
      %p183 = por %p181, %p182
      %p184 = scmp.le.s32.totalorder 1, %s19
      %p185 = scmp.lt.s32.totalorder %s19, 3
      %p186 = pnand %p184, %p185
      %p187 = pneg %p186
      // Predicated region
      $region9: #{tpu_custom_call.1} parent=5 // pred_check
        _
      $region10: #{tpu_custom_call.1} parent=5 // pred_check_branch
        %189 = sbr.rel (%p186) target = $region12
      $region11: #{tpu_custom_call.1} parent=5 // pred_region
        %s190 = ssub.s32 %s19, 1
        // Predicated region
        $region13: #{tpu_custom_call.1} parent=11 // pred_check
          %p191 = pneg %p66
        $region14: #{tpu_custom_call.1} parent=11 // pred_check_branch
          %193 = sbr.rel (%p191) target = $region16
        $region15: #{tpu_custom_call.1} parent=11 // pred_region
          %s195 = ssub.s32 4608, 4608
          %196 = vsyncadd [#allocation6], %s195
          %s197 = sshll.u32 [#allocation5], 4
          %s198 = int_to_ptr.vmem [resolvable:$true] %s197
          %203 = dma.hbm_to_vmem [thread:$0]  %s1, 4608, %s198, [#allocation6], 64, 64, 4
        $region16: #{tpu_custom_call.1} parent=11 // pred_fallthru
          _
        // Predicated region
        $region17: #{tpu_custom_call.1} parent=11 // pred_check
          %p204 = pneg %p87
        $region18: #{tpu_custom_call.1} parent=11 // pred_check_branch
          %206 = sbr.rel (%p204) target = $region20
        $region19: #{tpu_custom_call.1} parent=11 // pred_region
          _
        $region20: #{tpu_custom_call.1} parent=11 // pred_fallthru
          _
        // Predicated region
        $region21: #{tpu_custom_call.1} parent=11 // pred_check
          %p207 = pneg %p108
        $region22: #{tpu_custom_call.1} parent=11 // pred_check_branch
          %209 = sbr.rel (%p207) target = $region24
        $region23: #{tpu_custom_call.1} parent=11 // pred_region
          %s211 = ssub.s32 4608, 4608
          %212 = vsyncadd [#allocation6], %s211
          %s213 = sshll.u32 [#allocation7], 4
          %s214 = int_to_ptr.vmem [resolvable:$true] %s213
          %219 = dma.hbm_to_vmem [thread:$0]  %s3, 4608, %s214, [#allocation6], 64, 64, 4
        $region24: #{tpu_custom_call.1} parent=11 // pred_fallthru
          _
        // Predicated region
        $region25: #{tpu_custom_call.1} parent=11 // pred_check
          %p220 = pneg %p129
        $region26: #{tpu_custom_call.1} parent=11 // pred_check_branch
          %222 = sbr.rel (%p220) target = $region28
        $region27: #{tpu_custom_call.1} parent=11 // pred_region
          _
        $region28: #{tpu_custom_call.1} parent=11 // pred_fallthru
          _
        // Predicated region
        $region29: #{tpu_custom_call.1} parent=11 // pred_check
          %p223 = pneg %p150
        $region30: #{tpu_custom_call.1} parent=11 // pred_check_branch
          %225 = sbr.rel (%p223) target = $region32
        $region31: #{tpu_custom_call.1} parent=11 // pred_region
          _
        $region32: #{tpu_custom_call.1} parent=11 // pred_fallthru
          _
      $region12: #{tpu_custom_call.1} parent=5 // pred_fallthru
        _
      %p226 = scmp.lt.s32.totalorder %s19, 2
      // Predicated region
      $region33: #{tpu_custom_call.1} parent=5 // pred_check
        %p227 = pneg %p226
      $region34: #{tpu_custom_call.1} parent=5 // pred_check_branch
        %229 = sbr.rel (%p227) target = $region36
      $region35: #{tpu_custom_call.1} parent=5 // pred_region
        // Predicated region
        $region37: #{tpu_custom_call.1} parent=35 // pred_check
          %p230 = pneg %p39
        $region38: #{tpu_custom_call.1} parent=35 // pred_check_branch
          %232 = sbr.rel (%p230) target = $region40
        $region39: #{tpu_custom_call.1} parent=35 // pred_region
          %s233 = sand.u32 %s29, 1
          %s234 = scalar_lea.sflag [#allocation3], %s233
          %s235 = sand.u32 %s29, 1
          %s236 = smul.addr %s235, 128
          %s237 = scalar_lea.vmem [#allocation2], %s236
          %s239 = ssub.s32 2048, 2048
          %240 = vsyncadd %s234, %s239
          %s241 = smul.addr %s19, 16
          %s242 = smul.addr %s241, 128
          %s243 = scalar_lea.hbm %s0, %s242
          %s244 = sshll.u32 %s237, 4
          %s245 = int_to_ptr.vmem [resolvable:$true] %s244
          %250 = dma.hbm_to_vmem [thread:$0]  %s243, 2048, %s245, %s234, 256, 256, 16
        $region40: #{tpu_custom_call.1} parent=35 // pred_fallthru
          _
      $region36: #{tpu_custom_call.1} parent=5 // pred_fallthru
        _
      %p251 = scmp.le.s32.totalorder 1, %s19
      %p252 = scmp.lt.s32.totalorder %s19, 3
      %p253 = pnand %p251, %p252
      %p254 = pneg %p253
      // Predicated region
      $region41: #{tpu_custom_call.1} parent=5 // pred_check
        _
      $region42: #{tpu_custom_call.1} parent=5 // pred_check_branch
        %256 = sbr.rel (%p253) target = $region44
      $region43: #{tpu_custom_call.1} parent=5 // pred_region
        %s257 = ssub.s32 %s19, 1
        %s258 = sand.u32 %s32, 1
        %s259 = scalar_lea.sflag [#allocation3], %s258
        %s260 = sand.u32 %s32, 1
        %s261 = smul.addr %s260, 128
        %s262 = scalar_lea.vmem [#allocation2], %s261
        // Predicated region
        $region45: #{tpu_custom_call.1} parent=43 // pred_check
          %p263 = pneg %p45
        $region46: #{tpu_custom_call.1} parent=43 // pred_check_branch
          %265 = sbr.rel (%p263) target = $region48
        $region47: #{tpu_custom_call.1} parent=43 // pred_region
          %266 = dma.done %s259, 2048
        $region48: #{tpu_custom_call.1} parent=43 // pred_fallthru
          _
        // Predicated region
        $region49: #{tpu_custom_call.1} parent=43 // pred_check
          %p267 = pneg %p66
        $region50: #{tpu_custom_call.1} parent=43 // pred_check_branch
          %269 = sbr.rel (%p267) target = $region52
        $region51: #{tpu_custom_call.1} parent=43 // pred_region
          %270 = dma.done [#allocation6], 4608
        $region52: #{tpu_custom_call.1} parent=43 // pred_fallthru
          _
        // Predicated region
        $region53: #{tpu_custom_call.1} parent=43 // pred_check
          %p271 = pneg %p108
        $region54: #{tpu_custom_call.1} parent=43 // pred_check_branch
          %273 = sbr.rel (%p271) target = $region56
        $region55: #{tpu_custom_call.1} parent=43 // pred_region
          %274 = dma.done [#allocation6], 4608
        $region56: #{tpu_custom_call.1} parent=43 // pred_fallthru
          _
        %s275 = sand.u32 %s32, 1
        %s276 = scalar_lea.sflag [#allocation3], %s275
        %s277 = sand.u32 %s32, 1
        %s278 = smul.addr %s277, 128
        %s279 = scalar_lea.vmem [#allocation2], %s278
        %p280 = pneg %p45
        %p281 = pneg %p42
        %p282 = pneg %p66
        %p283 = pneg %p63
        %p284 = pneg %p87
        %p285 = pneg %p84
        %p286 = pneg %p108
        %p287 = pneg %p105
        %p288 = pneg %p129
        %p289 = pneg %p126
        %p290 = pneg %p150
        %p291 = pneg %p147
        %p292 = pneg %p176
        %p293 = pneg %p173
        %s294 = sand.u32 %s163, 1
        %s295 = scalar_lea.sflag [#allocation4], %s294
        %s296 = sand.u32 %s163, 1
        %s297 = smul.addr %s296, 128
        %s298 = scalar_lea.vmem [#allocation8], %s297
        %v300 = vld [vmem:[%s262] sm:$0xff]
        %v301 = vld [vmem:[%s262 + $0x8] sm:$0xff]
        %v302 = vld [vmem:[%s262 + $0x10] sm:$0xff]
        %v303 = vld [vmem:[%s262 + $0x18] sm:$0xff]
        %v304 = vld [vmem:[%s262 + $0x20] sm:$0xff]
        %v305 = vld [vmem:[%s262 + $0x28] sm:$0xff]
        %v306 = vld [vmem:[%s262 + $0x30] sm:$0xff]
        %v307 = vld [vmem:[%s262 + $0x38] sm:$0xff]
        %v308 = vld [vmem:[%s262 + $0x40] sm:$0xff]
        %v309 = vld [vmem:[%s262 + $0x48] sm:$0xff]
        %v310 = vld [vmem:[%s262 + $0x50] sm:$0xff]
        %v311 = vld [vmem:[%s262 + $0x58] sm:$0xff]
        %v312 = vld [vmem:[%s262 + $0x60] sm:$0xff]
        %v313 = vld [vmem:[%s262 + $0x68] sm:$0xff]
        %v314 = vld [vmem:[%s262 + $0x70] sm:$0xff]
        %v315 = vld [vmem:[%s262 + $0x78] sm:$0xff]
        %v316 = vld [vmem:[%s5] sm:$0xff]
        %v317 = vld [vmem:[%s5 + $0x8] sm:$0xff]
        %v318 = vld [vmem:[%s5 + $0x10] sm:$0x1]
        %v319 = vld [vmem:[%s5 + $0x18] sm:$0x1]
        %320 = vrot.lane.b32.xlu0 %v300, 17
        %v321 = vpop.permute.xlu0 %320
        %322 = vrot.lane.b32.xlu0 %v302, 17
        %v323 = vpop.permute.xlu0 %322
        %324 = vrot.lane.b32.xlu0 %v304, 17
        %v325 = vpop.permute.xlu0 %324
        %326 = vrot.lane.b32.xlu0 %v306, 17
        %v327 = vpop.permute.xlu0 %326
        %328 = vrot.lane.b32.xlu0 %v308, 17
        %v329 = vpop.permute.xlu0 %328
        %330 = vrot.lane.b32.xlu0 %v310, 17
        %v331 = vpop.permute.xlu0 %330
        %332 = vrot.lane.b32.xlu0 %v312, 17
        %v333 = vpop.permute.xlu0 %332
        %334 = vrot.lane.b32.xlu0 %v314, 17
        %v335 = vpop.permute.xlu0 %334
        %336 = vrot.lane.b32.xlu0 %v301, 17
        %v337 = vpop.permute.xlu0 %336
        %338 = vrot.lane.b32.xlu0 %v303, 17
        %v339 = vpop.permute.xlu0 %338
        %340 = vrot.lane.b32.xlu0 %v305, 17
        %v341 = vpop.permute.xlu0 %340
        %342 = vrot.lane.b32.xlu0 %v307, 17
        %v343 = vpop.permute.xlu0 %342
        %344 = vrot.lane.b32.xlu0 %v309, 17
        %v345 = vpop.permute.xlu0 %344
        %346 = vrot.lane.b32.xlu0 %v311, 17
        %v347 = vpop.permute.xlu0 %346
        %348 = vrot.lane.b32.xlu0 %v313, 17
        %v349 = vpop.permute.xlu0 %348
        %350 = vrot.lane.b32.xlu0 %v315, 17
        %v351 = vpop.permute.xlu0 %350
        %v352 = vlaneseq
        %v353 = vand.u32 %v352, 127
        %vm354 = vcmp.lt.s32.totalorder %v353, 17
        %v355 = vsel %vm354, %v321, %v337
        %v356 = vsel %vm354, %v323, %v339
        %v357 = vsel %vm354, %v325, %v341
        %v358 = vsel %vm354, %v327, %v343
        %v359 = vsel %vm354, %v329, %v345
        %v360 = vsel %vm354, %v331, %v347
        %v361 = vsel %vm354, %v333, %v349
        %v362 = vsel %vm354, %v335, %v351
        %v363 = vsel %vm354, %v337, %v321
        %v364 = vsel %vm354, %v339, %v323
        %v365 = vsel %vm354, %v341, %v325
        %v366 = vsel %vm354, %v343, %v327
        %v367 = vsel %vm354, %v345, %v329
        %v368 = vsel %vm354, %v347, %v331
        %v369 = vsel %vm354, %v349, %v333
        %v370 = vsel %vm354, %v351, %v335
        %v371 = vlaneseq
        %v372 = vshrl.u32 %v371, 7
        %v373 = vsub.s32 0, %v372
        %v374 = vrot.slane %v316, %v373
        %v375 = vlaneseq
        %v376 = vshrl.u32 %v375, 7
        %v377 = vsub.s32 0, %v376
        %v378 = vrot.slane %v317, %v377
        %v379 = vmul.f32 %v363, %v374
        %v380 = vmul.f32 %v355, %v378
        %v381 = vmul.f32 %v364, %v374
        %v382 = vmul.f32 %v356, %v378
        %v383 = vmul.f32 %v365, %v374
        %v384 = vmul.f32 %v357, %v378
        %v385 = vmul.f32 %v366, %v374
        %v386 = vmul.f32 %v358, %v378
        %v387 = vmul.f32 %v367, %v374
        %v388 = vmul.f32 %v359, %v378
        %v389 = vmul.f32 %v368, %v374
        %v390 = vmul.f32 %v360, %v378
        %v391 = vmul.f32 %v369, %v374
        %v392 = vmul.f32 %v361, %v378
        %v393 = vmul.f32 %v370, %v374
        %v394 = vmul.f32 %v362, %v378
        %v395 = vld [vmem:[#allocation5] sm:$0xf]
        %v396 = vld [vmem:[#allocation5 + $0x4] sm:$0xf]
        %v397 = vld [vmem:[#allocation5 + $0x8] sm:$0xf]
        %v398 = vld [vmem:[#allocation5 + $0xc] sm:$0xf]
        %v399 = vld [vmem:[#allocation5 + $0x10] sm:$0xf]
        %v400 = vld [vmem:[#allocation5 + $0x14] sm:$0xf]
        %v401 = vld [vmem:[#allocation5 + $0x18] sm:$0xf]
        %v402 = vld [vmem:[#allocation5 + $0x1c] sm:$0xf]
        %v403 = vpack.c.bf16 %v381, %v379
        %v404 = vpack.c.bf16 %v382, %v380
        %v405 = vpack.c.bf16 %v385, %v383
        %v406 = vpack.c.bf16 %v386, %v384
        %v407 = vpack.c.bf16 %v389, %v387
        %v408 = vpack.c.bf16 %v390, %v388
        %v409 = vpack.c.bf16 %v393, %v391
        %v410 = vpack.c.bf16 %v394, %v392
        %411 = vrot.lane.b32.xlu0 %v300, 16
        %v412 = vpop.permute.xlu0 %411
        %413 = vrot.lane.b32.xlu0 %v302, 16
        %v414 = vpop.permute.xlu0 %413
        %415 = vrot.lane.b32.xlu0 %v304, 16
        %v416 = vpop.permute.xlu0 %415
        %417 = vrot.lane.b32.xlu0 %v306, 16
        %v418 = vpop.permute.xlu0 %417
        %419 = vrot.lane.b32.xlu0 %v308, 16
        %v420 = vpop.permute.xlu0 %419
        %421 = vrot.lane.b32.xlu0 %v310, 16
        %v422 = vpop.permute.xlu0 %421
        %423 = vrot.lane.b32.xlu0 %v312, 16
        %v424 = vpop.permute.xlu0 %423
        %425 = vrot.lane.b32.xlu0 %v314, 16
        %v426 = vpop.permute.xlu0 %425
        %427 = vrot.lane.b32.xlu0 %v301, 16
        %v428 = vpop.permute.xlu0 %427
        %429 = vrot.lane.b32.xlu0 %v303, 16
        %v430 = vpop.permute.xlu0 %429
        %431 = vrot.lane.b32.xlu0 %v305, 16
        %v432 = vpop.permute.xlu0 %431
        %433 = vrot.lane.b32.xlu0 %v307, 16
        %v434 = vpop.permute.xlu0 %433
        %435 = vrot.lane.b32.xlu0 %v309, 16
        %v436 = vpop.permute.xlu0 %435
        %437 = vrot.lane.b32.xlu0 %v311, 16
        %v438 = vpop.permute.xlu0 %437
        %439 = vrot.lane.b32.xlu0 %v313, 16
        %v440 = vpop.permute.xlu0 %439
        %441 = vrot.lane.b32.xlu0 %v315, 16
        %v442 = vpop.permute.xlu0 %441
        %vm443 = vcmp.lt.s32.totalorder %v353, 16
        %v444 = vsel %vm443, %v412, %v428
        %v445 = vsel %vm443, %v414, %v430
        %v446 = vsel %vm443, %v416, %v432
        %v447 = vsel %vm443, %v418, %v434
        %v448 = vsel %vm443, %v420, %v436
        %v449 = vsel %vm443, %v422, %v438
        %v450 = vsel %vm443, %v424, %v440
        %v451 = vsel %vm443, %v426, %v442
        %v452 = vsel %vm443, %v428, %v412
        %v453 = vsel %vm443, %v430, %v414
        %v454 = vsel %vm443, %v432, %v416
        %v455 = vsel %vm443, %v434, %v418
        %v456 = vsel %vm443, %v436, %v420
        %v457 = vsel %vm443, %v438, %v422
        %v458 = vsel %vm443, %v440, %v424
        %v459 = vsel %vm443, %v442, %v426
        %v460 = vlaneseq
        %v461 = vshrl.u32 %v460, 7
        %v462 = vsub.s32 1, %v461
        %v463 = vrot.slane %v316, %v462
        %v464 = vlaneseq
        %v465 = vshrl.u32 %v464, 7
        %v466 = vsub.s32 1, %v465
        %v467 = vrot.slane %v317, %v466
        %v468 = vmul.f32 %v452, %v463
        %v469 = vmul.f32 %v444, %v467
        %v470 = vmul.f32 %v453, %v463
        %v471 = vmul.f32 %v445, %v467
        %v472 = vmul.f32 %v454, %v463
        %v473 = vmul.f32 %v446, %v467
        %v474 = vmul.f32 %v455, %v463
        %v475 = vmul.f32 %v447, %v467
        %v476 = vmul.f32 %v456, %v463
        %v477 = vmul.f32 %v448, %v467
        %v478 = vmul.f32 %v457, %v463
        %v479 = vmul.f32 %v449, %v467
        %v480 = vmul.f32 %v458, %v463
        %v481 = vmul.f32 %v450, %v467
        %v482 = vmul.f32 %v459, %v463
        %v483 = vmul.f32 %v451, %v467
        %s484 = scalar_lea.vmem [#allocation5], 32
        %v485 = vld [vmem:[%s484] sm:$0xf]
        %v486 = vld [vmem:[%s484 + $0x4] sm:$0xf]
        %v487 = vld [vmem:[%s484 + $0x8] sm:$0xf]
        %v488 = vld [vmem:[%s484 + $0xc] sm:$0xf]
        %v489 = vld [vmem:[%s484 + $0x10] sm:$0xf]
        %v490 = vld [vmem:[%s484 + $0x14] sm:$0xf]
        %v491 = vld [vmem:[%s484 + $0x18] sm:$0xf]
        %v492 = vld [vmem:[%s484 + $0x1c] sm:$0xf]
        %v493 = vpack.c.bf16 %v470, %v468
        %v494 = vpack.c.bf16 %v471, %v469
        %v495 = vpack.c.bf16 %v474, %v472
        %v496 = vpack.c.bf16 %v475, %v473
        %v497 = vpack.c.bf16 %v478, %v476
        %v498 = vpack.c.bf16 %v479, %v477
        %v499 = vpack.c.bf16 %v482, %v480
        %v500 = vpack.c.bf16 %v483, %v481
        %v509 = vunpack.c.l.b16 %v485
        %v510 = vunpack.c.l.b16 %v486
        %v511 = vunpack.c.l.b16 %v487
        %v512 = vunpack.c.l.b16 %v488
        %v513 = vunpack.c.l.b16 %v489
        %v514 = vunpack.c.l.b16 %v490
        %v515 = vunpack.c.l.b16 %v491
        %v516 = vunpack.c.l.b16 %v492
        %v517 = vpack.c.b16 %v510, %v509
        %v518 = vpack.c.b16 %v512, %v511
        %v519 = vpack.c.b16 %v514, %v513
        %v520 = vpack.c.b16 %v516, %v515
        %vm521 = vcmask 523264
        %v523 = vsel %vm521, %v517, 0
        %v526 = vsel %vm521, %v518, 0
        %v529 = vsel %vm521, %v519, 0
        %v532 = vsel %vm521, %v520, 0
        %534 = vmatprep.subr.bf16.mxu0 0
        %535 = vmatpush1.bf16.msra.mxu0 0
        %536 = vmatprep.subr.bf16.mxu0 0
        %537 = vmatpush1.bf16.msra.mxu0 0
        %538 = vmatprep.subr.bf16.mxu0 0
        %539 = vmatpush1.bf16.msra.mxu0 0
        %540 = vmatprep.subr.bf16.mxu0 0
        %541 = vmatpush1.bf16.msra.mxu0 0
        %542 = vmatprep.subr.bf16.mxu0 %v500
        %543 = vmatpush1.bf16.msra.mxu0 %v499
        %544 = vmatprep.subr.bf16.mxu0 %v498
        %545 = vmatpush1.bf16.msra.mxu0 %v497
        %546 = vmatprep.subr.bf16.mxu0 %v496
        %547 = vmatpush1.bf16.msra.mxu0 %v495
        %548 = vmatprep.subr.bf16.mxu0 %v494
        %549 = vmatpush1.bf16.msra.mxu0 %v493
        %550 = vmatprep.subr.bf16.mxu0 0
        %551 = vmatpush2.bf16.msra.mxu0 0
        %552 = vmatprep.subr.bf16.mxu0 0
        %553 = vmatpush2.bf16.msra.mxu0 0
        %554 = vmatprep.subr.bf16.mxu0 0
        %555 = vmatpush2.bf16.msra.mxu0 0
        %556 = vmatprep.subr.bf16.mxu0 0
        %557 = vmatpush2.bf16.msra.mxu0 0
        %558 = vmatprep.subr.bf16.mxu0 0
        %559 = vmatpush2.bf16.msra.mxu0 0
        %560 = vmatprep.subr.bf16.mxu0 0
        %561 = vmatpush2.bf16.msra.mxu0 0
        %562 = vmatprep.subr.bf16.mxu0 0
        %563 = vmatpush2.bf16.msra.mxu0 0
        %564 = vmatprep.subr.bf16.mxu0 0
        %565 = vmatpush2.bf16.msra.mxu0 0
        %566 = vmatprep.mubr.bf16.mxu0 0
        %567 = vmatmul.mubr.bf16.gmra.mxu0 %v523
        %v568 = vpop.f32.mrf.mxu0
        %v569 = vadd.f32 0.0, %v568
        %v570 = vpop.f32.mrf.mxu0
        %v571 = vadd.f32 0.0, %v570
        %v572 = vpop.f32.mrf.mxu0
        %v573 = vadd.f32 0.0, %v572
        %v574 = vpop.f32.mrf.mxu0
        %v575 = vadd.f32 0.0, %v574
        %576 = vmatprep.mubr.bf16.mxu0 0
        %577 = vmatmul.mubr.bf16.gmra.mxu0 %v526
        %v578 = vpop.f32.mrf.mxu0
        %v579 = vadd.f32 0.0, %v578
        %v580 = vpop.f32.mrf.mxu0
        %v581 = vadd.f32 0.0, %v580
        %v582 = vpop.f32.mrf.mxu0
        %v583 = vadd.f32 0.0, %v582
        %v584 = vpop.f32.mrf.mxu0
        %v585 = vadd.f32 0.0, %v584
        %586 = vmatprep.mubr.bf16.mxu0 0
        %587 = vmatmul.mubr.bf16.gmra.mxu0 %v529
        %v588 = vpop.f32.mrf.mxu0
        %v589 = vadd.f32 0.0, %v588
        %v590 = vpop.f32.mrf.mxu0
        %v591 = vadd.f32 0.0, %v590
        %v592 = vpop.f32.mrf.mxu0
        %v593 = vadd.f32 0.0, %v592
        %v594 = vpop.f32.mrf.mxu0
        %v595 = vadd.f32 0.0, %v594
        %596 = vmatprep.mubr.bf16.mxu0 0
        %597 = vmatmul.mubr.bf16.gmra.mxu0 %v532
        %v598 = vpop.f32.mrf.mxu0
        %v599 = vadd.f32 0.0, %v598
        %v600 = vpop.f32.mrf.mxu0
        %v601 = vadd.f32 0.0, %v600
        %v602 = vpop.f32.mrf.mxu0
        %v603 = vadd.f32 0.0, %v602
        %v604 = vpop.f32.mrf.mxu0
        %v605 = vadd.f32 0.0, %v604
        %606 = vdwg.mxu0
        %v615 = vunpack.c.l.b16 %v395
        %v616 = vunpack.c.l.b16 %v396
        %v617 = vunpack.c.l.b16 %v397
        %v618 = vunpack.c.l.b16 %v398
        %v619 = vunpack.c.l.b16 %v399
        %v620 = vunpack.c.l.b16 %v400
        %v621 = vunpack.c.l.b16 %v401
        %v622 = vunpack.c.l.b16 %v402
        %v623 = vpack.c.b16 %v616, %v615
        %v624 = vpack.c.b16 %v618, %v617
        %v625 = vpack.c.b16 %v620, %v619
        %v626 = vpack.c.b16 %v622, %v621
        %v628 = vsel %vm521, %v623, 0
        %v631 = vsel %vm521, %v624, 0
        %v634 = vsel %vm521, %v625, 0
        %v637 = vsel %vm521, %v626, 0
        %639 = vmatprep.subr.bf16.mxu0 0
        %640 = vmatpush1.bf16.msra.mxu0 0
        %641 = vmatprep.subr.bf16.mxu0 0
        %642 = vmatpush1.bf16.msra.mxu0 0
        %643 = vmatprep.subr.bf16.mxu0 0
        %644 = vmatpush1.bf16.msra.mxu0 0
        %645 = vmatprep.subr.bf16.mxu0 0
        %646 = vmatpush1.bf16.msra.mxu0 0
        %647 = vmatprep.subr.bf16.mxu0 %v410
        %648 = vmatpush1.bf16.msra.mxu0 %v409
        %649 = vmatprep.subr.bf16.mxu0 %v408
        %650 = vmatpush1.bf16.msra.mxu0 %v407
        %651 = vmatprep.subr.bf16.mxu0 %v406
        %652 = vmatpush1.bf16.msra.mxu0 %v405
        %653 = vmatprep.subr.bf16.mxu0 %v404
        %654 = vmatpush1.bf16.msra.mxu0 %v403
        %655 = vmatprep.subr.bf16.mxu0 0
        %656 = vmatpush2.bf16.msra.mxu0 0
        %657 = vmatprep.subr.bf16.mxu0 0
        %658 = vmatpush2.bf16.msra.mxu0 0
        %659 = vmatprep.subr.bf16.mxu0 0
        %660 = vmatpush2.bf16.msra.mxu0 0
        %661 = vmatprep.subr.bf16.mxu0 0
        %662 = vmatpush2.bf16.msra.mxu0 0
        %663 = vmatprep.subr.bf16.mxu0 0
        %664 = vmatpush2.bf16.msra.mxu0 0
        %665 = vmatprep.subr.bf16.mxu0 0
        %666 = vmatpush2.bf16.msra.mxu0 0
        %667 = vmatprep.subr.bf16.mxu0 0
        %668 = vmatpush2.bf16.msra.mxu0 0
        %669 = vmatprep.subr.bf16.mxu0 0
        %670 = vmatpush2.bf16.msra.mxu0 0
        %671 = vmatprep.mubr.bf16.mxu0 0
        %672 = vmatmul.mubr.bf16.gmra.mxu0 %v628
        %v673 = vpop.f32.mrf.mxu0
        %v674 = vadd.f32 %v569, %v673
        %v675 = vpop.f32.mrf.mxu0
        %v676 = vadd.f32 %v571, %v675
        %v677 = vpop.f32.mrf.mxu0
        %v678 = vadd.f32 %v573, %v677
        %v679 = vpop.f32.mrf.mxu0
        %v680 = vadd.f32 %v575, %v679
        %681 = vmatprep.mubr.bf16.mxu0 0
        %682 = vmatmul.mubr.bf16.gmra.mxu0 %v631
        %v683 = vpop.f32.mrf.mxu0
        %v684 = vadd.f32 %v579, %v683
        %v685 = vpop.f32.mrf.mxu0
        %v686 = vadd.f32 %v581, %v685
        %v687 = vpop.f32.mrf.mxu0
        %v688 = vadd.f32 %v583, %v687
        %v689 = vpop.f32.mrf.mxu0
        %v690 = vadd.f32 %v585, %v689
        %691 = vmatprep.mubr.bf16.mxu0 0
        %692 = vmatmul.mubr.bf16.gmra.mxu0 %v634
        %v693 = vpop.f32.mrf.mxu0
        %v694 = vadd.f32 %v589, %v693
        %v695 = vpop.f32.mrf.mxu0
        %v696 = vadd.f32 %v591, %v695
        %v697 = vpop.f32.mrf.mxu0
        %v698 = vadd.f32 %v593, %v697
        %v699 = vpop.f32.mrf.mxu0
        %v700 = vadd.f32 %v595, %v699
        %701 = vmatprep.mubr.bf16.mxu0 0
        %702 = vmatmul.mubr.bf16.gmra.mxu0 %v637
        %v703 = vpop.f32.mrf.mxu0
        %v704 = vadd.f32 %v599, %v703
        %v705 = vpop.f32.mrf.mxu0
        %v706 = vadd.f32 %v601, %v705
        %v707 = vpop.f32.mrf.mxu0
        %v708 = vadd.f32 %v603, %v707
        %v709 = vpop.f32.mrf.mxu0
        %v710 = vadd.f32 %v605, %v709
        %711 = vdwg.mxu0
        %712 = vrot.lane.b32.xlu0 %v300, 15
        %v713 = vpop.permute.xlu0 %712
        %714 = vrot.lane.b32.xlu0 %v302, 15
        %v715 = vpop.permute.xlu0 %714
        %716 = vrot.lane.b32.xlu0 %v304, 15
        %v717 = vpop.permute.xlu0 %716
        %718 = vrot.lane.b32.xlu0 %v306, 15
        %v719 = vpop.permute.xlu0 %718
        %720 = vrot.lane.b32.xlu0 %v308, 15
        %v721 = vpop.permute.xlu0 %720
        %722 = vrot.lane.b32.xlu0 %v310, 15
        %v723 = vpop.permute.xlu0 %722
        %724 = vrot.lane.b32.xlu0 %v312, 15
        %v725 = vpop.permute.xlu0 %724
        %726 = vrot.lane.b32.xlu0 %v314, 15
        %v727 = vpop.permute.xlu0 %726
        %728 = vrot.lane.b32.xlu0 %v301, 15
        %v729 = vpop.permute.xlu0 %728
        %730 = vrot.lane.b32.xlu0 %v303, 15
        %v731 = vpop.permute.xlu0 %730
        %732 = vrot.lane.b32.xlu0 %v305, 15
        %v733 = vpop.permute.xlu0 %732
        %734 = vrot.lane.b32.xlu0 %v307, 15
        %v735 = vpop.permute.xlu0 %734
        %736 = vrot.lane.b32.xlu0 %v309, 15
        %v737 = vpop.permute.xlu0 %736
        %738 = vrot.lane.b32.xlu0 %v311, 15
        %v739 = vpop.permute.xlu0 %738
        %740 = vrot.lane.b32.xlu0 %v313, 15
        %v741 = vpop.permute.xlu0 %740
        %742 = vrot.lane.b32.xlu0 %v315, 15
        %v743 = vpop.permute.xlu0 %742
        %vm744 = vcmp.lt.s32.totalorder %v353, 15
        %v745 = vsel %vm744, %v713, %v729
        %v746 = vsel %vm744, %v715, %v731
        %v747 = vsel %vm744, %v717, %v733
        %v748 = vsel %vm744, %v719, %v735
        %v749 = vsel %vm744, %v721, %v737
        %v750 = vsel %vm744, %v723, %v739
        %v751 = vsel %vm744, %v725, %v741
        %v752 = vsel %vm744, %v727, %v743
        %v753 = vsel %vm744, %v729, %v713
        %v754 = vsel %vm744, %v731, %v715
        %v755 = vsel %vm744, %v733, %v717
        %v756 = vsel %vm744, %v735, %v719
        %v757 = vsel %vm744, %v737, %v721
        %v758 = vsel %vm744, %v739, %v723
        %v759 = vsel %vm744, %v741, %v725
        %v760 = vsel %vm744, %v743, %v727
        %v761 = vlaneseq
        %v762 = vshrl.u32 %v761, 7
        %v763 = vsub.s32 2, %v762
        %v764 = vrot.slane %v316, %v763
        %v765 = vlaneseq
        %v766 = vshrl.u32 %v765, 7
        %v767 = vsub.s32 2, %v766
        %v768 = vrot.slane %v317, %v767
        %v769 = vmul.f32 %v753, %v764
        %v770 = vmul.f32 %v745, %v768
        %v771 = vmul.f32 %v754, %v764
        %v772 = vmul.f32 %v746, %v768
        %v773 = vmul.f32 %v755, %v764
        %v774 = vmul.f32 %v747, %v768
        %v775 = vmul.f32 %v756, %v764
        %v776 = vmul.f32 %v748, %v768
        %v777 = vmul.f32 %v757, %v764
        %v778 = vmul.f32 %v749, %v768
        %v779 = vmul.f32 %v758, %v764
        %v780 = vmul.f32 %v750, %v768
        %v781 = vmul.f32 %v759, %v764
        %v782 = vmul.f32 %v751, %v768
        %v783 = vmul.f32 %v760, %v764
        %v784 = vmul.f32 %v752, %v768
        %s785 = scalar_lea.vmem [#allocation5], 64
        %v786 = vld [vmem:[%s785] sm:$0xf]
        %v787 = vld [vmem:[%s785 + $0x4] sm:$0xf]
        %v788 = vld [vmem:[%s785 + $0x8] sm:$0xf]
        %v789 = vld [vmem:[%s785 + $0xc] sm:$0xf]
        %v790 = vld [vmem:[%s785 + $0x10] sm:$0xf]
        %v791 = vld [vmem:[%s785 + $0x14] sm:$0xf]
        %v792 = vld [vmem:[%s785 + $0x18] sm:$0xf]
        %v793 = vld [vmem:[%s785 + $0x1c] sm:$0xf]
        %v794 = vpack.c.bf16 %v771, %v769
        %v795 = vpack.c.bf16 %v772, %v770
        %v796 = vpack.c.bf16 %v775, %v773
        %v797 = vpack.c.bf16 %v776, %v774
        %v798 = vpack.c.bf16 %v779, %v777
        %v799 = vpack.c.bf16 %v780, %v778
        %v800 = vpack.c.bf16 %v783, %v781
        %v801 = vpack.c.bf16 %v784, %v782
        %v810 = vunpack.c.l.b16 %v786
        %v811 = vunpack.c.l.b16 %v787
        %v812 = vunpack.c.l.b16 %v788
        %v813 = vunpack.c.l.b16 %v789
        %v814 = vunpack.c.l.b16 %v790
        %v815 = vunpack.c.l.b16 %v791
        %v816 = vunpack.c.l.b16 %v792
        %v817 = vunpack.c.l.b16 %v793
        %v818 = vpack.c.b16 %v811, %v810
        %v819 = vpack.c.b16 %v813, %v812
        %v820 = vpack.c.b16 %v815, %v814
        %v821 = vpack.c.b16 %v817, %v816
        %v823 = vsel %vm521, %v818, 0
        %v826 = vsel %vm521, %v819, 0
        %v829 = vsel %vm521, %v820, 0
        %v832 = vsel %vm521, %v821, 0
        %834 = vmatprep.subr.bf16.mxu0 0
        %835 = vmatpush1.bf16.msra.mxu0 0
        %836 = vmatprep.subr.bf16.mxu0 0
        %837 = vmatpush1.bf16.msra.mxu0 0
        %838 = vmatprep.subr.bf16.mxu0 0
        %839 = vmatpush1.bf16.msra.mxu0 0
        %840 = vmatprep.subr.bf16.mxu0 0
        %841 = vmatpush1.bf16.msra.mxu0 0
        %842 = vmatprep.subr.bf16.mxu0 %v801
        %843 = vmatpush1.bf16.msra.mxu0 %v800
        %844 = vmatprep.subr.bf16.mxu0 %v799
        %845 = vmatpush1.bf16.msra.mxu0 %v798
        %846 = vmatprep.subr.bf16.mxu0 %v797
        %847 = vmatpush1.bf16.msra.mxu0 %v796
        %848 = vmatprep.subr.bf16.mxu0 %v795
        %849 = vmatpush1.bf16.msra.mxu0 %v794
        %850 = vmatprep.subr.bf16.mxu0 0
        %851 = vmatpush2.bf16.msra.mxu0 0
        %852 = vmatprep.subr.bf16.mxu0 0
        %853 = vmatpush2.bf16.msra.mxu0 0
        %854 = vmatprep.subr.bf16.mxu0 0
        %855 = vmatpush2.bf16.msra.mxu0 0
        %856 = vmatprep.subr.bf16.mxu0 0
        %857 = vmatpush2.bf16.msra.mxu0 0
        %858 = vmatprep.subr.bf16.mxu0 0
        %859 = vmatpush2.bf16.msra.mxu0 0
        %860 = vmatprep.subr.bf16.mxu0 0
        %861 = vmatpush2.bf16.msra.mxu0 0
        %862 = vmatprep.subr.bf16.mxu0 0
        %863 = vmatpush2.bf16.msra.mxu0 0
        %864 = vmatprep.subr.bf16.mxu0 0
        %865 = vmatpush2.bf16.msra.mxu0 0
        %866 = vmatprep.mubr.bf16.mxu0 0
        %867 = vmatmul.mubr.bf16.gmra.mxu0 %v823
        %v868 = vpop.f32.mrf.mxu0
        %v869 = vadd.f32 0.0, %v868
        %v870 = vpop.f32.mrf.mxu0
        %v871 = vadd.f32 0.0, %v870
        %v872 = vpop.f32.mrf.mxu0
        %v873 = vadd.f32 0.0, %v872
        %v874 = vpop.f32.mrf.mxu0
        %v875 = vadd.f32 0.0, %v874
        %876 = vmatprep.mubr.bf16.mxu0 0
        %877 = vmatmul.mubr.bf16.gmra.mxu0 %v826
        %v878 = vpop.f32.mrf.mxu0
        %v879 = vadd.f32 0.0, %v878
        %v880 = vpop.f32.mrf.mxu0
        %v881 = vadd.f32 0.0, %v880
        %v882 = vpop.f32.mrf.mxu0
        %v883 = vadd.f32 0.0, %v882
        %v884 = vpop.f32.mrf.mxu0
        %v885 = vadd.f32 0.0, %v884
        %886 = vmatprep.mubr.bf16.mxu0 0
        %887 = vmatmul.mubr.bf16.gmra.mxu0 %v829
        %v888 = vpop.f32.mrf.mxu0
        %v889 = vadd.f32 0.0, %v888
        %v890 = vpop.f32.mrf.mxu0
        %v891 = vadd.f32 0.0, %v890
        %v892 = vpop.f32.mrf.mxu0
        %v893 = vadd.f32 0.0, %v892
        %v894 = vpop.f32.mrf.mxu0
        %v895 = vadd.f32 0.0, %v894
        %896 = vmatprep.mubr.bf16.mxu0 0
        %897 = vmatmul.mubr.bf16.gmra.mxu0 %v832
        %v898 = vpop.f32.mrf.mxu0
        %v899 = vadd.f32 0.0, %v898
        %v900 = vpop.f32.mrf.mxu0
        %v901 = vadd.f32 0.0, %v900
        %v902 = vpop.f32.mrf.mxu0
        %v903 = vadd.f32 0.0, %v902
        %v904 = vpop.f32.mrf.mxu0
        %v905 = vadd.f32 0.0, %v904
        %906 = vdwg.mxu0
        %v907 = vadd.f32 %v674, %v869
        %v908 = vadd.f32 %v676, %v871
        %v909 = vadd.f32 %v678, %v873
        %v910 = vadd.f32 %v680, %v875
        %v911 = vadd.f32 %v684, %v879
        %v912 = vadd.f32 %v686, %v881
        %v913 = vadd.f32 %v688, %v883
        %v914 = vadd.f32 %v690, %v885
        %v915 = vadd.f32 %v694, %v889
        %v916 = vadd.f32 %v696, %v891
        %v917 = vadd.f32 %v698, %v893
        %v918 = vadd.f32 %v700, %v895
        %v919 = vadd.f32 %v704, %v899
        %v920 = vadd.f32 %v706, %v901
        %v921 = vadd.f32 %v708, %v903
        %v922 = vadd.f32 %v710, %v905
        %923 = vrot.lane.b32.xlu0 %v300, 1
        %v924 = vpop.permute.xlu0 %923
        %925 = vrot.lane.b32.xlu0 %v302, 1
        %v926 = vpop.permute.xlu0 %925
        %927 = vrot.lane.b32.xlu0 %v304, 1
        %v928 = vpop.permute.xlu0 %927
        %929 = vrot.lane.b32.xlu0 %v306, 1
        %v930 = vpop.permute.xlu0 %929
        %931 = vrot.lane.b32.xlu0 %v308, 1
        %v932 = vpop.permute.xlu0 %931
        %933 = vrot.lane.b32.xlu0 %v310, 1
        %v934 = vpop.permute.xlu0 %933
        %935 = vrot.lane.b32.xlu0 %v312, 1
        %v936 = vpop.permute.xlu0 %935
        %937 = vrot.lane.b32.xlu0 %v314, 1
        %v938 = vpop.permute.xlu0 %937
        %939 = vrot.lane.b32.xlu0 %v301, 1
        %v940 = vpop.permute.xlu0 %939
        %941 = vrot.lane.b32.xlu0 %v303, 1
        %v942 = vpop.permute.xlu0 %941
        %943 = vrot.lane.b32.xlu0 %v305, 1
        %v944 = vpop.permute.xlu0 %943
        %945 = vrot.lane.b32.xlu0 %v307, 1
        %v946 = vpop.permute.xlu0 %945
        %947 = vrot.lane.b32.xlu0 %v309, 1
        %v948 = vpop.permute.xlu0 %947
        %949 = vrot.lane.b32.xlu0 %v311, 1
        %v950 = vpop.permute.xlu0 %949
        %951 = vrot.lane.b32.xlu0 %v313, 1
        %v952 = vpop.permute.xlu0 %951
        %953 = vrot.lane.b32.xlu0 %v315, 1
        %v954 = vpop.permute.xlu0 %953
        %vm955 = vcmp.lt.s32.totalorder %v353, 1
        %v956 = vsel %vm955, %v924, %v940
        %v957 = vsel %vm955, %v926, %v942
        %v958 = vsel %vm955, %v928, %v944
        %v959 = vsel %vm955, %v930, %v946
        %v960 = vsel %vm955, %v932, %v948
        %v961 = vsel %vm955, %v934, %v950
        %v962 = vsel %vm955, %v936, %v952
        %v963 = vsel %vm955, %v938, %v954
        %v964 = vsel %vm955, %v940, %v924
        %v965 = vsel %vm955, %v942, %v926
        %v966 = vsel %vm955, %v944, %v928
        %v967 = vsel %vm955, %v946, %v930
        %v968 = vsel %vm955, %v948, %v932
        %v969 = vsel %vm955, %v950, %v934
        %v970 = vsel %vm955, %v952, %v936
        %v971 = vsel %vm955, %v954, %v938
        %v972 = vlaneseq
        %v973 = vshrl.u32 %v972, 7
        %v974 = vsub.s32 3, %v973
        %v975 = vrot.slane %v316, %v974
        %v976 = vlaneseq
        %v977 = vshrl.u32 %v976, 7
        %v978 = vsub.s32 3, %v977
        %v979 = vrot.slane %v317, %v978
        %v980 = vmul.f32 %v964, %v975
        %v981 = vmul.f32 %v956, %v979
        %v982 = vmul.f32 %v965, %v975
        %v983 = vmul.f32 %v957, %v979
        %v984 = vmul.f32 %v966, %v975
        %v985 = vmul.f32 %v958, %v979
        %v986 = vmul.f32 %v967, %v975
        %v987 = vmul.f32 %v959, %v979
        %v988 = vmul.f32 %v968, %v975
        %v989 = vmul.f32 %v960, %v979
        %v990 = vmul.f32 %v969, %v975
        %v991 = vmul.f32 %v961, %v979
        %v992 = vmul.f32 %v970, %v975
        %v993 = vmul.f32 %v962, %v979
        %v994 = vmul.f32 %v971, %v975
        %v995 = vmul.f32 %v963, %v979
        %s996 = scalar_lea.vmem [#allocation5], 96
        %v997 = vld [vmem:[%s996] sm:$0xf]
        %v998 = vld [vmem:[%s996 + $0x4] sm:$0xf]
        %v999 = vld [vmem:[%s996 + $0x8] sm:$0xf]
        %v1000 = vld [vmem:[%s996 + $0xc] sm:$0xf]
        %v1001 = vld [vmem:[%s996 + $0x10] sm:$0xf]
        %v1002 = vld [vmem:[%s996 + $0x14] sm:$0xf]
        %v1003 = vld [vmem:[%s996 + $0x18] sm:$0xf]
        %v1004 = vld [vmem:[%s996 + $0x1c] sm:$0xf]
        %v1005 = vpack.c.bf16 %v982, %v980
        %v1006 = vpack.c.bf16 %v983, %v981
        %v1007 = vpack.c.bf16 %v986, %v984
        %v1008 = vpack.c.bf16 %v987, %v985
        %v1009 = vpack.c.bf16 %v990, %v988
        %v1010 = vpack.c.bf16 %v991, %v989
        %v1011 = vpack.c.bf16 %v994, %v992
        %v1012 = vpack.c.bf16 %v995, %v993
        %v1021 = vunpack.c.l.b16 %v997
        %v1022 = vunpack.c.l.b16 %v998
        %v1023 = vunpack.c.l.b16 %v999
        %v1024 = vunpack.c.l.b16 %v1000
        %v1025 = vunpack.c.l.b16 %v1001
        %v1026 = vunpack.c.l.b16 %v1002
        %v1027 = vunpack.c.l.b16 %v1003
        %v1028 = vunpack.c.l.b16 %v1004
        %v1029 = vpack.c.b16 %v1022, %v1021
        %v1030 = vpack.c.b16 %v1024, %v1023
        %v1031 = vpack.c.b16 %v1026, %v1025
        %v1032 = vpack.c.b16 %v1028, %v1027
        %v1034 = vsel %vm521, %v1029, 0
        %v1037 = vsel %vm521, %v1030, 0
        %v1040 = vsel %vm521, %v1031, 0
        %v1043 = vsel %vm521, %v1032, 0
        %1045 = vmatprep.subr.bf16.mxu0 0
        %1046 = vmatpush1.bf16.msra.mxu0 0
        %1047 = vmatprep.subr.bf16.mxu0 0
        %1048 = vmatpush1.bf16.msra.mxu0 0
        %1049 = vmatprep.subr.bf16.mxu0 0
        %1050 = vmatpush1.bf16.msra.mxu0 0
        %1051 = vmatprep.subr.bf16.mxu0 0
        %1052 = vmatpush1.bf16.msra.mxu0 0
        %1053 = vmatprep.subr.bf16.mxu0 %v1012
        %1054 = vmatpush1.bf16.msra.mxu0 %v1011
        %1055 = vmatprep.subr.bf16.mxu0 %v1010
        %1056 = vmatpush1.bf16.msra.mxu0 %v1009
        %1057 = vmatprep.subr.bf16.mxu0 %v1008
        %1058 = vmatpush1.bf16.msra.mxu0 %v1007
        %1059 = vmatprep.subr.bf16.mxu0 %v1006
        %1060 = vmatpush1.bf16.msra.mxu0 %v1005
        %1061 = vmatprep.subr.bf16.mxu0 0
        %1062 = vmatpush2.bf16.msra.mxu0 0
        %1063 = vmatprep.subr.bf16.mxu0 0
        %1064 = vmatpush2.bf16.msra.mxu0 0
        %1065 = vmatprep.subr.bf16.mxu0 0
        %1066 = vmatpush2.bf16.msra.mxu0 0
        %1067 = vmatprep.subr.bf16.mxu0 0
        %1068 = vmatpush2.bf16.msra.mxu0 0
        %1069 = vmatprep.subr.bf16.mxu0 0
        %1070 = vmatpush2.bf16.msra.mxu0 0
        %1071 = vmatprep.subr.bf16.mxu0 0
        %1072 = vmatpush2.bf16.msra.mxu0 0
        %1073 = vmatprep.subr.bf16.mxu0 0
        %1074 = vmatpush2.bf16.msra.mxu0 0
        %1075 = vmatprep.subr.bf16.mxu0 0
        %1076 = vmatpush2.bf16.msra.mxu0 0
        %1077 = vmatprep.mubr.bf16.mxu0 0
        %1078 = vmatmul.mubr.bf16.gmra.mxu0 %v1034
        %v1079 = vpop.f32.mrf.mxu0
        %v1080 = vadd.f32 0.0, %v1079
        %v1081 = vpop.f32.mrf.mxu0
        %v1082 = vadd.f32 0.0, %v1081
        %v1083 = vpop.f32.mrf.mxu0
        %v1084 = vadd.f32 0.0, %v1083
        %v1085 = vpop.f32.mrf.mxu0
        %v1086 = vadd.f32 0.0, %v1085
        %1087 = vmatprep.mubr.bf16.mxu0 0
        %1088 = vmatmul.mubr.bf16.gmra.mxu0 %v1037
        %v1089 = vpop.f32.mrf.mxu0
        %v1090 = vadd.f32 0.0, %v1089
        %v1091 = vpop.f32.mrf.mxu0
        %v1092 = vadd.f32 0.0, %v1091
        %v1093 = vpop.f32.mrf.mxu0
        %v1094 = vadd.f32 0.0, %v1093
        %v1095 = vpop.f32.mrf.mxu0
        %v1096 = vadd.f32 0.0, %v1095
        %1097 = vmatprep.mubr.bf16.mxu0 0
        %1098 = vmatmul.mubr.bf16.gmra.mxu0 %v1040
        %v1099 = vpop.f32.mrf.mxu0
        %v1100 = vadd.f32 0.0, %v1099
        %v1101 = vpop.f32.mrf.mxu0
        %v1102 = vadd.f32 0.0, %v1101
        %v1103 = vpop.f32.mrf.mxu0
        %v1104 = vadd.f32 0.0, %v1103
        %v1105 = vpop.f32.mrf.mxu0
        %v1106 = vadd.f32 0.0, %v1105
        %1107 = vmatprep.mubr.bf16.mxu0 0
        %1108 = vmatmul.mubr.bf16.gmra.mxu0 %v1043
        %v1109 = vpop.f32.mrf.mxu0
        %v1110 = vadd.f32 0.0, %v1109
        %v1111 = vpop.f32.mrf.mxu0
        %v1112 = vadd.f32 0.0, %v1111
        %v1113 = vpop.f32.mrf.mxu0
        %v1114 = vadd.f32 0.0, %v1113
        %v1115 = vpop.f32.mrf.mxu0
        %v1116 = vadd.f32 0.0, %v1115
        %1117 = vdwg.mxu0
        %v1118 = vadd.f32 %v907, %v1080
        %v1119 = vadd.f32 %v908, %v1082
        %v1120 = vadd.f32 %v909, %v1084
        %v1121 = vadd.f32 %v910, %v1086
        %v1122 = vadd.f32 %v911, %v1090
        %v1123 = vadd.f32 %v912, %v1092
        %v1124 = vadd.f32 %v913, %v1094
        %v1125 = vadd.f32 %v914, %v1096
        %v1126 = vadd.f32 %v915, %v1100
        %v1127 = vadd.f32 %v916, %v1102
        %v1128 = vadd.f32 %v917, %v1104
        %v1129 = vadd.f32 %v918, %v1106
        %v1130 = vadd.f32 %v919, %v1110
        %v1131 = vadd.f32 %v920, %v1112
        %v1132 = vadd.f32 %v921, %v1114
        %v1133 = vadd.f32 %v922, %v1116
        %s1134 = scalar_lea.vmem [#allocation5], 128
        %v1135 = vld [vmem:[%s1134] sm:$0xf]
        %v1136 = vld [vmem:[%s1134 + $0x4] sm:$0xf]
        %v1137 = vld [vmem:[%s1134 + $0x8] sm:$0xf]
        %v1138 = vld [vmem:[%s1134 + $0xc] sm:$0xf]
        %v1139 = vld [vmem:[%s1134 + $0x10] sm:$0xf]
        %v1140 = vld [vmem:[%s1134 + $0x14] sm:$0xf]
        %v1141 = vld [vmem:[%s1134 + $0x18] sm:$0xf]
        %v1142 = vld [vmem:[%s1134 + $0x1c] sm:$0xf]
        %v1143 = vpack.c.bf16 %v302, %v300
        %v1144 = vpack.c.bf16 %v303, %v301
        %v1145 = vpack.c.bf16 %v306, %v304
        %v1146 = vpack.c.bf16 %v307, %v305
        %v1147 = vpack.c.bf16 %v310, %v308
        %v1148 = vpack.c.bf16 %v311, %v309
        %v1149 = vpack.c.bf16 %v314, %v312
        %v1150 = vpack.c.bf16 %v315, %v313
        %v1159 = vunpack.c.l.b16 %v1135
        %v1160 = vunpack.c.l.b16 %v1136
        %v1161 = vunpack.c.l.b16 %v1137
        %v1162 = vunpack.c.l.b16 %v1138
        %v1163 = vunpack.c.l.b16 %v1139
        %v1164 = vunpack.c.l.b16 %v1140
        %v1165 = vunpack.c.l.b16 %v1141
        %v1166 = vunpack.c.l.b16 %v1142
        %v1167 = vpack.c.b16 %v1160, %v1159
        %v1168 = vpack.c.b16 %v1162, %v1161
        %v1169 = vpack.c.b16 %v1164, %v1163
        %v1170 = vpack.c.b16 %v1166, %v1165
        %v1172 = vsel %vm521, %v1167, 0
        %v1175 = vsel %vm521, %v1168, 0
        %v1178 = vsel %vm521, %v1169, 0
        %v1181 = vsel %vm521, %v1170, 0
        %1183 = vmatprep.subr.bf16.mxu0 0
        %1184 = vmatpush1.bf16.msra.mxu0 0
        %1185 = vmatprep.subr.bf16.mxu0 0
        %1186 = vmatpush1.bf16.msra.mxu0 0
        %1187 = vmatprep.subr.bf16.mxu0 0
        %1188 = vmatpush1.bf16.msra.mxu0 0
        %1189 = vmatprep.subr.bf16.mxu0 0
        %1190 = vmatpush1.bf16.msra.mxu0 0
        %1191 = vmatprep.subr.bf16.mxu0 %v1150
        %1192 = vmatpush1.bf16.msra.mxu0 %v1149
        %1193 = vmatprep.subr.bf16.mxu0 %v1148
        %1194 = vmatpush1.bf16.msra.mxu0 %v1147
        %1195 = vmatprep.subr.bf16.mxu0 %v1146
        %1196 = vmatpush1.bf16.msra.mxu0 %v1145
        %1197 = vmatprep.subr.bf16.mxu0 %v1144
        %1198 = vmatpush1.bf16.msra.mxu0 %v1143
        %1199 = vmatprep.subr.bf16.mxu0 0
        %1200 = vmatpush2.bf16.msra.mxu0 0
        %1201 = vmatprep.subr.bf16.mxu0 0
        %1202 = vmatpush2.bf16.msra.mxu0 0
        %1203 = vmatprep.subr.bf16.mxu0 0
        %1204 = vmatpush2.bf16.msra.mxu0 0
        %1205 = vmatprep.subr.bf16.mxu0 0
        %1206 = vmatpush2.bf16.msra.mxu0 0
        %1207 = vmatprep.subr.bf16.mxu0 0
        %1208 = vmatpush2.bf16.msra.mxu0 0
        %1209 = vmatprep.subr.bf16.mxu0 0
        %1210 = vmatpush2.bf16.msra.mxu0 0
        %1211 = vmatprep.subr.bf16.mxu0 0
        %1212 = vmatpush2.bf16.msra.mxu0 0
        %1213 = vmatprep.subr.bf16.mxu0 0
        %1214 = vmatpush2.bf16.msra.mxu0 0
        %1215 = vmatprep.mubr.bf16.mxu0 0
        %1216 = vmatmul.mubr.bf16.gmra.mxu0 %v1172
        %v1217 = vpop.f32.mrf.mxu0
        %v1218 = vadd.f32 0.0, %v1217
        %v1219 = vpop.f32.mrf.mxu0
        %v1220 = vadd.f32 0.0, %v1219
        %v1221 = vpop.f32.mrf.mxu0
        %v1222 = vadd.f32 0.0, %v1221
        %v1223 = vpop.f32.mrf.mxu0
        %v1224 = vadd.f32 0.0, %v1223
        %1225 = vmatprep.mubr.bf16.mxu0 0
        %1226 = vmatmul.mubr.bf16.gmra.mxu0 %v1175
        %v1227 = vpop.f32.mrf.mxu0
        %v1228 = vadd.f32 0.0, %v1227
        %v1229 = vpop.f32.mrf.mxu0
        %v1230 = vadd.f32 0.0, %v1229
        %v1231 = vpop.f32.mrf.mxu0
        %v1232 = vadd.f32 0.0, %v1231
        %v1233 = vpop.f32.mrf.mxu0
        %v1234 = vadd.f32 0.0, %v1233
        %1235 = vmatprep.mubr.bf16.mxu0 0
        %1236 = vmatmul.mubr.bf16.gmra.mxu0 %v1178
        %v1237 = vpop.f32.mrf.mxu0
        %v1238 = vadd.f32 0.0, %v1237
        %v1239 = vpop.f32.mrf.mxu0
        %v1240 = vadd.f32 0.0, %v1239
        %v1241 = vpop.f32.mrf.mxu0
        %v1242 = vadd.f32 0.0, %v1241
        %v1243 = vpop.f32.mrf.mxu0
        %v1244 = vadd.f32 0.0, %v1243
        %1245 = vmatprep.mubr.bf16.mxu0 0
        %1246 = vmatmul.mubr.bf16.gmra.mxu0 %v1181
        %v1247 = vpop.f32.mrf.mxu0
        %v1248 = vadd.f32 0.0, %v1247
        %v1249 = vpop.f32.mrf.mxu0
        %v1250 = vadd.f32 0.0, %v1249
        %v1251 = vpop.f32.mrf.mxu0
        %v1252 = vadd.f32 0.0, %v1251
        %v1253 = vpop.f32.mrf.mxu0
        %v1254 = vadd.f32 0.0, %v1253
        %1255 = vdwg.mxu0
        %v1256 = vadd.f32 %v1118, %v1218
        %v1257 = vadd.f32 %v1119, %v1220
        %v1258 = vadd.f32 %v1120, %v1222
        %v1259 = vadd.f32 %v1121, %v1224
        %v1260 = vadd.f32 %v1122, %v1228
        %v1261 = vadd.f32 %v1123, %v1230
        %v1262 = vadd.f32 %v1124, %v1232
        %v1263 = vadd.f32 %v1125, %v1234
        %v1264 = vadd.f32 %v1126, %v1238
        %v1265 = vadd.f32 %v1127, %v1240
        %v1266 = vadd.f32 %v1128, %v1242
        %v1267 = vadd.f32 %v1129, %v1244
        %v1268 = vadd.f32 %v1130, %v1248
        %v1269 = vadd.f32 %v1131, %v1250
        %v1270 = vadd.f32 %v1132, %v1252
        %v1271 = vadd.f32 %v1133, %v1254
        %1272 = vrot.lane.b32.xlu0 %v300, 127
        %v1273 = vpop.permute.xlu0 %1272
        %1274 = vrot.lane.b32.xlu0 %v302, 127
        %v1275 = vpop.permute.xlu0 %1274
        %1276 = vrot.lane.b32.xlu0 %v304, 127
        %v1277 = vpop.permute.xlu0 %1276
        %1278 = vrot.lane.b32.xlu0 %v306, 127
        %v1279 = vpop.permute.xlu0 %1278
        %1280 = vrot.lane.b32.xlu0 %v308, 127
        %v1281 = vpop.permute.xlu0 %1280
        %1282 = vrot.lane.b32.xlu0 %v310, 127
        %v1283 = vpop.permute.xlu0 %1282
        %1284 = vrot.lane.b32.xlu0 %v312, 127
        %v1285 = vpop.permute.xlu0 %1284
        %1286 = vrot.lane.b32.xlu0 %v314, 127
        %v1287 = vpop.permute.xlu0 %1286
        %1288 = vrot.lane.b32.xlu0 %v301, 127
        %v1289 = vpop.permute.xlu0 %1288
        %1290 = vrot.lane.b32.xlu0 %v303, 127
        %v1291 = vpop.permute.xlu0 %1290
        %1292 = vrot.lane.b32.xlu0 %v305, 127
        %v1293 = vpop.permute.xlu0 %1292
        %1294 = vrot.lane.b32.xlu0 %v307, 127
        %v1295 = vpop.permute.xlu0 %1294
        %1296 = vrot.lane.b32.xlu0 %v309, 127
        %v1297 = vpop.permute.xlu0 %1296
        %1298 = vrot.lane.b32.xlu0 %v311, 127
        %v1299 = vpop.permute.xlu0 %1298
        %1300 = vrot.lane.b32.xlu0 %v313, 127
        %v1301 = vpop.permute.xlu0 %1300
        %1302 = vrot.lane.b32.xlu0 %v315, 127
        %v1303 = vpop.permute.xlu0 %1302
        %vm1304 = vcmp.lt.s32.totalorder %v353, 127
        %v1305 = vsel %vm1304, %v1273, %v1289
        %v1306 = vsel %vm1304, %v1275, %v1291
        %v1307 = vsel %vm1304, %v1277, %v1293
        %v1308 = vsel %vm1304, %v1279, %v1295
        %v1309 = vsel %vm1304, %v1281, %v1297
        %v1310 = vsel %vm1304, %v1283, %v1299
        %v1311 = vsel %vm1304, %v1285, %v1301
        %v1312 = vsel %vm1304, %v1287, %v1303
        %v1313 = vsel %vm1304, %v1289, %v1273
        %v1314 = vsel %vm1304, %v1291, %v1275
        %v1315 = vsel %vm1304, %v1293, %v1277
        %v1316 = vsel %vm1304, %v1295, %v1279
        %v1317 = vsel %vm1304, %v1297, %v1281
        %v1318 = vsel %vm1304, %v1299, %v1283
        %v1319 = vsel %vm1304, %v1301, %v1285
        %v1320 = vsel %vm1304, %v1303, %v1287
        %v1321 = vlaneseq
        %v1322 = vshrl.u32 %v1321, 7
        %v1323 = vsub.s32 5, %v1322
        %v1324 = vrot.slane %v316, %v1323
        %v1325 = vlaneseq
        %v1326 = vshrl.u32 %v1325, 7
        %v1327 = vsub.s32 5, %v1326
        %v1328 = vrot.slane %v317, %v1327
        %v1329 = vmul.f32 %v1305, %v1324
        %v1330 = vmul.f32 %v1313, %v1328
        %v1331 = vmul.f32 %v1306, %v1324
        %v1332 = vmul.f32 %v1314, %v1328
        %v1333 = vmul.f32 %v1307, %v1324
        %v1334 = vmul.f32 %v1315, %v1328
        %v1335 = vmul.f32 %v1308, %v1324
        %v1336 = vmul.f32 %v1316, %v1328
        %v1337 = vmul.f32 %v1309, %v1324
        %v1338 = vmul.f32 %v1317, %v1328
        %v1339 = vmul.f32 %v1310, %v1324
        %v1340 = vmul.f32 %v1318, %v1328
        %v1341 = vmul.f32 %v1311, %v1324
        %v1342 = vmul.f32 %v1319, %v1328
        %v1343 = vmul.f32 %v1312, %v1324
        %v1344 = vmul.f32 %v1320, %v1328
        %s1345 = scalar_lea.vmem [#allocation5], 160
        %v1346 = vld [vmem:[%s1345] sm:$0xf]
        %v1347 = vld [vmem:[%s1345 + $0x4] sm:$0xf]
        %v1348 = vld [vmem:[%s1345 + $0x8] sm:$0xf]
        %v1349 = vld [vmem:[%s1345 + $0xc] sm:$0xf]
        %v1350 = vld [vmem:[%s1345 + $0x10] sm:$0xf]
        %v1351 = vld [vmem:[%s1345 + $0x14] sm:$0xf]
        %v1352 = vld [vmem:[%s1345 + $0x18] sm:$0xf]
        %v1353 = vld [vmem:[%s1345 + $0x1c] sm:$0xf]
        %v1354 = vpack.c.bf16 %v1331, %v1329
        %v1355 = vpack.c.bf16 %v1332, %v1330
        %v1356 = vpack.c.bf16 %v1335, %v1333
        %v1357 = vpack.c.bf16 %v1336, %v1334
        %v1358 = vpack.c.bf16 %v1339, %v1337
        %v1359 = vpack.c.bf16 %v1340, %v1338
        %v1360 = vpack.c.bf16 %v1343, %v1341
        %v1361 = vpack.c.bf16 %v1344, %v1342
        %v1370 = vunpack.c.l.b16 %v1346
        %v1371 = vunpack.c.l.b16 %v1347
        %v1372 = vunpack.c.l.b16 %v1348
        %v1373 = vunpack.c.l.b16 %v1349
        %v1374 = vunpack.c.l.b16 %v1350
        %v1375 = vunpack.c.l.b16 %v1351
        %v1376 = vunpack.c.l.b16 %v1352
        %v1377 = vunpack.c.l.b16 %v1353
        %v1378 = vpack.c.b16 %v1371, %v1370
        %v1379 = vpack.c.b16 %v1373, %v1372
        %v1380 = vpack.c.b16 %v1375, %v1374
        %v1381 = vpack.c.b16 %v1377, %v1376
        %v1383 = vsel %vm521, %v1378, 0
        %v1386 = vsel %vm521, %v1379, 0
        %v1389 = vsel %vm521, %v1380, 0
        %v1392 = vsel %vm521, %v1381, 0
        %1394 = vmatprep.subr.bf16.mxu0 0
        %1395 = vmatpush1.bf16.msra.mxu0 0
        %1396 = vmatprep.subr.bf16.mxu0 0
        %1397 = vmatpush1.bf16.msra.mxu0 0
        %1398 = vmatprep.subr.bf16.mxu0 0
        %1399 = vmatpush1.bf16.msra.mxu0 0
        %1400 = vmatprep.subr.bf16.mxu0 0
        %1401 = vmatpush1.bf16.msra.mxu0 0
        %1402 = vmatprep.subr.bf16.mxu0 %v1361
        %1403 = vmatpush1.bf16.msra.mxu0 %v1360
        %1404 = vmatprep.subr.bf16.mxu0 %v1359
        %1405 = vmatpush1.bf16.msra.mxu0 %v1358
        %1406 = vmatprep.subr.bf16.mxu0 %v1357
        %1407 = vmatpush1.bf16.msra.mxu0 %v1356
        %1408 = vmatprep.subr.bf16.mxu0 %v1355
        %1409 = vmatpush1.bf16.msra.mxu0 %v1354
        %1410 = vmatprep.subr.bf16.mxu0 0
        %1411 = vmatpush2.bf16.msra.mxu0 0
        %1412 = vmatprep.subr.bf16.mxu0 0
        %1413 = vmatpush2.bf16.msra.mxu0 0
        %1414 = vmatprep.subr.bf16.mxu0 0
        %1415 = vmatpush2.bf16.msra.mxu0 0
        %1416 = vmatprep.subr.bf16.mxu0 0
        %1417 = vmatpush2.bf16.msra.mxu0 0
        %1418 = vmatprep.subr.bf16.mxu0 0
        %1419 = vmatpush2.bf16.msra.mxu0 0
        %1420 = vmatprep.subr.bf16.mxu0 0
        %1421 = vmatpush2.bf16.msra.mxu0 0
        %1422 = vmatprep.subr.bf16.mxu0 0
        %1423 = vmatpush2.bf16.msra.mxu0 0
        %1424 = vmatprep.subr.bf16.mxu0 0
        %1425 = vmatpush2.bf16.msra.mxu0 0
        %1426 = vmatprep.mubr.bf16.mxu0 0
        %1427 = vmatmul.mubr.bf16.gmra.mxu0 %v1383
        %v1428 = vpop.f32.mrf.mxu0
        %v1429 = vadd.f32 0.0, %v1428
        %v1430 = vpop.f32.mrf.mxu0
        %v1431 = vadd.f32 0.0, %v1430
        %v1432 = vpop.f32.mrf.mxu0
        %v1433 = vadd.f32 0.0, %v1432
        %v1434 = vpop.f32.mrf.mxu0
        %v1435 = vadd.f32 0.0, %v1434
        %1436 = vmatprep.mubr.bf16.mxu0 0
        %1437 = vmatmul.mubr.bf16.gmra.mxu0 %v1386
        %v1438 = vpop.f32.mrf.mxu0
        %v1439 = vadd.f32 0.0, %v1438
        %v1440 = vpop.f32.mrf.mxu0
        %v1441 = vadd.f32 0.0, %v1440
        %v1442 = vpop.f32.mrf.mxu0
        %v1443 = vadd.f32 0.0, %v1442
        %v1444 = vpop.f32.mrf.mxu0
        %v1445 = vadd.f32 0.0, %v1444
        %1446 = vmatprep.mubr.bf16.mxu0 0
        %1447 = vmatmul.mubr.bf16.gmra.mxu0 %v1389
        %v1448 = vpop.f32.mrf.mxu0
        %v1449 = vadd.f32 0.0, %v1448
        %v1450 = vpop.f32.mrf.mxu0
        %v1451 = vadd.f32 0.0, %v1450
        %v1452 = vpop.f32.mrf.mxu0
        %v1453 = vadd.f32 0.0, %v1452
        %v1454 = vpop.f32.mrf.mxu0
        %v1455 = vadd.f32 0.0, %v1454
        %1456 = vmatprep.mubr.bf16.mxu0 0
        %1457 = vmatmul.mubr.bf16.gmra.mxu0 %v1392
        %v1458 = vpop.f32.mrf.mxu0
        %v1459 = vadd.f32 0.0, %v1458
        %v1460 = vpop.f32.mrf.mxu0
        %v1461 = vadd.f32 0.0, %v1460
        %v1462 = vpop.f32.mrf.mxu0
        %v1463 = vadd.f32 0.0, %v1462
        %v1464 = vpop.f32.mrf.mxu0
        %v1465 = vadd.f32 0.0, %v1464
        %1466 = vdwg.mxu0
        %v1467 = vadd.f32 %v1256, %v1429
        %v1468 = vadd.f32 %v1257, %v1431
        %v1469 = vadd.f32 %v1258, %v1433
        %v1470 = vadd.f32 %v1259, %v1435
        %v1471 = vadd.f32 %v1260, %v1439
        %v1472 = vadd.f32 %v1261, %v1441
        %v1473 = vadd.f32 %v1262, %v1443
        %v1474 = vadd.f32 %v1263, %v1445
        %v1475 = vadd.f32 %v1264, %v1449
        %v1476 = vadd.f32 %v1265, %v1451
        %v1477 = vadd.f32 %v1266, %v1453
        %v1478 = vadd.f32 %v1267, %v1455
        %v1479 = vadd.f32 %v1268, %v1459
        %v1480 = vadd.f32 %v1269, %v1461
        %v1481 = vadd.f32 %v1270, %v1463
        %v1482 = vadd.f32 %v1271, %v1465
        %1483 = vrot.lane.b32.xlu0 %v300, 113
        %v1484 = vpop.permute.xlu0 %1483
        %1485 = vrot.lane.b32.xlu0 %v302, 113
        %v1486 = vpop.permute.xlu0 %1485
        %1487 = vrot.lane.b32.xlu0 %v304, 113
        %v1488 = vpop.permute.xlu0 %1487
        %1489 = vrot.lane.b32.xlu0 %v306, 113
        %v1490 = vpop.permute.xlu0 %1489
        %1491 = vrot.lane.b32.xlu0 %v308, 113
        %v1492 = vpop.permute.xlu0 %1491
        %1493 = vrot.lane.b32.xlu0 %v310, 113
        %v1494 = vpop.permute.xlu0 %1493
        %1495 = vrot.lane.b32.xlu0 %v312, 113
        %v1496 = vpop.permute.xlu0 %1495
        %1497 = vrot.lane.b32.xlu0 %v314, 113
        %v1498 = vpop.permute.xlu0 %1497
        %1499 = vrot.lane.b32.xlu0 %v301, 113
        %v1500 = vpop.permute.xlu0 %1499
        %1501 = vrot.lane.b32.xlu0 %v303, 113
        %v1502 = vpop.permute.xlu0 %1501
        %1503 = vrot.lane.b32.xlu0 %v305, 113
        %v1504 = vpop.permute.xlu0 %1503
        %1505 = vrot.lane.b32.xlu0 %v307, 113
        %v1506 = vpop.permute.xlu0 %1505
        %1507 = vrot.lane.b32.xlu0 %v309, 113
        %v1508 = vpop.permute.xlu0 %1507
        %1509 = vrot.lane.b32.xlu0 %v311, 113
        %v1510 = vpop.permute.xlu0 %1509
        %1511 = vrot.lane.b32.xlu0 %v313, 113
        %v1512 = vpop.permute.xlu0 %1511
        %1513 = vrot.lane.b32.xlu0 %v315, 113
        %v1514 = vpop.permute.xlu0 %1513
        %vm1515 = vcmp.lt.s32.totalorder %v353, 113
        %v1516 = vsel %vm1515, %v1484, %v1500
        %v1517 = vsel %vm1515, %v1486, %v1502
        %v1518 = vsel %vm1515, %v1488, %v1504
        %v1519 = vsel %vm1515, %v1490, %v1506
        %v1520 = vsel %vm1515, %v1492, %v1508
        %v1521 = vsel %vm1515, %v1494, %v1510
        %v1522 = vsel %vm1515, %v1496, %v1512
        %v1523 = vsel %vm1515, %v1498, %v1514
        %v1524 = vsel %vm1515, %v1500, %v1484
        %v1525 = vsel %vm1515, %v1502, %v1486
        %v1526 = vsel %vm1515, %v1504, %v1488
        %v1527 = vsel %vm1515, %v1506, %v1490
        %v1528 = vsel %vm1515, %v1508, %v1492
        %v1529 = vsel %vm1515, %v1510, %v1494
        %v1530 = vsel %vm1515, %v1512, %v1496
        %v1531 = vsel %vm1515, %v1514, %v1498
        %v1532 = vlaneseq
        %v1533 = vshrl.u32 %v1532, 7
        %v1534 = vsub.s32 6, %v1533
        %v1535 = vrot.slane %v316, %v1534
        %v1536 = vlaneseq
        %v1537 = vshrl.u32 %v1536, 7
        %v1538 = vsub.s32 6, %v1537
        %v1539 = vrot.slane %v317, %v1538
        %v1540 = vmul.f32 %v1516, %v1535
        %v1541 = vmul.f32 %v1524, %v1539
        %v1542 = vmul.f32 %v1517, %v1535
        %v1543 = vmul.f32 %v1525, %v1539
        %v1544 = vmul.f32 %v1518, %v1535
        %v1545 = vmul.f32 %v1526, %v1539
        %v1546 = vmul.f32 %v1519, %v1535
        %v1547 = vmul.f32 %v1527, %v1539
        %v1548 = vmul.f32 %v1520, %v1535
        %v1549 = vmul.f32 %v1528, %v1539
        %v1550 = vmul.f32 %v1521, %v1535
        %v1551 = vmul.f32 %v1529, %v1539
        %v1552 = vmul.f32 %v1522, %v1535
        %v1553 = vmul.f32 %v1530, %v1539
        %v1554 = vmul.f32 %v1523, %v1535
        %v1555 = vmul.f32 %v1531, %v1539
        %s1556 = scalar_lea.vmem [#allocation5], 192
        %v1557 = vld [vmem:[%s1556] sm:$0xf]
        %v1558 = vld [vmem:[%s1556 + $0x4] sm:$0xf]
        %v1559 = vld [vmem:[%s1556 + $0x8] sm:$0xf]
        %v1560 = vld [vmem:[%s1556 + $0xc] sm:$0xf]
        %v1561 = vld [vmem:[%s1556 + $0x10] sm:$0xf]
        %v1562 = vld [vmem:[%s1556 + $0x14] sm:$0xf]
        %v1563 = vld [vmem:[%s1556 + $0x18] sm:$0xf]
        %v1564 = vld [vmem:[%s1556 + $0x1c] sm:$0xf]
        %v1565 = vpack.c.bf16 %v1542, %v1540
        %v1566 = vpack.c.bf16 %v1543, %v1541
        %v1567 = vpack.c.bf16 %v1546, %v1544
        %v1568 = vpack.c.bf16 %v1547, %v1545
        %v1569 = vpack.c.bf16 %v1550, %v1548
        %v1570 = vpack.c.bf16 %v1551, %v1549
        %v1571 = vpack.c.bf16 %v1554, %v1552
        %v1572 = vpack.c.bf16 %v1555, %v1553
        %v1581 = vunpack.c.l.b16 %v1557
        %v1582 = vunpack.c.l.b16 %v1558
        %v1583 = vunpack.c.l.b16 %v1559
        %v1584 = vunpack.c.l.b16 %v1560
        %v1585 = vunpack.c.l.b16 %v1561
        %v1586 = vunpack.c.l.b16 %v1562
        %v1587 = vunpack.c.l.b16 %v1563
        %v1588 = vunpack.c.l.b16 %v1564
        %v1589 = vpack.c.b16 %v1582, %v1581
        %v1590 = vpack.c.b16 %v1584, %v1583
        %v1591 = vpack.c.b16 %v1586, %v1585
        %v1592 = vpack.c.b16 %v1588, %v1587
        %v1594 = vsel %vm521, %v1589, 0
        %v1597 = vsel %vm521, %v1590, 0
        %v1600 = vsel %vm521, %v1591, 0
        %v1603 = vsel %vm521, %v1592, 0
        %1605 = vmatprep.subr.bf16.mxu0 0
        %1606 = vmatpush1.bf16.msra.mxu0 0
        %1607 = vmatprep.subr.bf16.mxu0 0
        %1608 = vmatpush1.bf16.msra.mxu0 0
        %1609 = vmatprep.subr.bf16.mxu0 0
        %1610 = vmatpush1.bf16.msra.mxu0 0
        %1611 = vmatprep.subr.bf16.mxu0 0
        %1612 = vmatpush1.bf16.msra.mxu0 0
        %1613 = vmatprep.subr.bf16.mxu0 %v1572
        %1614 = vmatpush1.bf16.msra.mxu0 %v1571
        %1615 = vmatprep.subr.bf16.mxu0 %v1570
        %1616 = vmatpush1.bf16.msra.mxu0 %v1569
        %1617 = vmatprep.subr.bf16.mxu0 %v1568
        %1618 = vmatpush1.bf16.msra.mxu0 %v1567
        %1619 = vmatprep.subr.bf16.mxu0 %v1566
        %1620 = vmatpush1.bf16.msra.mxu0 %v1565
        %1621 = vmatprep.subr.bf16.mxu0 0
        %1622 = vmatpush2.bf16.msra.mxu0 0
        %1623 = vmatprep.subr.bf16.mxu0 0
        %1624 = vmatpush2.bf16.msra.mxu0 0
        %1625 = vmatprep.subr.bf16.mxu0 0
        %1626 = vmatpush2.bf16.msra.mxu0 0
        %1627 = vmatprep.subr.bf16.mxu0 0
        %1628 = vmatpush2.bf16.msra.mxu0 0
        %1629 = vmatprep.subr.bf16.mxu0 0
        %1630 = vmatpush2.bf16.msra.mxu0 0
        %1631 = vmatprep.subr.bf16.mxu0 0
        %1632 = vmatpush2.bf16.msra.mxu0 0
        %1633 = vmatprep.subr.bf16.mxu0 0
        %1634 = vmatpush2.bf16.msra.mxu0 0
        %1635 = vmatprep.subr.bf16.mxu0 0
        %1636 = vmatpush2.bf16.msra.mxu0 0
        %1637 = vmatprep.mubr.bf16.mxu0 0
        %1638 = vmatmul.mubr.bf16.gmra.mxu0 %v1594
        %v1639 = vpop.f32.mrf.mxu0
        %v1640 = vadd.f32 0.0, %v1639
        %v1641 = vpop.f32.mrf.mxu0
        %v1642 = vadd.f32 0.0, %v1641
        %v1643 = vpop.f32.mrf.mxu0
        %v1644 = vadd.f32 0.0, %v1643
        %v1645 = vpop.f32.mrf.mxu0
        %v1646 = vadd.f32 0.0, %v1645
        %1647 = vmatprep.mubr.bf16.mxu0 0
        %1648 = vmatmul.mubr.bf16.gmra.mxu0 %v1597
        %v1649 = vpop.f32.mrf.mxu0
        %v1650 = vadd.f32 0.0, %v1649
        %v1651 = vpop.f32.mrf.mxu0
        %v1652 = vadd.f32 0.0, %v1651
        %v1653 = vpop.f32.mrf.mxu0
        %v1654 = vadd.f32 0.0, %v1653
        %v1655 = vpop.f32.mrf.mxu0
        %v1656 = vadd.f32 0.0, %v1655
        %1657 = vmatprep.mubr.bf16.mxu0 0
        %1658 = vmatmul.mubr.bf16.gmra.mxu0 %v1600
        %v1659 = vpop.f32.mrf.mxu0
        %v1660 = vadd.f32 0.0, %v1659
        %v1661 = vpop.f32.mrf.mxu0
        %v1662 = vadd.f32 0.0, %v1661
        %v1663 = vpop.f32.mrf.mxu0
        %v1664 = vadd.f32 0.0, %v1663
        %v1665 = vpop.f32.mrf.mxu0
        %v1666 = vadd.f32 0.0, %v1665
        %1667 = vmatprep.mubr.bf16.mxu0 0
        %1668 = vmatmul.mubr.bf16.gmra.mxu0 %v1603
        %v1669 = vpop.f32.mrf.mxu0
        %v1670 = vadd.f32 0.0, %v1669
        %v1671 = vpop.f32.mrf.mxu0
        %v1672 = vadd.f32 0.0, %v1671
        %v1673 = vpop.f32.mrf.mxu0
        %v1674 = vadd.f32 0.0, %v1673
        %v1675 = vpop.f32.mrf.mxu0
        %v1676 = vadd.f32 0.0, %v1675
        %1677 = vdwg.mxu0
        %v1678 = vadd.f32 %v1467, %v1640
        %v1679 = vadd.f32 %v1468, %v1642
        %v1680 = vadd.f32 %v1469, %v1644
        %v1681 = vadd.f32 %v1470, %v1646
        %v1682 = vadd.f32 %v1471, %v1650
        %v1683 = vadd.f32 %v1472, %v1652
        %v1684 = vadd.f32 %v1473, %v1654
        %v1685 = vadd.f32 %v1474, %v1656
        %v1686 = vadd.f32 %v1475, %v1660
        %v1687 = vadd.f32 %v1476, %v1662
        %v1688 = vadd.f32 %v1477, %v1664
        %v1689 = vadd.f32 %v1478, %v1666
        %v1690 = vadd.f32 %v1479, %v1670
        %v1691 = vadd.f32 %v1480, %v1672
        %v1692 = vadd.f32 %v1481, %v1674
        %v1693 = vadd.f32 %v1482, %v1676
        %1694 = vrot.lane.b32.xlu0 %v300, 112
        %v1695 = vpop.permute.xlu0 %1694
        %1696 = vrot.lane.b32.xlu0 %v302, 112
        %v1697 = vpop.permute.xlu0 %1696
        %1698 = vrot.lane.b32.xlu0 %v304, 112
        %v1699 = vpop.permute.xlu0 %1698
        %1700 = vrot.lane.b32.xlu0 %v306, 112
        %v1701 = vpop.permute.xlu0 %1700
        %1702 = vrot.lane.b32.xlu0 %v308, 112
        %v1703 = vpop.permute.xlu0 %1702
        %1704 = vrot.lane.b32.xlu0 %v310, 112
        %v1705 = vpop.permute.xlu0 %1704
        %1706 = vrot.lane.b32.xlu0 %v312, 112
        %v1707 = vpop.permute.xlu0 %1706
        %1708 = vrot.lane.b32.xlu0 %v314, 112
        %v1709 = vpop.permute.xlu0 %1708
        %1710 = vrot.lane.b32.xlu0 %v301, 112
        %v1711 = vpop.permute.xlu0 %1710
        %1712 = vrot.lane.b32.xlu0 %v303, 112
        %v1713 = vpop.permute.xlu0 %1712
        %1714 = vrot.lane.b32.xlu0 %v305, 112
        %v1715 = vpop.permute.xlu0 %1714
        %1716 = vrot.lane.b32.xlu0 %v307, 112
        %v1717 = vpop.permute.xlu0 %1716
        %1718 = vrot.lane.b32.xlu0 %v309, 112
        %v1719 = vpop.permute.xlu0 %1718
        %1720 = vrot.lane.b32.xlu0 %v311, 112
        %v1721 = vpop.permute.xlu0 %1720
        %1722 = vrot.lane.b32.xlu0 %v313, 112
        %v1723 = vpop.permute.xlu0 %1722
        %1724 = vrot.lane.b32.xlu0 %v315, 112
        %v1725 = vpop.permute.xlu0 %1724
        %vm1726 = vcmp.lt.s32.totalorder %v353, 112
        %v1727 = vsel %vm1726, %v1695, %v1711
        %v1728 = vsel %vm1726, %v1697, %v1713
        %v1729 = vsel %vm1726, %v1699, %v1715
        %v1730 = vsel %vm1726, %v1701, %v1717
        %v1731 = vsel %vm1726, %v1703, %v1719
        %v1732 = vsel %vm1726, %v1705, %v1721
        %v1733 = vsel %vm1726, %v1707, %v1723
        %v1734 = vsel %vm1726, %v1709, %v1725
        %v1735 = vsel %vm1726, %v1711, %v1695
        %v1736 = vsel %vm1726, %v1713, %v1697
        %v1737 = vsel %vm1726, %v1715, %v1699
        %v1738 = vsel %vm1726, %v1717, %v1701
        %v1739 = vsel %vm1726, %v1719, %v1703
        %v1740 = vsel %vm1726, %v1721, %v1705
        %v1741 = vsel %vm1726, %v1723, %v1707
        %v1742 = vsel %vm1726, %v1725, %v1709
        %v1743 = vlaneseq
        %v1744 = vshrl.u32 %v1743, 7
        %v1745 = vsub.s32 7, %v1744
        %v1746 = vrot.slane %v316, %v1745
        %v1747 = vlaneseq
        %v1748 = vshrl.u32 %v1747, 7
        %v1749 = vsub.s32 7, %v1748
        %v1750 = vrot.slane %v317, %v1749
        %v1751 = vmul.f32 %v1727, %v1746
        %v1752 = vmul.f32 %v1735, %v1750
        %v1753 = vmul.f32 %v1728, %v1746
        %v1754 = vmul.f32 %v1736, %v1750
        %v1755 = vmul.f32 %v1729, %v1746
        %v1756 = vmul.f32 %v1737, %v1750
        %v1757 = vmul.f32 %v1730, %v1746
        %v1758 = vmul.f32 %v1738, %v1750
        %v1759 = vmul.f32 %v1731, %v1746
        %v1760 = vmul.f32 %v1739, %v1750
        %v1761 = vmul.f32 %v1732, %v1746
        %v1762 = vmul.f32 %v1740, %v1750
        %v1763 = vmul.f32 %v1733, %v1746
        %v1764 = vmul.f32 %v1741, %v1750
        %v1765 = vmul.f32 %v1734, %v1746
        %v1766 = vmul.f32 %v1742, %v1750
        %s1767 = scalar_lea.vmem [#allocation5], 224
        %v1768 = vld [vmem:[%s1767] sm:$0xf]
        %v1769 = vld [vmem:[%s1767 + $0x4] sm:$0xf]
        %v1770 = vld [vmem:[%s1767 + $0x8] sm:$0xf]
        %v1771 = vld [vmem:[%s1767 + $0xc] sm:$0xf]
        %v1772 = vld [vmem:[%s1767 + $0x10] sm:$0xf]
        %v1773 = vld [vmem:[%s1767 + $0x14] sm:$0xf]
        %v1774 = vld [vmem:[%s1767 + $0x18] sm:$0xf]
        %v1775 = vld [vmem:[%s1767 + $0x1c] sm:$0xf]
        %v1776 = vpack.c.bf16 %v1753, %v1751
        %v1777 = vpack.c.bf16 %v1754, %v1752
        %v1778 = vpack.c.bf16 %v1757, %v1755
        %v1779 = vpack.c.bf16 %v1758, %v1756
        %v1780 = vpack.c.bf16 %v1761, %v1759
        %v1781 = vpack.c.bf16 %v1762, %v1760
        %v1782 = vpack.c.bf16 %v1765, %v1763
        %v1783 = vpack.c.bf16 %v1766, %v1764
        %v1792 = vunpack.c.l.b16 %v1768
        %v1793 = vunpack.c.l.b16 %v1769
        %v1794 = vunpack.c.l.b16 %v1770
        %v1795 = vunpack.c.l.b16 %v1771
        %v1796 = vunpack.c.l.b16 %v1772
        %v1797 = vunpack.c.l.b16 %v1773
        %v1798 = vunpack.c.l.b16 %v1774
        %v1799 = vunpack.c.l.b16 %v1775
        %v1800 = vpack.c.b16 %v1793, %v1792
        %v1801 = vpack.c.b16 %v1795, %v1794
        %v1802 = vpack.c.b16 %v1797, %v1796
        %v1803 = vpack.c.b16 %v1799, %v1798
        %v1805 = vsel %vm521, %v1800, 0
        %v1808 = vsel %vm521, %v1801, 0
        %v1811 = vsel %vm521, %v1802, 0
        %v1814 = vsel %vm521, %v1803, 0
        %1816 = vmatprep.subr.bf16.mxu0 0
        %1817 = vmatpush1.bf16.msra.mxu0 0
        %1818 = vmatprep.subr.bf16.mxu0 0
        %1819 = vmatpush1.bf16.msra.mxu0 0
        %1820 = vmatprep.subr.bf16.mxu0 0
        %1821 = vmatpush1.bf16.msra.mxu0 0
        %1822 = vmatprep.subr.bf16.mxu0 0
        %1823 = vmatpush1.bf16.msra.mxu0 0
        %1824 = vmatprep.subr.bf16.mxu0 %v1783
        %1825 = vmatpush1.bf16.msra.mxu0 %v1782
        %1826 = vmatprep.subr.bf16.mxu0 %v1781
        %1827 = vmatpush1.bf16.msra.mxu0 %v1780
        %1828 = vmatprep.subr.bf16.mxu0 %v1779
        %1829 = vmatpush1.bf16.msra.mxu0 %v1778
        %1830 = vmatprep.subr.bf16.mxu0 %v1777
        %1831 = vmatpush1.bf16.msra.mxu0 %v1776
        %1832 = vmatprep.subr.bf16.mxu0 0
        %1833 = vmatpush2.bf16.msra.mxu0 0
        %1834 = vmatprep.subr.bf16.mxu0 0
        %1835 = vmatpush2.bf16.msra.mxu0 0
        %1836 = vmatprep.subr.bf16.mxu0 0
        %1837 = vmatpush2.bf16.msra.mxu0 0
        %1838 = vmatprep.subr.bf16.mxu0 0
        %1839 = vmatpush2.bf16.msra.mxu0 0
        %1840 = vmatprep.subr.bf16.mxu0 0
        %1841 = vmatpush2.bf16.msra.mxu0 0
        %1842 = vmatprep.subr.bf16.mxu0 0
        %1843 = vmatpush2.bf16.msra.mxu0 0
        %1844 = vmatprep.subr.bf16.mxu0 0
        %1845 = vmatpush2.bf16.msra.mxu0 0
        %1846 = vmatprep.subr.bf16.mxu0 0
        %1847 = vmatpush2.bf16.msra.mxu0 0
        %1848 = vmatprep.mubr.bf16.mxu0 0
        %1849 = vmatmul.mubr.bf16.gmra.mxu0 %v1805
        %v1850 = vpop.f32.mrf.mxu0
        %v1851 = vadd.f32 0.0, %v1850
        %v1852 = vpop.f32.mrf.mxu0
        %v1853 = vadd.f32 0.0, %v1852
        %v1854 = vpop.f32.mrf.mxu0
        %v1855 = vadd.f32 0.0, %v1854
        %v1856 = vpop.f32.mrf.mxu0
        %v1857 = vadd.f32 0.0, %v1856
        %1858 = vmatprep.mubr.bf16.mxu0 0
        %1859 = vmatmul.mubr.bf16.gmra.mxu0 %v1808
        %v1860 = vpop.f32.mrf.mxu0
        %v1861 = vadd.f32 0.0, %v1860
        %v1862 = vpop.f32.mrf.mxu0
        %v1863 = vadd.f32 0.0, %v1862
        %v1864 = vpop.f32.mrf.mxu0
        %v1865 = vadd.f32 0.0, %v1864
        %v1866 = vpop.f32.mrf.mxu0
        %v1867 = vadd.f32 0.0, %v1866
        %1868 = vmatprep.mubr.bf16.mxu0 0
        %1869 = vmatmul.mubr.bf16.gmra.mxu0 %v1811
        %v1870 = vpop.f32.mrf.mxu0
        %v1871 = vadd.f32 0.0, %v1870
        %v1872 = vpop.f32.mrf.mxu0
        %v1873 = vadd.f32 0.0, %v1872
        %v1874 = vpop.f32.mrf.mxu0
        %v1875 = vadd.f32 0.0, %v1874
        %v1876 = vpop.f32.mrf.mxu0
        %v1877 = vadd.f32 0.0, %v1876
        %1878 = vmatprep.mubr.bf16.mxu0 0
        %1879 = vmatmul.mubr.bf16.gmra.mxu0 %v1814
        %v1880 = vpop.f32.mrf.mxu0
        %v1881 = vadd.f32 0.0, %v1880
        %v1882 = vpop.f32.mrf.mxu0
        %v1883 = vadd.f32 0.0, %v1882
        %v1884 = vpop.f32.mrf.mxu0
        %v1885 = vadd.f32 0.0, %v1884
        %v1886 = vpop.f32.mrf.mxu0
        %v1887 = vadd.f32 0.0, %v1886
        %1888 = vdwg.mxu0
        %v1889 = vadd.f32 %v1678, %v1851
        %v1890 = vadd.f32 %v1679, %v1853
        %v1891 = vadd.f32 %v1680, %v1855
        %v1892 = vadd.f32 %v1681, %v1857
        %v1893 = vadd.f32 %v1682, %v1861
        %v1894 = vadd.f32 %v1683, %v1863
        %v1895 = vadd.f32 %v1684, %v1865
        %v1896 = vadd.f32 %v1685, %v1867
        %v1897 = vadd.f32 %v1686, %v1871
        %v1898 = vadd.f32 %v1687, %v1873
        %v1899 = vadd.f32 %v1688, %v1875
        %v1900 = vadd.f32 %v1689, %v1877
        %v1901 = vadd.f32 %v1690, %v1881
        %v1902 = vadd.f32 %v1691, %v1883
        %v1903 = vadd.f32 %v1692, %v1885
        %v1904 = vadd.f32 %v1693, %v1887
        %1905 = vrot.lane.b32.xlu0 %v300, 111
        %v1906 = vpop.permute.xlu0 %1905
        %1907 = vrot.lane.b32.xlu0 %v302, 111
        %v1908 = vpop.permute.xlu0 %1907
        %1909 = vrot.lane.b32.xlu0 %v304, 111
        %v1910 = vpop.permute.xlu0 %1909
        %1911 = vrot.lane.b32.xlu0 %v306, 111
        %v1912 = vpop.permute.xlu0 %1911
        %1913 = vrot.lane.b32.xlu0 %v308, 111
        %v1914 = vpop.permute.xlu0 %1913
        %1915 = vrot.lane.b32.xlu0 %v310, 111
        %v1916 = vpop.permute.xlu0 %1915
        %1917 = vrot.lane.b32.xlu0 %v312, 111
        %v1918 = vpop.permute.xlu0 %1917
        %1919 = vrot.lane.b32.xlu0 %v314, 111
        %v1920 = vpop.permute.xlu0 %1919
        %1921 = vrot.lane.b32.xlu0 %v301, 111
        %v1922 = vpop.permute.xlu0 %1921
        %1923 = vrot.lane.b32.xlu0 %v303, 111
        %v1924 = vpop.permute.xlu0 %1923
        %1925 = vrot.lane.b32.xlu0 %v305, 111
        %v1926 = vpop.permute.xlu0 %1925
        %1927 = vrot.lane.b32.xlu0 %v307, 111
        %v1928 = vpop.permute.xlu0 %1927
        %1929 = vrot.lane.b32.xlu0 %v309, 111
        %v1930 = vpop.permute.xlu0 %1929
        %1931 = vrot.lane.b32.xlu0 %v311, 111
        %v1932 = vpop.permute.xlu0 %1931
        %1933 = vrot.lane.b32.xlu0 %v313, 111
        %v1934 = vpop.permute.xlu0 %1933
        %1935 = vrot.lane.b32.xlu0 %v315, 111
        %v1936 = vpop.permute.xlu0 %1935
        %vm1937 = vcmp.lt.s32.totalorder %v353, 111
        %v1938 = vsel %vm1937, %v1906, %v1922
        %v1939 = vsel %vm1937, %v1908, %v1924
        %v1940 = vsel %vm1937, %v1910, %v1926
        %v1941 = vsel %vm1937, %v1912, %v1928
        %v1942 = vsel %vm1937, %v1914, %v1930
        %v1943 = vsel %vm1937, %v1916, %v1932
        %v1944 = vsel %vm1937, %v1918, %v1934
        %v1945 = vsel %vm1937, %v1920, %v1936
        %v1946 = vsel %vm1937, %v1922, %v1906
        %v1947 = vsel %vm1937, %v1924, %v1908
        %v1948 = vsel %vm1937, %v1926, %v1910
        %v1949 = vsel %vm1937, %v1928, %v1912
        %v1950 = vsel %vm1937, %v1930, %v1914
        %v1951 = vsel %vm1937, %v1932, %v1916
        %v1952 = vsel %vm1937, %v1934, %v1918
        %v1953 = vsel %vm1937, %v1936, %v1920
        %v1954 = vlaneseq
        %v1955 = vshrl.u32 %v1954, 7
        %v1956 = vsub.s32 0, %v1955
        %v1957 = vrot.slane %v318, %v1956
        %v1958 = vlaneseq
        %v1959 = vshrl.u32 %v1958, 7
        %v1960 = vsub.s32 0, %v1959
        %v1961 = vrot.slane %v319, %v1960
        %v1962 = vmul.f32 %v1938, %v1957
        %v1963 = vmul.f32 %v1946, %v1961
        %v1964 = vmul.f32 %v1939, %v1957
        %v1965 = vmul.f32 %v1947, %v1961
        %v1966 = vmul.f32 %v1940, %v1957
        %v1967 = vmul.f32 %v1948, %v1961
        %v1968 = vmul.f32 %v1941, %v1957
        %v1969 = vmul.f32 %v1949, %v1961
        %v1970 = vmul.f32 %v1942, %v1957
        %v1971 = vmul.f32 %v1950, %v1961
        %v1972 = vmul.f32 %v1943, %v1957
        %v1973 = vmul.f32 %v1951, %v1961
        %v1974 = vmul.f32 %v1944, %v1957
        %v1975 = vmul.f32 %v1952, %v1961
        %v1976 = vmul.f32 %v1945, %v1957
        %v1977 = vmul.f32 %v1953, %v1961
        %s1978 = scalar_lea.vmem [#allocation5], 256
        %v1979 = vld [vmem:[%s1978] sm:$0xf]
        %v1980 = vld [vmem:[%s1978 + $0x4] sm:$0xf]
        %v1981 = vld [vmem:[%s1978 + $0x8] sm:$0xf]
        %v1982 = vld [vmem:[%s1978 + $0xc] sm:$0xf]
        %v1983 = vld [vmem:[%s1978 + $0x10] sm:$0xf]
        %v1984 = vld [vmem:[%s1978 + $0x14] sm:$0xf]
        %v1985 = vld [vmem:[%s1978 + $0x18] sm:$0xf]
        %v1986 = vld [vmem:[%s1978 + $0x1c] sm:$0xf]
        %v1987 = vpack.c.bf16 %v1964, %v1962
        %v1988 = vpack.c.bf16 %v1965, %v1963
        %v1989 = vpack.c.bf16 %v1968, %v1966
        %v1990 = vpack.c.bf16 %v1969, %v1967
        %v1991 = vpack.c.bf16 %v1972, %v1970
        %v1992 = vpack.c.bf16 %v1973, %v1971
        %v1993 = vpack.c.bf16 %v1976, %v1974
        %v1994 = vpack.c.bf16 %v1977, %v1975
        %v2003 = vunpack.c.l.b16 %v1979
        %v2004 = vunpack.c.l.b16 %v1980
        %v2005 = vunpack.c.l.b16 %v1981
        %v2006 = vunpack.c.l.b16 %v1982
        %v2007 = vunpack.c.l.b16 %v1983
        %v2008 = vunpack.c.l.b16 %v1984
        %v2009 = vunpack.c.l.b16 %v1985
        %v2010 = vunpack.c.l.b16 %v1986
        %v2011 = vpack.c.b16 %v2004, %v2003
        %v2012 = vpack.c.b16 %v2006, %v2005
        %v2013 = vpack.c.b16 %v2008, %v2007
        %v2014 = vpack.c.b16 %v2010, %v2009
        %v2016 = vsel %vm521, %v2011, 0
        %v2019 = vsel %vm521, %v2012, 0
        %v2022 = vsel %vm521, %v2013, 0
        %v2025 = vsel %vm521, %v2014, 0
        %2027 = vmatprep.subr.bf16.mxu0 0
        %2028 = vmatpush1.bf16.msra.mxu0 0
        %2029 = vmatprep.subr.bf16.mxu0 0
        %2030 = vmatpush1.bf16.msra.mxu0 0
        %2031 = vmatprep.subr.bf16.mxu0 0
        %2032 = vmatpush1.bf16.msra.mxu0 0
        %2033 = vmatprep.subr.bf16.mxu0 0
        %2034 = vmatpush1.bf16.msra.mxu0 0
        %2035 = vmatprep.subr.bf16.mxu0 %v1994
        %2036 = vmatpush1.bf16.msra.mxu0 %v1993
        %2037 = vmatprep.subr.bf16.mxu0 %v1992
        %2038 = vmatpush1.bf16.msra.mxu0 %v1991
        %2039 = vmatprep.subr.bf16.mxu0 %v1990
        %2040 = vmatpush1.bf16.msra.mxu0 %v1989
        %2041 = vmatprep.subr.bf16.mxu0 %v1988
        %2042 = vmatpush1.bf16.msra.mxu0 %v1987
        %2043 = vmatprep.subr.bf16.mxu0 0
        %2044 = vmatpush2.bf16.msra.mxu0 0
        %2045 = vmatprep.subr.bf16.mxu0 0
        %2046 = vmatpush2.bf16.msra.mxu0 0
        %2047 = vmatprep.subr.bf16.mxu0 0
        %2048 = vmatpush2.bf16.msra.mxu0 0
        %2049 = vmatprep.subr.bf16.mxu0 0
        %2050 = vmatpush2.bf16.msra.mxu0 0
        %2051 = vmatprep.subr.bf16.mxu0 0
        %2052 = vmatpush2.bf16.msra.mxu0 0
        %2053 = vmatprep.subr.bf16.mxu0 0
        %2054 = vmatpush2.bf16.msra.mxu0 0
        %2055 = vmatprep.subr.bf16.mxu0 0
        %2056 = vmatpush2.bf16.msra.mxu0 0
        %2057 = vmatprep.subr.bf16.mxu0 0
        %2058 = vmatpush2.bf16.msra.mxu0 0
        %2059 = vmatprep.mubr.bf16.mxu0 0
        %2060 = vmatmul.mubr.bf16.gmra.mxu0 %v2016
        %v2061 = vpop.f32.mrf.mxu0
        %v2062 = vadd.f32 0.0, %v2061
        %v2063 = vpop.f32.mrf.mxu0
        %v2064 = vadd.f32 0.0, %v2063
        %v2065 = vpop.f32.mrf.mxu0
        %v2066 = vadd.f32 0.0, %v2065
        %v2067 = vpop.f32.mrf.mxu0
        %v2068 = vadd.f32 0.0, %v2067
        %2069 = vmatprep.mubr.bf16.mxu0 0
        %2070 = vmatmul.mubr.bf16.gmra.mxu0 %v2019
        %v2071 = vpop.f32.mrf.mxu0
        %v2072 = vadd.f32 0.0, %v2071
        %v2073 = vpop.f32.mrf.mxu0
        %v2074 = vadd.f32 0.0, %v2073
        %v2075 = vpop.f32.mrf.mxu0
        %v2076 = vadd.f32 0.0, %v2075
        %v2077 = vpop.f32.mrf.mxu0
        %v2078 = vadd.f32 0.0, %v2077
        %2079 = vmatprep.mubr.bf16.mxu0 0
        %2080 = vmatmul.mubr.bf16.gmra.mxu0 %v2022
        %v2081 = vpop.f32.mrf.mxu0
        %v2082 = vadd.f32 0.0, %v2081
        %v2083 = vpop.f32.mrf.mxu0
        %v2084 = vadd.f32 0.0, %v2083
        %v2085 = vpop.f32.mrf.mxu0
        %v2086 = vadd.f32 0.0, %v2085
        %v2087 = vpop.f32.mrf.mxu0
        %v2088 = vadd.f32 0.0, %v2087
        %2089 = vmatprep.mubr.bf16.mxu0 0
        %2090 = vmatmul.mubr.bf16.gmra.mxu0 %v2025
        %v2091 = vpop.f32.mrf.mxu0
        %v2092 = vadd.f32 0.0, %v2091
        %v2093 = vpop.f32.mrf.mxu0
        %v2094 = vadd.f32 0.0, %v2093
        %v2095 = vpop.f32.mrf.mxu0
        %v2096 = vadd.f32 0.0, %v2095
        %v2097 = vpop.f32.mrf.mxu0
        %v2098 = vadd.f32 0.0, %v2097
        %2099 = vdwg.mxu0
        %v2100 = vadd.f32 %v1889, %v2062
        %v2101 = vadd.f32 %v1890, %v2064
        %v2102 = vadd.f32 %v1891, %v2066
        %v2103 = vadd.f32 %v1892, %v2068
        %v2104 = vadd.f32 %v1893, %v2072
        %v2105 = vadd.f32 %v1894, %v2074
        %v2106 = vadd.f32 %v1895, %v2076
        %v2107 = vadd.f32 %v1896, %v2078
        %v2108 = vadd.f32 %v1897, %v2082
        %v2109 = vadd.f32 %v1898, %v2084
        %v2110 = vadd.f32 %v1899, %v2086
        %v2111 = vadd.f32 %v1900, %v2088
        %v2112 = vadd.f32 %v1901, %v2092
        %v2113 = vadd.f32 %v1902, %v2094
        %v2114 = vadd.f32 %v1903, %v2096
        %v2115 = vadd.f32 %v1904, %v2098
        %v2116 = vld [vmem:[%s2] sm:$0xff]
        %v2117 = vld [vmem:[%s2 + $0x8] sm:$0xff]
        %v2118 = vld [vmem:[%s2 + $0x10] sm:$0xff]
        %v2119 = vld [vmem:[%s2 + $0x18] sm:$0xff]
        %v2120 = vld [vmem:[%s2 + $0x20] sm:$0xff]
        %v2121 = vld [vmem:[%s2 + $0x28] sm:$0xff]
        %v2122 = vld [vmem:[%s2 + $0x30] sm:$0xff]
        %v2123 = vld [vmem:[%s2 + $0x38] sm:$0xff]
        %2125 = vset.pattern.permute.xlu0 0
        %2126 = vperm.xlu0 %2125, %v2116
        %v2127 = vpop.permute.xlu0 %2126
        %2130 = vset.pattern.permute.xlu0 0
        %2131 = vperm.xlu0 %2130, %v2117
        %v2132 = vpop.permute.xlu0 %2131
        %2135 = vset.pattern.permute.xlu0 0
        %2136 = vperm.xlu0 %2135, %v2118
        %v2137 = vpop.permute.xlu0 %2136
        %2140 = vset.pattern.permute.xlu0 0
        %2141 = vperm.xlu0 %2140, %v2119
        %v2142 = vpop.permute.xlu0 %2141
        %2145 = vset.pattern.permute.xlu0 0
        %2146 = vperm.xlu0 %2145, %v2120
        %v2147 = vpop.permute.xlu0 %2146
        %2150 = vset.pattern.permute.xlu0 0
        %2151 = vperm.xlu0 %2150, %v2121
        %v2152 = vpop.permute.xlu0 %2151
        %2155 = vset.pattern.permute.xlu0 0
        %2156 = vperm.xlu0 %2155, %v2122
        %v2157 = vpop.permute.xlu0 %2156
        %2160 = vset.pattern.permute.xlu0 0
        %2161 = vperm.xlu0 %2160, %v2123
        %v2162 = vpop.permute.xlu0 %2161
        %v2164 = vadd.f32 %v2100, %v2127
        %v2165 = vadd.f32 %v2101, %v2127
        %v2166 = vadd.f32 %v2102, %v2132
        %v2167 = vadd.f32 %v2103, %v2132
        %v2168 = vadd.f32 %v2104, %v2137
        %v2169 = vadd.f32 %v2105, %v2137
        %v2170 = vadd.f32 %v2106, %v2142
        %v2171 = vadd.f32 %v2107, %v2142
        %v2172 = vadd.f32 %v2108, %v2147
        %v2173 = vadd.f32 %v2109, %v2147
        %v2174 = vadd.f32 %v2110, %v2152
        %v2175 = vadd.f32 %v2111, %v2152
        %v2176 = vadd.f32 %v2112, %v2157
        %v2177 = vadd.f32 %v2113, %v2157
        %v2178 = vadd.f32 %v2114, %v2162
        %v2179 = vadd.f32 %v2115, %v2162
        %v2180 = vmax.f32 %v2164, 0.0
        %v2181 = vmax.f32 %v2165, 0.0
        %v2182 = vmax.f32 %v2166, 0.0
        %v2183 = vmax.f32 %v2167, 0.0
        %v2184 = vmax.f32 %v2168, 0.0
        %v2185 = vmax.f32 %v2169, 0.0
        %v2186 = vmax.f32 %v2170, 0.0
        %v2187 = vmax.f32 %v2171, 0.0
        %v2188 = vmax.f32 %v2172, 0.0
        %v2189 = vmax.f32 %v2173, 0.0
        %v2190 = vmax.f32 %v2174, 0.0
        %v2191 = vmax.f32 %v2175, 0.0
        %v2192 = vmax.f32 %v2176, 0.0
        %v2193 = vmax.f32 %v2177, 0.0
        %v2194 = vmax.f32 %v2178, 0.0
        %v2195 = vmax.f32 %v2179, 0.0
        %2196 = vrot.lane.b32.xlu0 %v2180, 17
        %v2197 = vpop.permute.xlu0 %2196
        %2198 = vrot.lane.b32.xlu0 %v2182, 17
        %v2199 = vpop.permute.xlu0 %2198
        %2200 = vrot.lane.b32.xlu0 %v2184, 17
        %v2201 = vpop.permute.xlu0 %2200
        %2202 = vrot.lane.b32.xlu0 %v2186, 17
        %v2203 = vpop.permute.xlu0 %2202
        %2204 = vrot.lane.b32.xlu0 %v2188, 17
        %v2205 = vpop.permute.xlu0 %2204
        %2206 = vrot.lane.b32.xlu0 %v2190, 17
        %v2207 = vpop.permute.xlu0 %2206
        %2208 = vrot.lane.b32.xlu0 %v2192, 17
        %v2209 = vpop.permute.xlu0 %2208
        %2210 = vrot.lane.b32.xlu0 %v2194, 17
        %v2211 = vpop.permute.xlu0 %2210
        %2212 = vrot.lane.b32.xlu0 %v2181, 17
        %v2213 = vpop.permute.xlu0 %2212
        %2214 = vrot.lane.b32.xlu0 %v2183, 17
        %v2215 = vpop.permute.xlu0 %2214
        %2216 = vrot.lane.b32.xlu0 %v2185, 17
        %v2217 = vpop.permute.xlu0 %2216
        %2218 = vrot.lane.b32.xlu0 %v2187, 17
        %v2219 = vpop.permute.xlu0 %2218
        %2220 = vrot.lane.b32.xlu0 %v2189, 17
        %v2221 = vpop.permute.xlu0 %2220
        %2222 = vrot.lane.b32.xlu0 %v2191, 17
        %v2223 = vpop.permute.xlu0 %2222
        %2224 = vrot.lane.b32.xlu0 %v2193, 17
        %v2225 = vpop.permute.xlu0 %2224
        %2226 = vrot.lane.b32.xlu0 %v2195, 17
        %v2227 = vpop.permute.xlu0 %2226
        %v2228 = vsel %vm354, %v2197, %v2213
        %v2229 = vsel %vm354, %v2199, %v2215
        %v2230 = vsel %vm354, %v2201, %v2217
        %v2231 = vsel %vm354, %v2203, %v2219
        %v2232 = vsel %vm354, %v2205, %v2221
        %v2233 = vsel %vm354, %v2207, %v2223
        %v2234 = vsel %vm354, %v2209, %v2225
        %v2235 = vsel %vm354, %v2211, %v2227
        %v2236 = vsel %vm354, %v2213, %v2197
        %v2237 = vsel %vm354, %v2215, %v2199
        %v2238 = vsel %vm354, %v2217, %v2201
        %v2239 = vsel %vm354, %v2219, %v2203
        %v2240 = vsel %vm354, %v2221, %v2205
        %v2241 = vsel %vm354, %v2223, %v2207
        %v2242 = vsel %vm354, %v2225, %v2209
        %v2243 = vsel %vm354, %v2227, %v2211
        %v2244 = vmul.f32 %v2236, %v374
        %v2245 = vmul.f32 %v2228, %v378
        %v2246 = vmul.f32 %v2237, %v374
        %v2247 = vmul.f32 %v2229, %v378
        %v2248 = vmul.f32 %v2238, %v374
        %v2249 = vmul.f32 %v2230, %v378
        %v2250 = vmul.f32 %v2239, %v374
        %v2251 = vmul.f32 %v2231, %v378
        %v2252 = vmul.f32 %v2240, %v374
        %v2253 = vmul.f32 %v2232, %v378
        %v2254 = vmul.f32 %v2241, %v374
        %v2255 = vmul.f32 %v2233, %v378
        %v2256 = vmul.f32 %v2242, %v374
        %v2257 = vmul.f32 %v2234, %v378
        %v2258 = vmul.f32 %v2243, %v374
        %v2259 = vmul.f32 %v2235, %v378
        %v2260 = vld [vmem:[#allocation7] sm:$0xf]
        %v2261 = vld [vmem:[#allocation7 + $0x4] sm:$0xf]
        %v2262 = vld [vmem:[#allocation7 + $0x8] sm:$0xf]
        %v2263 = vld [vmem:[#allocation7 + $0xc] sm:$0xf]
        %v2264 = vld [vmem:[#allocation7 + $0x10] sm:$0xf]
        %v2265 = vld [vmem:[#allocation7 + $0x14] sm:$0xf]
        %v2266 = vld [vmem:[#allocation7 + $0x18] sm:$0xf]
        %v2267 = vld [vmem:[#allocation7 + $0x1c] sm:$0xf]
        %v2268 = vpack.c.bf16 %v2246, %v2244
        %v2269 = vpack.c.bf16 %v2247, %v2245
        %v2270 = vpack.c.bf16 %v2250, %v2248
        %v2271 = vpack.c.bf16 %v2251, %v2249
        %v2272 = vpack.c.bf16 %v2254, %v2252
        %v2273 = vpack.c.bf16 %v2255, %v2253
        %v2274 = vpack.c.bf16 %v2258, %v2256
        %v2275 = vpack.c.bf16 %v2259, %v2257
        %2276 = vrot.lane.b32.xlu0 %v2180, 16
        %v2277 = vpop.permute.xlu0 %2276
        %2278 = vrot.lane.b32.xlu0 %v2182, 16
        %v2279 = vpop.permute.xlu0 %2278
        %2280 = vrot.lane.b32.xlu0 %v2184, 16
        %v2281 = vpop.permute.xlu0 %2280
        %2282 = vrot.lane.b32.xlu0 %v2186, 16
        %v2283 = vpop.permute.xlu0 %2282
        %2284 = vrot.lane.b32.xlu0 %v2188, 16
        %v2285 = vpop.permute.xlu0 %2284
        %2286 = vrot.lane.b32.xlu0 %v2190, 16
        %v2287 = vpop.permute.xlu0 %2286
        %2288 = vrot.lane.b32.xlu0 %v2192, 16
        %v2289 = vpop.permute.xlu0 %2288
        %2290 = vrot.lane.b32.xlu0 %v2194, 16
        %v2291 = vpop.permute.xlu0 %2290
        %2292 = vrot.lane.b32.xlu0 %v2181, 16
        %v2293 = vpop.permute.xlu0 %2292
        %2294 = vrot.lane.b32.xlu0 %v2183, 16
        %v2295 = vpop.permute.xlu0 %2294
        %2296 = vrot.lane.b32.xlu0 %v2185, 16
        %v2297 = vpop.permute.xlu0 %2296
        %2298 = vrot.lane.b32.xlu0 %v2187, 16
        %v2299 = vpop.permute.xlu0 %2298
        %2300 = vrot.lane.b32.xlu0 %v2189, 16
        %v2301 = vpop.permute.xlu0 %2300
        %2302 = vrot.lane.b32.xlu0 %v2191, 16
        %v2303 = vpop.permute.xlu0 %2302
        %2304 = vrot.lane.b32.xlu0 %v2193, 16
        %v2305 = vpop.permute.xlu0 %2304
        %2306 = vrot.lane.b32.xlu0 %v2195, 16
        %v2307 = vpop.permute.xlu0 %2306
        %v2308 = vsel %vm443, %v2277, %v2293
        %v2309 = vsel %vm443, %v2279, %v2295
        %v2310 = vsel %vm443, %v2281, %v2297
        %v2311 = vsel %vm443, %v2283, %v2299
        %v2312 = vsel %vm443, %v2285, %v2301
        %v2313 = vsel %vm443, %v2287, %v2303
        %v2314 = vsel %vm443, %v2289, %v2305
        %v2315 = vsel %vm443, %v2291, %v2307
        %v2316 = vsel %vm443, %v2293, %v2277
        %v2317 = vsel %vm443, %v2295, %v2279
        %v2318 = vsel %vm443, %v2297, %v2281
        %v2319 = vsel %vm443, %v2299, %v2283
        %v2320 = vsel %vm443, %v2301, %v2285
        %v2321 = vsel %vm443, %v2303, %v2287
        %v2322 = vsel %vm443, %v2305, %v2289
        %v2323 = vsel %vm443, %v2307, %v2291
        %v2324 = vmul.f32 %v2316, %v463
        %v2325 = vmul.f32 %v2308, %v467
        %v2326 = vmul.f32 %v2317, %v463
        %v2327 = vmul.f32 %v2309, %v467
        %v2328 = vmul.f32 %v2318, %v463
        %v2329 = vmul.f32 %v2310, %v467
        %v2330 = vmul.f32 %v2319, %v463
        %v2331 = vmul.f32 %v2311, %v467
        %v2332 = vmul.f32 %v2320, %v463
        %v2333 = vmul.f32 %v2312, %v467
        %v2334 = vmul.f32 %v2321, %v463
        %v2335 = vmul.f32 %v2313, %v467
        %v2336 = vmul.f32 %v2322, %v463
        %v2337 = vmul.f32 %v2314, %v467
        %v2338 = vmul.f32 %v2323, %v463
        %v2339 = vmul.f32 %v2315, %v467
        %s2340 = scalar_lea.vmem [#allocation7], 32
        %v2341 = vld [vmem:[%s2340] sm:$0xf]
        %v2342 = vld [vmem:[%s2340 + $0x4] sm:$0xf]
        %v2343 = vld [vmem:[%s2340 + $0x8] sm:$0xf]
        %v2344 = vld [vmem:[%s2340 + $0xc] sm:$0xf]
        %v2345 = vld [vmem:[%s2340 + $0x10] sm:$0xf]
        %v2346 = vld [vmem:[%s2340 + $0x14] sm:$0xf]
        %v2347 = vld [vmem:[%s2340 + $0x18] sm:$0xf]
        %v2348 = vld [vmem:[%s2340 + $0x1c] sm:$0xf]
        %v2349 = vpack.c.bf16 %v2326, %v2324
        %v2350 = vpack.c.bf16 %v2327, %v2325
        %v2351 = vpack.c.bf16 %v2330, %v2328
        %v2352 = vpack.c.bf16 %v2331, %v2329
        %v2353 = vpack.c.bf16 %v2334, %v2332
        %v2354 = vpack.c.bf16 %v2335, %v2333
        %v2355 = vpack.c.bf16 %v2338, %v2336
        %v2356 = vpack.c.bf16 %v2339, %v2337
        %v2365 = vunpack.c.l.b16 %v2341
        %v2366 = vunpack.c.l.b16 %v2342
        %v2367 = vunpack.c.l.b16 %v2343
        %v2368 = vunpack.c.l.b16 %v2344
        %v2369 = vunpack.c.l.b16 %v2345
        %v2370 = vunpack.c.l.b16 %v2346
        %v2371 = vunpack.c.l.b16 %v2347
        %v2372 = vunpack.c.l.b16 %v2348
        %v2373 = vpack.c.b16 %v2366, %v2365
        %v2374 = vpack.c.b16 %v2368, %v2367
        %v2375 = vpack.c.b16 %v2370, %v2369
        %v2376 = vpack.c.b16 %v2372, %v2371
        %v2378 = vsel %vm521, %v2373, 0
        %v2381 = vsel %vm521, %v2374, 0
        %v2384 = vsel %vm521, %v2375, 0
        %v2387 = vsel %vm521, %v2376, 0
        %2389 = vmatprep.subr.bf16.mxu0 0
        %2390 = vmatpush1.bf16.msra.mxu0 0
        %2391 = vmatprep.subr.bf16.mxu0 0
        %2392 = vmatpush1.bf16.msra.mxu0 0
        %2393 = vmatprep.subr.bf16.mxu0 0
        %2394 = vmatpush1.bf16.msra.mxu0 0
        %2395 = vmatprep.subr.bf16.mxu0 0
        %2396 = vmatpush1.bf16.msra.mxu0 0
        %2397 = vmatprep.subr.bf16.mxu0 %v2356
        %2398 = vmatpush1.bf16.msra.mxu0 %v2355
        %2399 = vmatprep.subr.bf16.mxu0 %v2354
        %2400 = vmatpush1.bf16.msra.mxu0 %v2353
        %2401 = vmatprep.subr.bf16.mxu0 %v2352
        %2402 = vmatpush1.bf16.msra.mxu0 %v2351
        %2403 = vmatprep.subr.bf16.mxu0 %v2350
        %2404 = vmatpush1.bf16.msra.mxu0 %v2349
        %2405 = vmatprep.subr.bf16.mxu0 0
        %2406 = vmatpush2.bf16.msra.mxu0 0
        %2407 = vmatprep.subr.bf16.mxu0 0
        %2408 = vmatpush2.bf16.msra.mxu0 0
        %2409 = vmatprep.subr.bf16.mxu0 0
        %2410 = vmatpush2.bf16.msra.mxu0 0
        %2411 = vmatprep.subr.bf16.mxu0 0
        %2412 = vmatpush2.bf16.msra.mxu0 0
        %2413 = vmatprep.subr.bf16.mxu0 0
        %2414 = vmatpush2.bf16.msra.mxu0 0
        %2415 = vmatprep.subr.bf16.mxu0 0
        %2416 = vmatpush2.bf16.msra.mxu0 0
        %2417 = vmatprep.subr.bf16.mxu0 0
        %2418 = vmatpush2.bf16.msra.mxu0 0
        %2419 = vmatprep.subr.bf16.mxu0 0
        %2420 = vmatpush2.bf16.msra.mxu0 0
        %2421 = vmatprep.mubr.bf16.mxu0 0
        %2422 = vmatmul.mubr.bf16.gmra.mxu0 %v2378
        %v2423 = vpop.f32.mrf.mxu0
        %v2424 = vadd.f32 0.0, %v2423
        %v2425 = vpop.f32.mrf.mxu0
        %v2426 = vadd.f32 0.0, %v2425
        %v2427 = vpop.f32.mrf.mxu0
        %v2428 = vadd.f32 0.0, %v2427
        %v2429 = vpop.f32.mrf.mxu0
        %v2430 = vadd.f32 0.0, %v2429
        %2431 = vmatprep.mubr.bf16.mxu0 0
        %2432 = vmatmul.mubr.bf16.gmra.mxu0 %v2381
        %v2433 = vpop.f32.mrf.mxu0
        %v2434 = vadd.f32 0.0, %v2433
        %v2435 = vpop.f32.mrf.mxu0
        %v2436 = vadd.f32 0.0, %v2435
        %v2437 = vpop.f32.mrf.mxu0
        %v2438 = vadd.f32 0.0, %v2437
        %v2439 = vpop.f32.mrf.mxu0
        %v2440 = vadd.f32 0.0, %v2439
        %2441 = vmatprep.mubr.bf16.mxu0 0
        %2442 = vmatmul.mubr.bf16.gmra.mxu0 %v2384
        %v2443 = vpop.f32.mrf.mxu0
        %v2444 = vadd.f32 0.0, %v2443
        %v2445 = vpop.f32.mrf.mxu0
        %v2446 = vadd.f32 0.0, %v2445
        %v2447 = vpop.f32.mrf.mxu0
        %v2448 = vadd.f32 0.0, %v2447
        %v2449 = vpop.f32.mrf.mxu0
        %v2450 = vadd.f32 0.0, %v2449
        %2451 = vmatprep.mubr.bf16.mxu0 0
        %2452 = vmatmul.mubr.bf16.gmra.mxu0 %v2387
        %v2453 = vpop.f32.mrf.mxu0
        %v2454 = vadd.f32 0.0, %v2453
        %v2455 = vpop.f32.mrf.mxu0
        %v2456 = vadd.f32 0.0, %v2455
        %v2457 = vpop.f32.mrf.mxu0
        %v2458 = vadd.f32 0.0, %v2457
        %v2459 = vpop.f32.mrf.mxu0
        %v2460 = vadd.f32 0.0, %v2459
        %2461 = vdwg.mxu0
        %v2470 = vunpack.c.l.b16 %v2260
        %v2471 = vunpack.c.l.b16 %v2261
        %v2472 = vunpack.c.l.b16 %v2262
        %v2473 = vunpack.c.l.b16 %v2263
        %v2474 = vunpack.c.l.b16 %v2264
        %v2475 = vunpack.c.l.b16 %v2265
        %v2476 = vunpack.c.l.b16 %v2266
        %v2477 = vunpack.c.l.b16 %v2267
        %v2478 = vpack.c.b16 %v2471, %v2470
        %v2479 = vpack.c.b16 %v2473, %v2472
        %v2480 = vpack.c.b16 %v2475, %v2474
        %v2481 = vpack.c.b16 %v2477, %v2476
        %v2483 = vsel %vm521, %v2478, 0
        %v2486 = vsel %vm521, %v2479, 0
        %v2489 = vsel %vm521, %v2480, 0
        %v2492 = vsel %vm521, %v2481, 0
        %2494 = vmatprep.subr.bf16.mxu0 0
        %2495 = vmatpush1.bf16.msra.mxu0 0
        %2496 = vmatprep.subr.bf16.mxu0 0
        %2497 = vmatpush1.bf16.msra.mxu0 0
        %2498 = vmatprep.subr.bf16.mxu0 0
        %2499 = vmatpush1.bf16.msra.mxu0 0
        %2500 = vmatprep.subr.bf16.mxu0 0
        %2501 = vmatpush1.bf16.msra.mxu0 0
        %2502 = vmatprep.subr.bf16.mxu0 %v2275
        %2503 = vmatpush1.bf16.msra.mxu0 %v2274
        %2504 = vmatprep.subr.bf16.mxu0 %v2273
        %2505 = vmatpush1.bf16.msra.mxu0 %v2272
        %2506 = vmatprep.subr.bf16.mxu0 %v2271
        %2507 = vmatpush1.bf16.msra.mxu0 %v2270
        %2508 = vmatprep.subr.bf16.mxu0 %v2269
        %2509 = vmatpush1.bf16.msra.mxu0 %v2268
        %2510 = vmatprep.subr.bf16.mxu0 0
        %2511 = vmatpush2.bf16.msra.mxu0 0
        %2512 = vmatprep.subr.bf16.mxu0 0
        %2513 = vmatpush2.bf16.msra.mxu0 0
        %2514 = vmatprep.subr.bf16.mxu0 0
        %2515 = vmatpush2.bf16.msra.mxu0 0
        %2516 = vmatprep.subr.bf16.mxu0 0
        %2517 = vmatpush2.bf16.msra.mxu0 0
        %2518 = vmatprep.subr.bf16.mxu0 0
        %2519 = vmatpush2.bf16.msra.mxu0 0
        %2520 = vmatprep.subr.bf16.mxu0 0
        %2521 = vmatpush2.bf16.msra.mxu0 0
        %2522 = vmatprep.subr.bf16.mxu0 0
        %2523 = vmatpush2.bf16.msra.mxu0 0
        %2524 = vmatprep.subr.bf16.mxu0 0
        %2525 = vmatpush2.bf16.msra.mxu0 0
        %2526 = vmatprep.mubr.bf16.mxu0 0
        %2527 = vmatmul.mubr.bf16.gmra.mxu0 %v2483
        %v2528 = vpop.f32.mrf.mxu0
        %v2529 = vadd.f32 %v2424, %v2528
        %v2530 = vpop.f32.mrf.mxu0
        %v2531 = vadd.f32 %v2426, %v2530
        %v2532 = vpop.f32.mrf.mxu0
        %v2533 = vadd.f32 %v2428, %v2532
        %v2534 = vpop.f32.mrf.mxu0
        %v2535 = vadd.f32 %v2430, %v2534
        %2536 = vmatprep.mubr.bf16.mxu0 0
        %2537 = vmatmul.mubr.bf16.gmra.mxu0 %v2486
        %v2538 = vpop.f32.mrf.mxu0
        %v2539 = vadd.f32 %v2434, %v2538
        %v2540 = vpop.f32.mrf.mxu0
        %v2541 = vadd.f32 %v2436, %v2540
        %v2542 = vpop.f32.mrf.mxu0
        %v2543 = vadd.f32 %v2438, %v2542
        %v2544 = vpop.f32.mrf.mxu0
        %v2545 = vadd.f32 %v2440, %v2544
        %2546 = vmatprep.mubr.bf16.mxu0 0
        %2547 = vmatmul.mubr.bf16.gmra.mxu0 %v2489
        %v2548 = vpop.f32.mrf.mxu0
        %v2549 = vadd.f32 %v2444, %v2548
        %v2550 = vpop.f32.mrf.mxu0
        %v2551 = vadd.f32 %v2446, %v2550
        %v2552 = vpop.f32.mrf.mxu0
        %v2553 = vadd.f32 %v2448, %v2552
        %v2554 = vpop.f32.mrf.mxu0
        %v2555 = vadd.f32 %v2450, %v2554
        %2556 = vmatprep.mubr.bf16.mxu0 0
        %2557 = vmatmul.mubr.bf16.gmra.mxu0 %v2492
        %v2558 = vpop.f32.mrf.mxu0
        %v2559 = vadd.f32 %v2454, %v2558
        %v2560 = vpop.f32.mrf.mxu0
        %v2561 = vadd.f32 %v2456, %v2560
        %v2562 = vpop.f32.mrf.mxu0
        %v2563 = vadd.f32 %v2458, %v2562
        %v2564 = vpop.f32.mrf.mxu0
        %v2565 = vadd.f32 %v2460, %v2564
        %2566 = vdwg.mxu0
        %2567 = vrot.lane.b32.xlu0 %v2180, 15
        %v2568 = vpop.permute.xlu0 %2567
        %2569 = vrot.lane.b32.xlu0 %v2182, 15
        %v2570 = vpop.permute.xlu0 %2569
        %2571 = vrot.lane.b32.xlu0 %v2184, 15
        %v2572 = vpop.permute.xlu0 %2571
        %2573 = vrot.lane.b32.xlu0 %v2186, 15
        %v2574 = vpop.permute.xlu0 %2573
        %2575 = vrot.lane.b32.xlu0 %v2188, 15
        %v2576 = vpop.permute.xlu0 %2575
        %2577 = vrot.lane.b32.xlu0 %v2190, 15
        %v2578 = vpop.permute.xlu0 %2577
        %2579 = vrot.lane.b32.xlu0 %v2192, 15
        %v2580 = vpop.permute.xlu0 %2579
        %2581 = vrot.lane.b32.xlu0 %v2194, 15
        %v2582 = vpop.permute.xlu0 %2581
        %2583 = vrot.lane.b32.xlu0 %v2181, 15
        %v2584 = vpop.permute.xlu0 %2583
        %2585 = vrot.lane.b32.xlu0 %v2183, 15
        %v2586 = vpop.permute.xlu0 %2585
        %2587 = vrot.lane.b32.xlu0 %v2185, 15
        %v2588 = vpop.permute.xlu0 %2587
        %2589 = vrot.lane.b32.xlu0 %v2187, 15
        %v2590 = vpop.permute.xlu0 %2589
        %2591 = vrot.lane.b32.xlu0 %v2189, 15
        %v2592 = vpop.permute.xlu0 %2591
        %2593 = vrot.lane.b32.xlu0 %v2191, 15
        %v2594 = vpop.permute.xlu0 %2593
        %2595 = vrot.lane.b32.xlu0 %v2193, 15
        %v2596 = vpop.permute.xlu0 %2595
        %2597 = vrot.lane.b32.xlu0 %v2195, 15
        %v2598 = vpop.permute.xlu0 %2597
        %v2599 = vsel %vm744, %v2568, %v2584
        %v2600 = vsel %vm744, %v2570, %v2586
        %v2601 = vsel %vm744, %v2572, %v2588
        %v2602 = vsel %vm744, %v2574, %v2590
        %v2603 = vsel %vm744, %v2576, %v2592
        %v2604 = vsel %vm744, %v2578, %v2594
        %v2605 = vsel %vm744, %v2580, %v2596
        %v2606 = vsel %vm744, %v2582, %v2598
        %v2607 = vsel %vm744, %v2584, %v2568
        %v2608 = vsel %vm744, %v2586, %v2570
        %v2609 = vsel %vm744, %v2588, %v2572
        %v2610 = vsel %vm744, %v2590, %v2574
        %v2611 = vsel %vm744, %v2592, %v2576
        %v2612 = vsel %vm744, %v2594, %v2578
        %v2613 = vsel %vm744, %v2596, %v2580
        %v2614 = vsel %vm744, %v2598, %v2582
        %v2615 = vmul.f32 %v2607, %v764
        %v2616 = vmul.f32 %v2599, %v768
        %v2617 = vmul.f32 %v2608, %v764
        %v2618 = vmul.f32 %v2600, %v768
        %v2619 = vmul.f32 %v2609, %v764
        %v2620 = vmul.f32 %v2601, %v768
        %v2621 = vmul.f32 %v2610, %v764
        %v2622 = vmul.f32 %v2602, %v768
        %v2623 = vmul.f32 %v2611, %v764
        %v2624 = vmul.f32 %v2603, %v768
        %v2625 = vmul.f32 %v2612, %v764
        %v2626 = vmul.f32 %v2604, %v768
        %v2627 = vmul.f32 %v2613, %v764
        %v2628 = vmul.f32 %v2605, %v768
        %v2629 = vmul.f32 %v2614, %v764
        %v2630 = vmul.f32 %v2606, %v768
        %s2631 = scalar_lea.vmem [#allocation7], 64
        %v2632 = vld [vmem:[%s2631] sm:$0xf]
        %v2633 = vld [vmem:[%s2631 + $0x4] sm:$0xf]
        %v2634 = vld [vmem:[%s2631 + $0x8] sm:$0xf]
        %v2635 = vld [vmem:[%s2631 + $0xc] sm:$0xf]
        %v2636 = vld [vmem:[%s2631 + $0x10] sm:$0xf]
        %v2637 = vld [vmem:[%s2631 + $0x14] sm:$0xf]
        %v2638 = vld [vmem:[%s2631 + $0x18] sm:$0xf]
        %v2639 = vld [vmem:[%s2631 + $0x1c] sm:$0xf]
        %v2640 = vpack.c.bf16 %v2617, %v2615
        %v2641 = vpack.c.bf16 %v2618, %v2616
        %v2642 = vpack.c.bf16 %v2621, %v2619
        %v2643 = vpack.c.bf16 %v2622, %v2620
        %v2644 = vpack.c.bf16 %v2625, %v2623
        %v2645 = vpack.c.bf16 %v2626, %v2624
        %v2646 = vpack.c.bf16 %v2629, %v2627
        %v2647 = vpack.c.bf16 %v2630, %v2628
        %v2656 = vunpack.c.l.b16 %v2632
        %v2657 = vunpack.c.l.b16 %v2633
        %v2658 = vunpack.c.l.b16 %v2634
        %v2659 = vunpack.c.l.b16 %v2635
        %v2660 = vunpack.c.l.b16 %v2636
        %v2661 = vunpack.c.l.b16 %v2637
        %v2662 = vunpack.c.l.b16 %v2638
        %v2663 = vunpack.c.l.b16 %v2639
        %v2664 = vpack.c.b16 %v2657, %v2656
        %v2665 = vpack.c.b16 %v2659, %v2658
        %v2666 = vpack.c.b16 %v2661, %v2660
        %v2667 = vpack.c.b16 %v2663, %v2662
        %v2669 = vsel %vm521, %v2664, 0
        %v2672 = vsel %vm521, %v2665, 0
        %v2675 = vsel %vm521, %v2666, 0
        %v2678 = vsel %vm521, %v2667, 0
        %2680 = vmatprep.subr.bf16.mxu0 0
        %2681 = vmatpush1.bf16.msra.mxu0 0
        %2682 = vmatprep.subr.bf16.mxu0 0
        %2683 = vmatpush1.bf16.msra.mxu0 0
        %2684 = vmatprep.subr.bf16.mxu0 0
        %2685 = vmatpush1.bf16.msra.mxu0 0
        %2686 = vmatprep.subr.bf16.mxu0 0
        %2687 = vmatpush1.bf16.msra.mxu0 0
        %2688 = vmatprep.subr.bf16.mxu0 %v2647
        %2689 = vmatpush1.bf16.msra.mxu0 %v2646
        %2690 = vmatprep.subr.bf16.mxu0 %v2645
        %2691 = vmatpush1.bf16.msra.mxu0 %v2644
        %2692 = vmatprep.subr.bf16.mxu0 %v2643
        %2693 = vmatpush1.bf16.msra.mxu0 %v2642
        %2694 = vmatprep.subr.bf16.mxu0 %v2641
        %2695 = vmatpush1.bf16.msra.mxu0 %v2640
        %2696 = vmatprep.subr.bf16.mxu0 0
        %2697 = vmatpush2.bf16.msra.mxu0 0
        %2698 = vmatprep.subr.bf16.mxu0 0
        %2699 = vmatpush2.bf16.msra.mxu0 0
        %2700 = vmatprep.subr.bf16.mxu0 0
        %2701 = vmatpush2.bf16.msra.mxu0 0
        %2702 = vmatprep.subr.bf16.mxu0 0
        %2703 = vmatpush2.bf16.msra.mxu0 0
        %2704 = vmatprep.subr.bf16.mxu0 0
        %2705 = vmatpush2.bf16.msra.mxu0 0
        %2706 = vmatprep.subr.bf16.mxu0 0
        %2707 = vmatpush2.bf16.msra.mxu0 0
        %2708 = vmatprep.subr.bf16.mxu0 0
        %2709 = vmatpush2.bf16.msra.mxu0 0
        %2710 = vmatprep.subr.bf16.mxu0 0
        %2711 = vmatpush2.bf16.msra.mxu0 0
        %2712 = vmatprep.mubr.bf16.mxu0 0
        %2713 = vmatmul.mubr.bf16.gmra.mxu0 %v2669
        %v2714 = vpop.f32.mrf.mxu0
        %v2715 = vadd.f32 0.0, %v2714
        %v2716 = vpop.f32.mrf.mxu0
        %v2717 = vadd.f32 0.0, %v2716
        %v2718 = vpop.f32.mrf.mxu0
        %v2719 = vadd.f32 0.0, %v2718
        %v2720 = vpop.f32.mrf.mxu0
        %v2721 = vadd.f32 0.0, %v2720
        %2722 = vmatprep.mubr.bf16.mxu0 0
        %2723 = vmatmul.mubr.bf16.gmra.mxu0 %v2672
        %v2724 = vpop.f32.mrf.mxu0
        %v2725 = vadd.f32 0.0, %v2724
        %v2726 = vpop.f32.mrf.mxu0
        %v2727 = vadd.f32 0.0, %v2726
        %v2728 = vpop.f32.mrf.mxu0
        %v2729 = vadd.f32 0.0, %v2728
        %v2730 = vpop.f32.mrf.mxu0
        %v2731 = vadd.f32 0.0, %v2730
        %2732 = vmatprep.mubr.bf16.mxu0 0
        %2733 = vmatmul.mubr.bf16.gmra.mxu0 %v2675
        %v2734 = vpop.f32.mrf.mxu0
        %v2735 = vadd.f32 0.0, %v2734
        %v2736 = vpop.f32.mrf.mxu0
        %v2737 = vadd.f32 0.0, %v2736
        %v2738 = vpop.f32.mrf.mxu0
        %v2739 = vadd.f32 0.0, %v2738
        %v2740 = vpop.f32.mrf.mxu0
        %v2741 = vadd.f32 0.0, %v2740
        %2742 = vmatprep.mubr.bf16.mxu0 0
        %2743 = vmatmul.mubr.bf16.gmra.mxu0 %v2678
        %v2744 = vpop.f32.mrf.mxu0
        %v2745 = vadd.f32 0.0, %v2744
        %v2746 = vpop.f32.mrf.mxu0
        %v2747 = vadd.f32 0.0, %v2746
        %v2748 = vpop.f32.mrf.mxu0
        %v2749 = vadd.f32 0.0, %v2748
        %v2750 = vpop.f32.mrf.mxu0
        %v2751 = vadd.f32 0.0, %v2750
        %2752 = vdwg.mxu0
        %v2753 = vadd.f32 %v2529, %v2715
        %v2754 = vadd.f32 %v2531, %v2717
        %v2755 = vadd.f32 %v2533, %v2719
        %v2756 = vadd.f32 %v2535, %v2721
        %v2757 = vadd.f32 %v2539, %v2725
        %v2758 = vadd.f32 %v2541, %v2727
        %v2759 = vadd.f32 %v2543, %v2729
        %v2760 = vadd.f32 %v2545, %v2731
        %v2761 = vadd.f32 %v2549, %v2735
        %v2762 = vadd.f32 %v2551, %v2737
        %v2763 = vadd.f32 %v2553, %v2739
        %v2764 = vadd.f32 %v2555, %v2741
        %v2765 = vadd.f32 %v2559, %v2745
        %v2766 = vadd.f32 %v2561, %v2747
        %v2767 = vadd.f32 %v2563, %v2749
        %v2768 = vadd.f32 %v2565, %v2751
        %2769 = vrot.lane.b32.xlu0 %v2180, 1
        %v2770 = vpop.permute.xlu0 %2769
        %2771 = vrot.lane.b32.xlu0 %v2182, 1
        %v2772 = vpop.permute.xlu0 %2771
        %2773 = vrot.lane.b32.xlu0 %v2184, 1
        %v2774 = vpop.permute.xlu0 %2773
        %2775 = vrot.lane.b32.xlu0 %v2186, 1
        %v2776 = vpop.permute.xlu0 %2775
        %2777 = vrot.lane.b32.xlu0 %v2188, 1
        %v2778 = vpop.permute.xlu0 %2777
        %2779 = vrot.lane.b32.xlu0 %v2190, 1
        %v2780 = vpop.permute.xlu0 %2779
        %2781 = vrot.lane.b32.xlu0 %v2192, 1
        %v2782 = vpop.permute.xlu0 %2781
        %2783 = vrot.lane.b32.xlu0 %v2194, 1
        %v2784 = vpop.permute.xlu0 %2783
        %2785 = vrot.lane.b32.xlu0 %v2181, 1
        %v2786 = vpop.permute.xlu0 %2785
        %2787 = vrot.lane.b32.xlu0 %v2183, 1
        %v2788 = vpop.permute.xlu0 %2787
        %2789 = vrot.lane.b32.xlu0 %v2185, 1
        %v2790 = vpop.permute.xlu0 %2789
        %2791 = vrot.lane.b32.xlu0 %v2187, 1
        %v2792 = vpop.permute.xlu0 %2791
        %2793 = vrot.lane.b32.xlu0 %v2189, 1
        %v2794 = vpop.permute.xlu0 %2793
        %2795 = vrot.lane.b32.xlu0 %v2191, 1
        %v2796 = vpop.permute.xlu0 %2795
        %2797 = vrot.lane.b32.xlu0 %v2193, 1
        %v2798 = vpop.permute.xlu0 %2797
        %2799 = vrot.lane.b32.xlu0 %v2195, 1
        %v2800 = vpop.permute.xlu0 %2799
        %v2801 = vsel %vm955, %v2770, %v2786
        %v2802 = vsel %vm955, %v2772, %v2788
        %v2803 = vsel %vm955, %v2774, %v2790
        %v2804 = vsel %vm955, %v2776, %v2792
        %v2805 = vsel %vm955, %v2778, %v2794
        %v2806 = vsel %vm955, %v2780, %v2796
        %v2807 = vsel %vm955, %v2782, %v2798
        %v2808 = vsel %vm955, %v2784, %v2800
        %v2809 = vsel %vm955, %v2786, %v2770
        %v2810 = vsel %vm955, %v2788, %v2772
        %v2811 = vsel %vm955, %v2790, %v2774
        %v2812 = vsel %vm955, %v2792, %v2776
        %v2813 = vsel %vm955, %v2794, %v2778
        %v2814 = vsel %vm955, %v2796, %v2780
        %v2815 = vsel %vm955, %v2798, %v2782
        %v2816 = vsel %vm955, %v2800, %v2784
        %v2817 = vmul.f32 %v2809, %v975
        %v2818 = vmul.f32 %v2801, %v979
        %v2819 = vmul.f32 %v2810, %v975
        %v2820 = vmul.f32 %v2802, %v979
        %v2821 = vmul.f32 %v2811, %v975
        %v2822 = vmul.f32 %v2803, %v979
        %v2823 = vmul.f32 %v2812, %v975
        %v2824 = vmul.f32 %v2804, %v979
        %v2825 = vmul.f32 %v2813, %v975
        %v2826 = vmul.f32 %v2805, %v979
        %v2827 = vmul.f32 %v2814, %v975
        %v2828 = vmul.f32 %v2806, %v979
        %v2829 = vmul.f32 %v2815, %v975
        %v2830 = vmul.f32 %v2807, %v979
        %v2831 = vmul.f32 %v2816, %v975
        %v2832 = vmul.f32 %v2808, %v979
        %s2833 = scalar_lea.vmem [#allocation7], 96
        %v2834 = vld [vmem:[%s2833] sm:$0xf]
        %v2835 = vld [vmem:[%s2833 + $0x4] sm:$0xf]
        %v2836 = vld [vmem:[%s2833 + $0x8] sm:$0xf]
        %v2837 = vld [vmem:[%s2833 + $0xc] sm:$0xf]
        %v2838 = vld [vmem:[%s2833 + $0x10] sm:$0xf]
        %v2839 = vld [vmem:[%s2833 + $0x14] sm:$0xf]
        %v2840 = vld [vmem:[%s2833 + $0x18] sm:$0xf]
        %v2841 = vld [vmem:[%s2833 + $0x1c] sm:$0xf]
        %v2842 = vpack.c.bf16 %v2819, %v2817
        %v2843 = vpack.c.bf16 %v2820, %v2818
        %v2844 = vpack.c.bf16 %v2823, %v2821
        %v2845 = vpack.c.bf16 %v2824, %v2822
        %v2846 = vpack.c.bf16 %v2827, %v2825
        %v2847 = vpack.c.bf16 %v2828, %v2826
        %v2848 = vpack.c.bf16 %v2831, %v2829
        %v2849 = vpack.c.bf16 %v2832, %v2830
        %v2858 = vunpack.c.l.b16 %v2834
        %v2859 = vunpack.c.l.b16 %v2835
        %v2860 = vunpack.c.l.b16 %v2836
        %v2861 = vunpack.c.l.b16 %v2837
        %v2862 = vunpack.c.l.b16 %v2838
        %v2863 = vunpack.c.l.b16 %v2839
        %v2864 = vunpack.c.l.b16 %v2840
        %v2865 = vunpack.c.l.b16 %v2841
        %v2866 = vpack.c.b16 %v2859, %v2858
        %v2867 = vpack.c.b16 %v2861, %v2860
        %v2868 = vpack.c.b16 %v2863, %v2862
        %v2869 = vpack.c.b16 %v2865, %v2864
        %v2871 = vsel %vm521, %v2866, 0
        %v2874 = vsel %vm521, %v2867, 0
        %v2877 = vsel %vm521, %v2868, 0
        %v2880 = vsel %vm521, %v2869, 0
        %2882 = vmatprep.subr.bf16.mxu0 0
        %2883 = vmatpush1.bf16.msra.mxu0 0
        %2884 = vmatprep.subr.bf16.mxu0 0
        %2885 = vmatpush1.bf16.msra.mxu0 0
        %2886 = vmatprep.subr.bf16.mxu0 0
        %2887 = vmatpush1.bf16.msra.mxu0 0
        %2888 = vmatprep.subr.bf16.mxu0 0
        %2889 = vmatpush1.bf16.msra.mxu0 0
        %2890 = vmatprep.subr.bf16.mxu0 %v2849
        %2891 = vmatpush1.bf16.msra.mxu0 %v2848
        %2892 = vmatprep.subr.bf16.mxu0 %v2847
        %2893 = vmatpush1.bf16.msra.mxu0 %v2846
        %2894 = vmatprep.subr.bf16.mxu0 %v2845
        %2895 = vmatpush1.bf16.msra.mxu0 %v2844
        %2896 = vmatprep.subr.bf16.mxu0 %v2843
        %2897 = vmatpush1.bf16.msra.mxu0 %v2842
        %2898 = vmatprep.subr.bf16.mxu0 0
        %2899 = vmatpush2.bf16.msra.mxu0 0
        %2900 = vmatprep.subr.bf16.mxu0 0
        %2901 = vmatpush2.bf16.msra.mxu0 0
        %2902 = vmatprep.subr.bf16.mxu0 0
        %2903 = vmatpush2.bf16.msra.mxu0 0
        %2904 = vmatprep.subr.bf16.mxu0 0
        %2905 = vmatpush2.bf16.msra.mxu0 0
        %2906 = vmatprep.subr.bf16.mxu0 0
        %2907 = vmatpush2.bf16.msra.mxu0 0
        %2908 = vmatprep.subr.bf16.mxu0 0
        %2909 = vmatpush2.bf16.msra.mxu0 0
        %2910 = vmatprep.subr.bf16.mxu0 0
        %2911 = vmatpush2.bf16.msra.mxu0 0
        %2912 = vmatprep.subr.bf16.mxu0 0
        %2913 = vmatpush2.bf16.msra.mxu0 0
        %2914 = vmatprep.mubr.bf16.mxu0 0
        %2915 = vmatmul.mubr.bf16.gmra.mxu0 %v2871
        %v2916 = vpop.f32.mrf.mxu0
        %v2917 = vadd.f32 0.0, %v2916
        %v2918 = vpop.f32.mrf.mxu0
        %v2919 = vadd.f32 0.0, %v2918
        %v2920 = vpop.f32.mrf.mxu0
        %v2921 = vadd.f32 0.0, %v2920
        %v2922 = vpop.f32.mrf.mxu0
        %v2923 = vadd.f32 0.0, %v2922
        %2924 = vmatprep.mubr.bf16.mxu0 0
        %2925 = vmatmul.mubr.bf16.gmra.mxu0 %v2874
        %v2926 = vpop.f32.mrf.mxu0
        %v2927 = vadd.f32 0.0, %v2926
        %v2928 = vpop.f32.mrf.mxu0
        %v2929 = vadd.f32 0.0, %v2928
        %v2930 = vpop.f32.mrf.mxu0
        %v2931 = vadd.f32 0.0, %v2930
        %v2932 = vpop.f32.mrf.mxu0
        %v2933 = vadd.f32 0.0, %v2932
        %2934 = vmatprep.mubr.bf16.mxu0 0
        %2935 = vmatmul.mubr.bf16.gmra.mxu0 %v2877
        %v2936 = vpop.f32.mrf.mxu0
        %v2937 = vadd.f32 0.0, %v2936
        %v2938 = vpop.f32.mrf.mxu0
        %v2939 = vadd.f32 0.0, %v2938
        %v2940 = vpop.f32.mrf.mxu0
        %v2941 = vadd.f32 0.0, %v2940
        %v2942 = vpop.f32.mrf.mxu0
        %v2943 = vadd.f32 0.0, %v2942
        %2944 = vmatprep.mubr.bf16.mxu0 0
        %2945 = vmatmul.mubr.bf16.gmra.mxu0 %v2880
        %v2946 = vpop.f32.mrf.mxu0
        %v2947 = vadd.f32 0.0, %v2946
        %v2948 = vpop.f32.mrf.mxu0
        %v2949 = vadd.f32 0.0, %v2948
        %v2950 = vpop.f32.mrf.mxu0
        %v2951 = vadd.f32 0.0, %v2950
        %v2952 = vpop.f32.mrf.mxu0
        %v2953 = vadd.f32 0.0, %v2952
        %2954 = vdwg.mxu0
        %v2955 = vadd.f32 %v2753, %v2917
        %v2956 = vadd.f32 %v2754, %v2919
        %v2957 = vadd.f32 %v2755, %v2921
        %v2958 = vadd.f32 %v2756, %v2923
        %v2959 = vadd.f32 %v2757, %v2927
        %v2960 = vadd.f32 %v2758, %v2929
        %v2961 = vadd.f32 %v2759, %v2931
        %v2962 = vadd.f32 %v2760, %v2933
        %v2963 = vadd.f32 %v2761, %v2937
        %v2964 = vadd.f32 %v2762, %v2939
        %v2965 = vadd.f32 %v2763, %v2941
        %v2966 = vadd.f32 %v2764, %v2943
        %v2967 = vadd.f32 %v2765, %v2947
        %v2968 = vadd.f32 %v2766, %v2949
        %v2969 = vadd.f32 %v2767, %v2951
        %v2970 = vadd.f32 %v2768, %v2953
        %s2971 = scalar_lea.vmem [#allocation7], 128
        %v2972 = vld [vmem:[%s2971] sm:$0xf]
        %v2973 = vld [vmem:[%s2971 + $0x4] sm:$0xf]
        %v2974 = vld [vmem:[%s2971 + $0x8] sm:$0xf]
        %v2975 = vld [vmem:[%s2971 + $0xc] sm:$0xf]
        %v2976 = vld [vmem:[%s2971 + $0x10] sm:$0xf]
        %v2977 = vld [vmem:[%s2971 + $0x14] sm:$0xf]
        %v2978 = vld [vmem:[%s2971 + $0x18] sm:$0xf]
        %v2979 = vld [vmem:[%s2971 + $0x1c] sm:$0xf]
        %v2980 = vpack.c.bf16 %v2182, %v2180
        %v2981 = vpack.c.bf16 %v2183, %v2181
        %v2982 = vpack.c.bf16 %v2186, %v2184
        %v2983 = vpack.c.bf16 %v2187, %v2185
        %v2984 = vpack.c.bf16 %v2190, %v2188
        %v2985 = vpack.c.bf16 %v2191, %v2189
        %v2986 = vpack.c.bf16 %v2194, %v2192
        %v2987 = vpack.c.bf16 %v2195, %v2193
        %v2996 = vunpack.c.l.b16 %v2972
        %v2997 = vunpack.c.l.b16 %v2973
        %v2998 = vunpack.c.l.b16 %v2974
        %v2999 = vunpack.c.l.b16 %v2975
        %v3000 = vunpack.c.l.b16 %v2976
        %v3001 = vunpack.c.l.b16 %v2977
        %v3002 = vunpack.c.l.b16 %v2978
        %v3003 = vunpack.c.l.b16 %v2979
        %v3004 = vpack.c.b16 %v2997, %v2996
        %v3005 = vpack.c.b16 %v2999, %v2998
        %v3006 = vpack.c.b16 %v3001, %v3000
        %v3007 = vpack.c.b16 %v3003, %v3002
        %v3009 = vsel %vm521, %v3004, 0
        %v3012 = vsel %vm521, %v3005, 0
        %v3015 = vsel %vm521, %v3006, 0
        %v3018 = vsel %vm521, %v3007, 0
        %3020 = vmatprep.subr.bf16.mxu0 0
        %3021 = vmatpush1.bf16.msra.mxu0 0
        %3022 = vmatprep.subr.bf16.mxu0 0
        %3023 = vmatpush1.bf16.msra.mxu0 0
        %3024 = vmatprep.subr.bf16.mxu0 0
        %3025 = vmatpush1.bf16.msra.mxu0 0
        %3026 = vmatprep.subr.bf16.mxu0 0
        %3027 = vmatpush1.bf16.msra.mxu0 0
        %3028 = vmatprep.subr.bf16.mxu0 %v2987
        %3029 = vmatpush1.bf16.msra.mxu0 %v2986
        %3030 = vmatprep.subr.bf16.mxu0 %v2985
        %3031 = vmatpush1.bf16.msra.mxu0 %v2984
        %3032 = vmatprep.subr.bf16.mxu0 %v2983
        %3033 = vmatpush1.bf16.msra.mxu0 %v2982
        %3034 = vmatprep.subr.bf16.mxu0 %v2981
        %3035 = vmatpush1.bf16.msra.mxu0 %v2980
        %3036 = vmatprep.subr.bf16.mxu0 0
        %3037 = vmatpush2.bf16.msra.mxu0 0
        %3038 = vmatprep.subr.bf16.mxu0 0
        %3039 = vmatpush2.bf16.msra.mxu0 0
        %3040 = vmatprep.subr.bf16.mxu0 0
        %3041 = vmatpush2.bf16.msra.mxu0 0
        %3042 = vmatprep.subr.bf16.mxu0 0
        %3043 = vmatpush2.bf16.msra.mxu0 0
        %3044 = vmatprep.subr.bf16.mxu0 0
        %3045 = vmatpush2.bf16.msra.mxu0 0
        %3046 = vmatprep.subr.bf16.mxu0 0
        %3047 = vmatpush2.bf16.msra.mxu0 0
        %3048 = vmatprep.subr.bf16.mxu0 0
        %3049 = vmatpush2.bf16.msra.mxu0 0
        %3050 = vmatprep.subr.bf16.mxu0 0
        %3051 = vmatpush2.bf16.msra.mxu0 0
        %3052 = vmatprep.mubr.bf16.mxu0 0
        %3053 = vmatmul.mubr.bf16.gmra.mxu0 %v3009
        %v3054 = vpop.f32.mrf.mxu0
        %v3055 = vadd.f32 0.0, %v3054
        %v3056 = vpop.f32.mrf.mxu0
        %v3057 = vadd.f32 0.0, %v3056
        %v3058 = vpop.f32.mrf.mxu0
        %v3059 = vadd.f32 0.0, %v3058
        %v3060 = vpop.f32.mrf.mxu0
        %v3061 = vadd.f32 0.0, %v3060
        %3062 = vmatprep.mubr.bf16.mxu0 0
        %3063 = vmatmul.mubr.bf16.gmra.mxu0 %v3012
        %v3064 = vpop.f32.mrf.mxu0
        %v3065 = vadd.f32 0.0, %v3064
        %v3066 = vpop.f32.mrf.mxu0
        %v3067 = vadd.f32 0.0, %v3066
        %v3068 = vpop.f32.mrf.mxu0
        %v3069 = vadd.f32 0.0, %v3068
        %v3070 = vpop.f32.mrf.mxu0
        %v3071 = vadd.f32 0.0, %v3070
        %3072 = vmatprep.mubr.bf16.mxu0 0
        %3073 = vmatmul.mubr.bf16.gmra.mxu0 %v3015
        %v3074 = vpop.f32.mrf.mxu0
        %v3075 = vadd.f32 0.0, %v3074
        %v3076 = vpop.f32.mrf.mxu0
        %v3077 = vadd.f32 0.0, %v3076
        %v3078 = vpop.f32.mrf.mxu0
        %v3079 = vadd.f32 0.0, %v3078
        %v3080 = vpop.f32.mrf.mxu0
        %v3081 = vadd.f32 0.0, %v3080
        %3082 = vmatprep.mubr.bf16.mxu0 0
        %3083 = vmatmul.mubr.bf16.gmra.mxu0 %v3018
        %v3084 = vpop.f32.mrf.mxu0
        %v3085 = vadd.f32 0.0, %v3084
        %v3086 = vpop.f32.mrf.mxu0
        %v3087 = vadd.f32 0.0, %v3086
        %v3088 = vpop.f32.mrf.mxu0
        %v3089 = vadd.f32 0.0, %v3088
        %v3090 = vpop.f32.mrf.mxu0
        %v3091 = vadd.f32 0.0, %v3090
        %3092 = vdwg.mxu0
        %v3093 = vadd.f32 %v2955, %v3055
        %v3094 = vadd.f32 %v2956, %v3057
        %v3095 = vadd.f32 %v2957, %v3059
        %v3096 = vadd.f32 %v2958, %v3061
        %v3097 = vadd.f32 %v2959, %v3065
        %v3098 = vadd.f32 %v2960, %v3067
        %v3099 = vadd.f32 %v2961, %v3069
        %v3100 = vadd.f32 %v2962, %v3071
        %v3101 = vadd.f32 %v2963, %v3075
        %v3102 = vadd.f32 %v2964, %v3077
        %v3103 = vadd.f32 %v2965, %v3079
        %v3104 = vadd.f32 %v2966, %v3081
        %v3105 = vadd.f32 %v2967, %v3085
        %v3106 = vadd.f32 %v2968, %v3087
        %v3107 = vadd.f32 %v2969, %v3089
        %v3108 = vadd.f32 %v2970, %v3091
        %3109 = vrot.lane.b32.xlu0 %v2180, 127
        %v3110 = vpop.permute.xlu0 %3109
        %3111 = vrot.lane.b32.xlu0 %v2182, 127
        %v3112 = vpop.permute.xlu0 %3111
        %3113 = vrot.lane.b32.xlu0 %v2184, 127
        %v3114 = vpop.permute.xlu0 %3113
        %3115 = vrot.lane.b32.xlu0 %v2186, 127
        %v3116 = vpop.permute.xlu0 %3115
        %3117 = vrot.lane.b32.xlu0 %v2188, 127
        %v3118 = vpop.permute.xlu0 %3117
        %3119 = vrot.lane.b32.xlu0 %v2190, 127
        %v3120 = vpop.permute.xlu0 %3119
        %3121 = vrot.lane.b32.xlu0 %v2192, 127
        %v3122 = vpop.permute.xlu0 %3121
        %3123 = vrot.lane.b32.xlu0 %v2194, 127
        %v3124 = vpop.permute.xlu0 %3123
        %3125 = vrot.lane.b32.xlu0 %v2181, 127
        %v3126 = vpop.permute.xlu0 %3125
        %3127 = vrot.lane.b32.xlu0 %v2183, 127
        %v3128 = vpop.permute.xlu0 %3127
        %3129 = vrot.lane.b32.xlu0 %v2185, 127
        %v3130 = vpop.permute.xlu0 %3129
        %3131 = vrot.lane.b32.xlu0 %v2187, 127
        %v3132 = vpop.permute.xlu0 %3131
        %3133 = vrot.lane.b32.xlu0 %v2189, 127
        %v3134 = vpop.permute.xlu0 %3133
        %3135 = vrot.lane.b32.xlu0 %v2191, 127
        %v3136 = vpop.permute.xlu0 %3135
        %3137 = vrot.lane.b32.xlu0 %v2193, 127
        %v3138 = vpop.permute.xlu0 %3137
        %3139 = vrot.lane.b32.xlu0 %v2195, 127
        %v3140 = vpop.permute.xlu0 %3139
        %v3141 = vsel %vm1304, %v3110, %v3126
        %v3142 = vsel %vm1304, %v3112, %v3128
        %v3143 = vsel %vm1304, %v3114, %v3130
        %v3144 = vsel %vm1304, %v3116, %v3132
        %v3145 = vsel %vm1304, %v3118, %v3134
        %v3146 = vsel %vm1304, %v3120, %v3136
        %v3147 = vsel %vm1304, %v3122, %v3138
        %v3148 = vsel %vm1304, %v3124, %v3140
        %v3149 = vsel %vm1304, %v3126, %v3110
        %v3150 = vsel %vm1304, %v3128, %v3112
        %v3151 = vsel %vm1304, %v3130, %v3114
        %v3152 = vsel %vm1304, %v3132, %v3116
        %v3153 = vsel %vm1304, %v3134, %v3118
        %v3154 = vsel %vm1304, %v3136, %v3120
        %v3155 = vsel %vm1304, %v3138, %v3122
        %v3156 = vsel %vm1304, %v3140, %v3124
        %v3157 = vmul.f32 %v3141, %v1324
        %v3158 = vmul.f32 %v3149, %v1328
        %v3159 = vmul.f32 %v3142, %v1324
        %v3160 = vmul.f32 %v3150, %v1328
        %v3161 = vmul.f32 %v3143, %v1324
        %v3162 = vmul.f32 %v3151, %v1328
        %v3163 = vmul.f32 %v3144, %v1324
        %v3164 = vmul.f32 %v3152, %v1328
        %v3165 = vmul.f32 %v3145, %v1324
        %v3166 = vmul.f32 %v3153, %v1328
        %v3167 = vmul.f32 %v3146, %v1324
        %v3168 = vmul.f32 %v3154, %v1328
        %v3169 = vmul.f32 %v3147, %v1324
        %v3170 = vmul.f32 %v3155, %v1328
        %v3171 = vmul.f32 %v3148, %v1324
        %v3172 = vmul.f32 %v3156, %v1328
        %s3173 = scalar_lea.vmem [#allocation7], 160
        %v3174 = vld [vmem:[%s3173] sm:$0xf]
        %v3175 = vld [vmem:[%s3173 + $0x4] sm:$0xf]
        %v3176 = vld [vmem:[%s3173 + $0x8] sm:$0xf]
        %v3177 = vld [vmem:[%s3173 + $0xc] sm:$0xf]
        %v3178 = vld [vmem:[%s3173 + $0x10] sm:$0xf]
        %v3179 = vld [vmem:[%s3173 + $0x14] sm:$0xf]
        %v3180 = vld [vmem:[%s3173 + $0x18] sm:$0xf]
        %v3181 = vld [vmem:[%s3173 + $0x1c] sm:$0xf]
        %v3182 = vpack.c.bf16 %v3159, %v3157
        %v3183 = vpack.c.bf16 %v3160, %v3158
        %v3184 = vpack.c.bf16 %v3163, %v3161
        %v3185 = vpack.c.bf16 %v3164, %v3162
        %v3186 = vpack.c.bf16 %v3167, %v3165
        %v3187 = vpack.c.bf16 %v3168, %v3166
        %v3188 = vpack.c.bf16 %v3171, %v3169
        %v3189 = vpack.c.bf16 %v3172, %v3170
        %v3198 = vunpack.c.l.b16 %v3174
        %v3199 = vunpack.c.l.b16 %v3175
        %v3200 = vunpack.c.l.b16 %v3176
        %v3201 = vunpack.c.l.b16 %v3177
        %v3202 = vunpack.c.l.b16 %v3178
        %v3203 = vunpack.c.l.b16 %v3179
        %v3204 = vunpack.c.l.b16 %v3180
        %v3205 = vunpack.c.l.b16 %v3181
        %v3206 = vpack.c.b16 %v3199, %v3198
        %v3207 = vpack.c.b16 %v3201, %v3200
        %v3208 = vpack.c.b16 %v3203, %v3202
        %v3209 = vpack.c.b16 %v3205, %v3204
        %v3211 = vsel %vm521, %v3206, 0
        %v3214 = vsel %vm521, %v3207, 0
        %v3217 = vsel %vm521, %v3208, 0
        %v3220 = vsel %vm521, %v3209, 0
        %3222 = vmatprep.subr.bf16.mxu0 0
        %3223 = vmatpush1.bf16.msra.mxu0 0
        %3224 = vmatprep.subr.bf16.mxu0 0
        %3225 = vmatpush1.bf16.msra.mxu0 0
        %3226 = vmatprep.subr.bf16.mxu0 0
        %3227 = vmatpush1.bf16.msra.mxu0 0
        %3228 = vmatprep.subr.bf16.mxu0 0
        %3229 = vmatpush1.bf16.msra.mxu0 0
        %3230 = vmatprep.subr.bf16.mxu0 %v3189
        %3231 = vmatpush1.bf16.msra.mxu0 %v3188
        %3232 = vmatprep.subr.bf16.mxu0 %v3187
        %3233 = vmatpush1.bf16.msra.mxu0 %v3186
        %3234 = vmatprep.subr.bf16.mxu0 %v3185
        %3235 = vmatpush1.bf16.msra.mxu0 %v3184
        %3236 = vmatprep.subr.bf16.mxu0 %v3183
        %3237 = vmatpush1.bf16.msra.mxu0 %v3182
        %3238 = vmatprep.subr.bf16.mxu0 0
        %3239 = vmatpush2.bf16.msra.mxu0 0
        %3240 = vmatprep.subr.bf16.mxu0 0
        %3241 = vmatpush2.bf16.msra.mxu0 0
        %3242 = vmatprep.subr.bf16.mxu0 0
        %3243 = vmatpush2.bf16.msra.mxu0 0
        %3244 = vmatprep.subr.bf16.mxu0 0
        %3245 = vmatpush2.bf16.msra.mxu0 0
        %3246 = vmatprep.subr.bf16.mxu0 0
        %3247 = vmatpush2.bf16.msra.mxu0 0
        %3248 = vmatprep.subr.bf16.mxu0 0
        %3249 = vmatpush2.bf16.msra.mxu0 0
        %3250 = vmatprep.subr.bf16.mxu0 0
        %3251 = vmatpush2.bf16.msra.mxu0 0
        %3252 = vmatprep.subr.bf16.mxu0 0
        %3253 = vmatpush2.bf16.msra.mxu0 0
        %3254 = vmatprep.mubr.bf16.mxu0 0
        %3255 = vmatmul.mubr.bf16.gmra.mxu0 %v3211
        %v3256 = vpop.f32.mrf.mxu0
        %v3257 = vadd.f32 0.0, %v3256
        %v3258 = vpop.f32.mrf.mxu0
        %v3259 = vadd.f32 0.0, %v3258
        %v3260 = vpop.f32.mrf.mxu0
        %v3261 = vadd.f32 0.0, %v3260
        %v3262 = vpop.f32.mrf.mxu0
        %v3263 = vadd.f32 0.0, %v3262
        %3264 = vmatprep.mubr.bf16.mxu0 0
        %3265 = vmatmul.mubr.bf16.gmra.mxu0 %v3214
        %v3266 = vpop.f32.mrf.mxu0
        %v3267 = vadd.f32 0.0, %v3266
        %v3268 = vpop.f32.mrf.mxu0
        %v3269 = vadd.f32 0.0, %v3268
        %v3270 = vpop.f32.mrf.mxu0
        %v3271 = vadd.f32 0.0, %v3270
        %v3272 = vpop.f32.mrf.mxu0
        %v3273 = vadd.f32 0.0, %v3272
        %3274 = vmatprep.mubr.bf16.mxu0 0
        %3275 = vmatmul.mubr.bf16.gmra.mxu0 %v3217
        %v3276 = vpop.f32.mrf.mxu0
        %v3277 = vadd.f32 0.0, %v3276
        %v3278 = vpop.f32.mrf.mxu0
        %v3279 = vadd.f32 0.0, %v3278
        %v3280 = vpop.f32.mrf.mxu0
        %v3281 = vadd.f32 0.0, %v3280
        %v3282 = vpop.f32.mrf.mxu0
        %v3283 = vadd.f32 0.0, %v3282
        %3284 = vmatprep.mubr.bf16.mxu0 0
        %3285 = vmatmul.mubr.bf16.gmra.mxu0 %v3220
        %v3286 = vpop.f32.mrf.mxu0
        %v3287 = vadd.f32 0.0, %v3286
        %v3288 = vpop.f32.mrf.mxu0
        %v3289 = vadd.f32 0.0, %v3288
        %v3290 = vpop.f32.mrf.mxu0
        %v3291 = vadd.f32 0.0, %v3290
        %v3292 = vpop.f32.mrf.mxu0
        %v3293 = vadd.f32 0.0, %v3292
        %3294 = vdwg.mxu0
        %v3295 = vadd.f32 %v3093, %v3257
        %v3296 = vadd.f32 %v3094, %v3259
        %v3297 = vadd.f32 %v3095, %v3261
        %v3298 = vadd.f32 %v3096, %v3263
        %v3299 = vadd.f32 %v3097, %v3267
        %v3300 = vadd.f32 %v3098, %v3269
        %v3301 = vadd.f32 %v3099, %v3271
        %v3302 = vadd.f32 %v3100, %v3273
        %v3303 = vadd.f32 %v3101, %v3277
        %v3304 = vadd.f32 %v3102, %v3279
        %v3305 = vadd.f32 %v3103, %v3281
        %v3306 = vadd.f32 %v3104, %v3283
        %v3307 = vadd.f32 %v3105, %v3287
        %v3308 = vadd.f32 %v3106, %v3289
        %v3309 = vadd.f32 %v3107, %v3291
        %v3310 = vadd.f32 %v3108, %v3293
        %3311 = vrot.lane.b32.xlu0 %v2180, 113
        %v3312 = vpop.permute.xlu0 %3311
        %3313 = vrot.lane.b32.xlu0 %v2182, 113
        %v3314 = vpop.permute.xlu0 %3313
        %3315 = vrot.lane.b32.xlu0 %v2184, 113
        %v3316 = vpop.permute.xlu0 %3315
        %3317 = vrot.lane.b32.xlu0 %v2186, 113
        %v3318 = vpop.permute.xlu0 %3317
        %3319 = vrot.lane.b32.xlu0 %v2188, 113
        %v3320 = vpop.permute.xlu0 %3319
        %3321 = vrot.lane.b32.xlu0 %v2190, 113
        %v3322 = vpop.permute.xlu0 %3321
        %3323 = vrot.lane.b32.xlu0 %v2192, 113
        %v3324 = vpop.permute.xlu0 %3323
        %3325 = vrot.lane.b32.xlu0 %v2194, 113
        %v3326 = vpop.permute.xlu0 %3325
        %3327 = vrot.lane.b32.xlu0 %v2181, 113
        %v3328 = vpop.permute.xlu0 %3327
        %3329 = vrot.lane.b32.xlu0 %v2183, 113
        %v3330 = vpop.permute.xlu0 %3329
        %3331 = vrot.lane.b32.xlu0 %v2185, 113
        %v3332 = vpop.permute.xlu0 %3331
        %3333 = vrot.lane.b32.xlu0 %v2187, 113
        %v3334 = vpop.permute.xlu0 %3333
        %3335 = vrot.lane.b32.xlu0 %v2189, 113
        %v3336 = vpop.permute.xlu0 %3335
        %3337 = vrot.lane.b32.xlu0 %v2191, 113
        %v3338 = vpop.permute.xlu0 %3337
        %3339 = vrot.lane.b32.xlu0 %v2193, 113
        %v3340 = vpop.permute.xlu0 %3339
        %3341 = vrot.lane.b32.xlu0 %v2195, 113
        %v3342 = vpop.permute.xlu0 %3341
        %v3343 = vsel %vm1515, %v3312, %v3328
        %v3344 = vsel %vm1515, %v3314, %v3330
        %v3345 = vsel %vm1515, %v3316, %v3332
        %v3346 = vsel %vm1515, %v3318, %v3334
        %v3347 = vsel %vm1515, %v3320, %v3336
        %v3348 = vsel %vm1515, %v3322, %v3338
        %v3349 = vsel %vm1515, %v3324, %v3340
        %v3350 = vsel %vm1515, %v3326, %v3342
        %v3351 = vsel %vm1515, %v3328, %v3312
        %v3352 = vsel %vm1515, %v3330, %v3314
        %v3353 = vsel %vm1515, %v3332, %v3316
        %v3354 = vsel %vm1515, %v3334, %v3318
        %v3355 = vsel %vm1515, %v3336, %v3320
        %v3356 = vsel %vm1515, %v3338, %v3322
        %v3357 = vsel %vm1515, %v3340, %v3324
        %v3358 = vsel %vm1515, %v3342, %v3326
        %v3359 = vmul.f32 %v3343, %v1535
        %v3360 = vmul.f32 %v3351, %v1539
        %v3361 = vmul.f32 %v3344, %v1535
        %v3362 = vmul.f32 %v3352, %v1539
        %v3363 = vmul.f32 %v3345, %v1535
        %v3364 = vmul.f32 %v3353, %v1539
        %v3365 = vmul.f32 %v3346, %v1535
        %v3366 = vmul.f32 %v3354, %v1539
        %v3367 = vmul.f32 %v3347, %v1535
        %v3368 = vmul.f32 %v3355, %v1539
        %v3369 = vmul.f32 %v3348, %v1535
        %v3370 = vmul.f32 %v3356, %v1539
        %v3371 = vmul.f32 %v3349, %v1535
        %v3372 = vmul.f32 %v3357, %v1539
        %v3373 = vmul.f32 %v3350, %v1535
        %v3374 = vmul.f32 %v3358, %v1539
        %s3375 = scalar_lea.vmem [#allocation7], 192
        %v3376 = vld [vmem:[%s3375] sm:$0xf]
        %v3377 = vld [vmem:[%s3375 + $0x4] sm:$0xf]
        %v3378 = vld [vmem:[%s3375 + $0x8] sm:$0xf]
        %v3379 = vld [vmem:[%s3375 + $0xc] sm:$0xf]
        %v3380 = vld [vmem:[%s3375 + $0x10] sm:$0xf]
        %v3381 = vld [vmem:[%s3375 + $0x14] sm:$0xf]
        %v3382 = vld [vmem:[%s3375 + $0x18] sm:$0xf]
        %v3383 = vld [vmem:[%s3375 + $0x1c] sm:$0xf]
        %v3384 = vpack.c.bf16 %v3361, %v3359
        %v3385 = vpack.c.bf16 %v3362, %v3360
        %v3386 = vpack.c.bf16 %v3365, %v3363
        %v3387 = vpack.c.bf16 %v3366, %v3364
        %v3388 = vpack.c.bf16 %v3369, %v3367
        %v3389 = vpack.c.bf16 %v3370, %v3368
        %v3390 = vpack.c.bf16 %v3373, %v3371
        %v3391 = vpack.c.bf16 %v3374, %v3372
        %v3400 = vunpack.c.l.b16 %v3376
        %v3401 = vunpack.c.l.b16 %v3377
        %v3402 = vunpack.c.l.b16 %v3378
        %v3403 = vunpack.c.l.b16 %v3379
        %v3404 = vunpack.c.l.b16 %v3380
        %v3405 = vunpack.c.l.b16 %v3381
        %v3406 = vunpack.c.l.b16 %v3382
        %v3407 = vunpack.c.l.b16 %v3383
        %v3408 = vpack.c.b16 %v3401, %v3400
        %v3409 = vpack.c.b16 %v3403, %v3402
        %v3410 = vpack.c.b16 %v3405, %v3404
        %v3411 = vpack.c.b16 %v3407, %v3406
        %v3413 = vsel %vm521, %v3408, 0
        %v3416 = vsel %vm521, %v3409, 0
        %v3419 = vsel %vm521, %v3410, 0
        %v3422 = vsel %vm521, %v3411, 0
        %3424 = vmatprep.subr.bf16.mxu0 0
        %3425 = vmatpush1.bf16.msra.mxu0 0
        %3426 = vmatprep.subr.bf16.mxu0 0
        %3427 = vmatpush1.bf16.msra.mxu0 0
        %3428 = vmatprep.subr.bf16.mxu0 0
        %3429 = vmatpush1.bf16.msra.mxu0 0
        %3430 = vmatprep.subr.bf16.mxu0 0
        %3431 = vmatpush1.bf16.msra.mxu0 0
        %3432 = vmatprep.subr.bf16.mxu0 %v3391
        %3433 = vmatpush1.bf16.msra.mxu0 %v3390
        %3434 = vmatprep.subr.bf16.mxu0 %v3389
        %3435 = vmatpush1.bf16.msra.mxu0 %v3388
        %3436 = vmatprep.subr.bf16.mxu0 %v3387
        %3437 = vmatpush1.bf16.msra.mxu0 %v3386
        %3438 = vmatprep.subr.bf16.mxu0 %v3385
        %3439 = vmatpush1.bf16.msra.mxu0 %v3384
        %3440 = vmatprep.subr.bf16.mxu0 0
        %3441 = vmatpush2.bf16.msra.mxu0 0
        %3442 = vmatprep.subr.bf16.mxu0 0
        %3443 = vmatpush2.bf16.msra.mxu0 0
        %3444 = vmatprep.subr.bf16.mxu0 0
        %3445 = vmatpush2.bf16.msra.mxu0 0
        %3446 = vmatprep.subr.bf16.mxu0 0
        %3447 = vmatpush2.bf16.msra.mxu0 0
        %3448 = vmatprep.subr.bf16.mxu0 0
        %3449 = vmatpush2.bf16.msra.mxu0 0
        %3450 = vmatprep.subr.bf16.mxu0 0
        %3451 = vmatpush2.bf16.msra.mxu0 0
        %3452 = vmatprep.subr.bf16.mxu0 0
        %3453 = vmatpush2.bf16.msra.mxu0 0
        %3454 = vmatprep.subr.bf16.mxu0 0
        %3455 = vmatpush2.bf16.msra.mxu0 0
        %3456 = vmatprep.mubr.bf16.mxu0 0
        %3457 = vmatmul.mubr.bf16.gmra.mxu0 %v3413
        %v3458 = vpop.f32.mrf.mxu0
        %v3459 = vadd.f32 0.0, %v3458
        %v3460 = vpop.f32.mrf.mxu0
        %v3461 = vadd.f32 0.0, %v3460
        %v3462 = vpop.f32.mrf.mxu0
        %v3463 = vadd.f32 0.0, %v3462
        %v3464 = vpop.f32.mrf.mxu0
        %v3465 = vadd.f32 0.0, %v3464
        %3466 = vmatprep.mubr.bf16.mxu0 0
        %3467 = vmatmul.mubr.bf16.gmra.mxu0 %v3416
        %v3468 = vpop.f32.mrf.mxu0
        %v3469 = vadd.f32 0.0, %v3468
        %v3470 = vpop.f32.mrf.mxu0
        %v3471 = vadd.f32 0.0, %v3470
        %v3472 = vpop.f32.mrf.mxu0
        %v3473 = vadd.f32 0.0, %v3472
        %v3474 = vpop.f32.mrf.mxu0
        %v3475 = vadd.f32 0.0, %v3474
        %3476 = vmatprep.mubr.bf16.mxu0 0
        %3477 = vmatmul.mubr.bf16.gmra.mxu0 %v3419
        %v3478 = vpop.f32.mrf.mxu0
        %v3479 = vadd.f32 0.0, %v3478
        %v3480 = vpop.f32.mrf.mxu0
        %v3481 = vadd.f32 0.0, %v3480
        %v3482 = vpop.f32.mrf.mxu0
        %v3483 = vadd.f32 0.0, %v3482
        %v3484 = vpop.f32.mrf.mxu0
        %v3485 = vadd.f32 0.0, %v3484
        %3486 = vmatprep.mubr.bf16.mxu0 0
        %3487 = vmatmul.mubr.bf16.gmra.mxu0 %v3422
        %v3488 = vpop.f32.mrf.mxu0
        %v3489 = vadd.f32 0.0, %v3488
        %v3490 = vpop.f32.mrf.mxu0
        %v3491 = vadd.f32 0.0, %v3490
        %v3492 = vpop.f32.mrf.mxu0
        %v3493 = vadd.f32 0.0, %v3492
        %v3494 = vpop.f32.mrf.mxu0
        %v3495 = vadd.f32 0.0, %v3494
        %3496 = vdwg.mxu0
        %v3497 = vadd.f32 %v3295, %v3459
        %v3498 = vadd.f32 %v3296, %v3461
        %v3499 = vadd.f32 %v3297, %v3463
        %v3500 = vadd.f32 %v3298, %v3465
        %v3501 = vadd.f32 %v3299, %v3469
        %v3502 = vadd.f32 %v3300, %v3471
        %v3503 = vadd.f32 %v3301, %v3473
        %v3504 = vadd.f32 %v3302, %v3475
        %v3505 = vadd.f32 %v3303, %v3479
        %v3506 = vadd.f32 %v3304, %v3481
        %v3507 = vadd.f32 %v3305, %v3483
        %v3508 = vadd.f32 %v3306, %v3485
        %v3509 = vadd.f32 %v3307, %v3489
        %v3510 = vadd.f32 %v3308, %v3491
        %v3511 = vadd.f32 %v3309, %v3493
        %v3512 = vadd.f32 %v3310, %v3495
        %3513 = vrot.lane.b32.xlu0 %v2180, 112
        %v3514 = vpop.permute.xlu0 %3513
        %3515 = vrot.lane.b32.xlu0 %v2182, 112
        %v3516 = vpop.permute.xlu0 %3515
        %3517 = vrot.lane.b32.xlu0 %v2184, 112
        %v3518 = vpop.permute.xlu0 %3517
        %3519 = vrot.lane.b32.xlu0 %v2186, 112
        %v3520 = vpop.permute.xlu0 %3519
        %3521 = vrot.lane.b32.xlu0 %v2188, 112
        %v3522 = vpop.permute.xlu0 %3521
        %3523 = vrot.lane.b32.xlu0 %v2190, 112
        %v3524 = vpop.permute.xlu0 %3523
        %3525 = vrot.lane.b32.xlu0 %v2192, 112
        %v3526 = vpop.permute.xlu0 %3525
        %3527 = vrot.lane.b32.xlu0 %v2194, 112
        %v3528 = vpop.permute.xlu0 %3527
        %3529 = vrot.lane.b32.xlu0 %v2181, 112
        %v3530 = vpop.permute.xlu0 %3529
        %3531 = vrot.lane.b32.xlu0 %v2183, 112
        %v3532 = vpop.permute.xlu0 %3531
        %3533 = vrot.lane.b32.xlu0 %v2185, 112
        %v3534 = vpop.permute.xlu0 %3533
        %3535 = vrot.lane.b32.xlu0 %v2187, 112
        %v3536 = vpop.permute.xlu0 %3535
        %3537 = vrot.lane.b32.xlu0 %v2189, 112
        %v3538 = vpop.permute.xlu0 %3537
        %3539 = vrot.lane.b32.xlu0 %v2191, 112
        %v3540 = vpop.permute.xlu0 %3539
        %3541 = vrot.lane.b32.xlu0 %v2193, 112
        %v3542 = vpop.permute.xlu0 %3541
        %3543 = vrot.lane.b32.xlu0 %v2195, 112
        %v3544 = vpop.permute.xlu0 %3543
        %v3545 = vsel %vm1726, %v3514, %v3530
        %v3546 = vsel %vm1726, %v3516, %v3532
        %v3547 = vsel %vm1726, %v3518, %v3534
        %v3548 = vsel %vm1726, %v3520, %v3536
        %v3549 = vsel %vm1726, %v3522, %v3538
        %v3550 = vsel %vm1726, %v3524, %v3540
        %v3551 = vsel %vm1726, %v3526, %v3542
        %v3552 = vsel %vm1726, %v3528, %v3544
        %v3553 = vsel %vm1726, %v3530, %v3514
        %v3554 = vsel %vm1726, %v3532, %v3516
        %v3555 = vsel %vm1726, %v3534, %v3518
        %v3556 = vsel %vm1726, %v3536, %v3520
        %v3557 = vsel %vm1726, %v3538, %v3522
        %v3558 = vsel %vm1726, %v3540, %v3524
        %v3559 = vsel %vm1726, %v3542, %v3526
        %v3560 = vsel %vm1726, %v3544, %v3528
        %v3561 = vmul.f32 %v3545, %v1746
        %v3562 = vmul.f32 %v3553, %v1750
        %v3563 = vmul.f32 %v3546, %v1746
        %v3564 = vmul.f32 %v3554, %v1750
        %v3565 = vmul.f32 %v3547, %v1746
        %v3566 = vmul.f32 %v3555, %v1750
        %v3567 = vmul.f32 %v3548, %v1746
        %v3568 = vmul.f32 %v3556, %v1750
        %v3569 = vmul.f32 %v3549, %v1746
        %v3570 = vmul.f32 %v3557, %v1750
        %v3571 = vmul.f32 %v3550, %v1746
        %v3572 = vmul.f32 %v3558, %v1750
        %v3573 = vmul.f32 %v3551, %v1746
        %v3574 = vmul.f32 %v3559, %v1750
        %v3575 = vmul.f32 %v3552, %v1746
        %v3576 = vmul.f32 %v3560, %v1750
        %s3577 = scalar_lea.vmem [#allocation7], 224
        %v3578 = vld [vmem:[%s3577] sm:$0xf]
        %v3579 = vld [vmem:[%s3577 + $0x4] sm:$0xf]
        %v3580 = vld [vmem:[%s3577 + $0x8] sm:$0xf]
        %v3581 = vld [vmem:[%s3577 + $0xc] sm:$0xf]
        %v3582 = vld [vmem:[%s3577 + $0x10] sm:$0xf]
        %v3583 = vld [vmem:[%s3577 + $0x14] sm:$0xf]
        %v3584 = vld [vmem:[%s3577 + $0x18] sm:$0xf]
        %v3585 = vld [vmem:[%s3577 + $0x1c] sm:$0xf]
        %v3586 = vpack.c.bf16 %v3563, %v3561
        %v3587 = vpack.c.bf16 %v3564, %v3562
        %v3588 = vpack.c.bf16 %v3567, %v3565
        %v3589 = vpack.c.bf16 %v3568, %v3566
        %v3590 = vpack.c.bf16 %v3571, %v3569
        %v3591 = vpack.c.bf16 %v3572, %v3570
        %v3592 = vpack.c.bf16 %v3575, %v3573
        %v3593 = vpack.c.bf16 %v3576, %v3574
        %v3602 = vunpack.c.l.b16 %v3578
        %v3603 = vunpack.c.l.b16 %v3579
        %v3604 = vunpack.c.l.b16 %v3580
        %v3605 = vunpack.c.l.b16 %v3581
        %v3606 = vunpack.c.l.b16 %v3582
        %v3607 = vunpack.c.l.b16 %v3583
        %v3608 = vunpack.c.l.b16 %v3584
        %v3609 = vunpack.c.l.b16 %v3585
        %v3610 = vpack.c.b16 %v3603, %v3602
        %v3611 = vpack.c.b16 %v3605, %v3604
        %v3612 = vpack.c.b16 %v3607, %v3606
        %v3613 = vpack.c.b16 %v3609, %v3608
        %v3615 = vsel %vm521, %v3610, 0
        %v3618 = vsel %vm521, %v3611, 0
        %v3621 = vsel %vm521, %v3612, 0
        %v3624 = vsel %vm521, %v3613, 0
        %3626 = vmatprep.subr.bf16.mxu0 0
        %3627 = vmatpush1.bf16.msra.mxu0 0
        %3628 = vmatprep.subr.bf16.mxu0 0
        %3629 = vmatpush1.bf16.msra.mxu0 0
        %3630 = vmatprep.subr.bf16.mxu0 0
        %3631 = vmatpush1.bf16.msra.mxu0 0
        %3632 = vmatprep.subr.bf16.mxu0 0
        %3633 = vmatpush1.bf16.msra.mxu0 0
        %3634 = vmatprep.subr.bf16.mxu0 %v3593
        %3635 = vmatpush1.bf16.msra.mxu0 %v3592
        %3636 = vmatprep.subr.bf16.mxu0 %v3591
        %3637 = vmatpush1.bf16.msra.mxu0 %v3590
        %3638 = vmatprep.subr.bf16.mxu0 %v3589
        %3639 = vmatpush1.bf16.msra.mxu0 %v3588
        %3640 = vmatprep.subr.bf16.mxu0 %v3587
        %3641 = vmatpush1.bf16.msra.mxu0 %v3586
        %3642 = vmatprep.subr.bf16.mxu0 0
        %3643 = vmatpush2.bf16.msra.mxu0 0
        %3644 = vmatprep.subr.bf16.mxu0 0
        %3645 = vmatpush2.bf16.msra.mxu0 0
        %3646 = vmatprep.subr.bf16.mxu0 0
        %3647 = vmatpush2.bf16.msra.mxu0 0
        %3648 = vmatprep.subr.bf16.mxu0 0
        %3649 = vmatpush2.bf16.msra.mxu0 0
        %3650 = vmatprep.subr.bf16.mxu0 0
        %3651 = vmatpush2.bf16.msra.mxu0 0
        %3652 = vmatprep.subr.bf16.mxu0 0
        %3653 = vmatpush2.bf16.msra.mxu0 0
        %3654 = vmatprep.subr.bf16.mxu0 0
        %3655 = vmatpush2.bf16.msra.mxu0 0
        %3656 = vmatprep.subr.bf16.mxu0 0
        %3657 = vmatpush2.bf16.msra.mxu0 0
        %3658 = vmatprep.mubr.bf16.mxu0 0
        %3659 = vmatmul.mubr.bf16.gmra.mxu0 %v3615
        %v3660 = vpop.f32.mrf.mxu0
        %v3661 = vadd.f32 0.0, %v3660
        %v3662 = vpop.f32.mrf.mxu0
        %v3663 = vadd.f32 0.0, %v3662
        %v3664 = vpop.f32.mrf.mxu0
        %v3665 = vadd.f32 0.0, %v3664
        %v3666 = vpop.f32.mrf.mxu0
        %v3667 = vadd.f32 0.0, %v3666
        %3668 = vmatprep.mubr.bf16.mxu0 0
        %3669 = vmatmul.mubr.bf16.gmra.mxu0 %v3618
        %v3670 = vpop.f32.mrf.mxu0
        %v3671 = vadd.f32 0.0, %v3670
        %v3672 = vpop.f32.mrf.mxu0
        %v3673 = vadd.f32 0.0, %v3672
        %v3674 = vpop.f32.mrf.mxu0
        %v3675 = vadd.f32 0.0, %v3674
        %v3676 = vpop.f32.mrf.mxu0
        %v3677 = vadd.f32 0.0, %v3676
        %3678 = vmatprep.mubr.bf16.mxu0 0
        %3679 = vmatmul.mubr.bf16.gmra.mxu0 %v3621
        %v3680 = vpop.f32.mrf.mxu0
        %v3681 = vadd.f32 0.0, %v3680
        %v3682 = vpop.f32.mrf.mxu0
        %v3683 = vadd.f32 0.0, %v3682
        %v3684 = vpop.f32.mrf.mxu0
        %v3685 = vadd.f32 0.0, %v3684
        %v3686 = vpop.f32.mrf.mxu0
        %v3687 = vadd.f32 0.0, %v3686
        %3688 = vmatprep.mubr.bf16.mxu0 0
        %3689 = vmatmul.mubr.bf16.gmra.mxu0 %v3624
        %v3690 = vpop.f32.mrf.mxu0
        %v3691 = vadd.f32 0.0, %v3690
        %v3692 = vpop.f32.mrf.mxu0
        %v3693 = vadd.f32 0.0, %v3692
        %v3694 = vpop.f32.mrf.mxu0
        %v3695 = vadd.f32 0.0, %v3694
        %v3696 = vpop.f32.mrf.mxu0
        %v3697 = vadd.f32 0.0, %v3696
        %3698 = vdwg.mxu0
        %v3699 = vadd.f32 %v3497, %v3661
        %v3700 = vadd.f32 %v3498, %v3663
        %v3701 = vadd.f32 %v3499, %v3665
        %v3702 = vadd.f32 %v3500, %v3667
        %v3703 = vadd.f32 %v3501, %v3671
        %v3704 = vadd.f32 %v3502, %v3673
        %v3705 = vadd.f32 %v3503, %v3675
        %v3706 = vadd.f32 %v3504, %v3677
        %v3707 = vadd.f32 %v3505, %v3681
        %v3708 = vadd.f32 %v3506, %v3683
        %v3709 = vadd.f32 %v3507, %v3685
        %v3710 = vadd.f32 %v3508, %v3687
        %v3711 = vadd.f32 %v3509, %v3691
        %v3712 = vadd.f32 %v3510, %v3693
        %v3713 = vadd.f32 %v3511, %v3695
        %v3714 = vadd.f32 %v3512, %v3697
        %3715 = vrot.lane.b32.xlu0 %v2180, 111
        %v3716 = vpop.permute.xlu0 %3715
        %3717 = vrot.lane.b32.xlu0 %v2182, 111
        %v3718 = vpop.permute.xlu0 %3717
        %3719 = vrot.lane.b32.xlu0 %v2184, 111
        %v3720 = vpop.permute.xlu0 %3719
        %3721 = vrot.lane.b32.xlu0 %v2186, 111
        %v3722 = vpop.permute.xlu0 %3721
        %3723 = vrot.lane.b32.xlu0 %v2188, 111
        %v3724 = vpop.permute.xlu0 %3723
        %3725 = vrot.lane.b32.xlu0 %v2190, 111
        %v3726 = vpop.permute.xlu0 %3725
        %3727 = vrot.lane.b32.xlu0 %v2192, 111
        %v3728 = vpop.permute.xlu0 %3727
        %3729 = vrot.lane.b32.xlu0 %v2194, 111
        %v3730 = vpop.permute.xlu0 %3729
        %3731 = vrot.lane.b32.xlu0 %v2181, 111
        %v3732 = vpop.permute.xlu0 %3731
        %3733 = vrot.lane.b32.xlu0 %v2183, 111
        %v3734 = vpop.permute.xlu0 %3733
        %3735 = vrot.lane.b32.xlu0 %v2185, 111
        %v3736 = vpop.permute.xlu0 %3735
        %3737 = vrot.lane.b32.xlu0 %v2187, 111
        %v3738 = vpop.permute.xlu0 %3737
        %3739 = vrot.lane.b32.xlu0 %v2189, 111
        %v3740 = vpop.permute.xlu0 %3739
        %3741 = vrot.lane.b32.xlu0 %v2191, 111
        %v3742 = vpop.permute.xlu0 %3741
        %3743 = vrot.lane.b32.xlu0 %v2193, 111
        %v3744 = vpop.permute.xlu0 %3743
        %3745 = vrot.lane.b32.xlu0 %v2195, 111
        %v3746 = vpop.permute.xlu0 %3745
        %v3747 = vsel %vm1937, %v3716, %v3732
        %v3748 = vsel %vm1937, %v3718, %v3734
        %v3749 = vsel %vm1937, %v3720, %v3736
        %v3750 = vsel %vm1937, %v3722, %v3738
        %v3751 = vsel %vm1937, %v3724, %v3740
        %v3752 = vsel %vm1937, %v3726, %v3742
        %v3753 = vsel %vm1937, %v3728, %v3744
        %v3754 = vsel %vm1937, %v3730, %v3746
        %v3755 = vsel %vm1937, %v3732, %v3716
        %v3756 = vsel %vm1937, %v3734, %v3718
        %v3757 = vsel %vm1937, %v3736, %v3720
        %v3758 = vsel %vm1937, %v3738, %v3722
        %v3759 = vsel %vm1937, %v3740, %v3724
        %v3760 = vsel %vm1937, %v3742, %v3726
        %v3761 = vsel %vm1937, %v3744, %v3728
        %v3762 = vsel %vm1937, %v3746, %v3730
        %v3763 = vmul.f32 %v3747, %v1957
        %v3764 = vmul.f32 %v3755, %v1961
        %v3765 = vmul.f32 %v3748, %v1957
        %v3766 = vmul.f32 %v3756, %v1961
        %v3767 = vmul.f32 %v3749, %v1957
        %v3768 = vmul.f32 %v3757, %v1961
        %v3769 = vmul.f32 %v3750, %v1957
        %v3770 = vmul.f32 %v3758, %v1961
        %v3771 = vmul.f32 %v3751, %v1957
        %v3772 = vmul.f32 %v3759, %v1961
        %v3773 = vmul.f32 %v3752, %v1957
        %v3774 = vmul.f32 %v3760, %v1961
        %v3775 = vmul.f32 %v3753, %v1957
        %v3776 = vmul.f32 %v3761, %v1961
        %v3777 = vmul.f32 %v3754, %v1957
        %v3778 = vmul.f32 %v3762, %v1961
        %s3779 = scalar_lea.vmem [#allocation7], 256
        %v3780 = vld [vmem:[%s3779] sm:$0xf]
        %v3781 = vld [vmem:[%s3779 + $0x4] sm:$0xf]
        %v3782 = vld [vmem:[%s3779 + $0x8] sm:$0xf]
        %v3783 = vld [vmem:[%s3779 + $0xc] sm:$0xf]
        %v3784 = vld [vmem:[%s3779 + $0x10] sm:$0xf]
        %v3785 = vld [vmem:[%s3779 + $0x14] sm:$0xf]
        %v3786 = vld [vmem:[%s3779 + $0x18] sm:$0xf]
        %v3787 = vld [vmem:[%s3779 + $0x1c] sm:$0xf]
        %v3788 = vpack.c.bf16 %v3765, %v3763
        %v3789 = vpack.c.bf16 %v3766, %v3764
        %v3790 = vpack.c.bf16 %v3769, %v3767
        %v3791 = vpack.c.bf16 %v3770, %v3768
        %v3792 = vpack.c.bf16 %v3773, %v3771
        %v3793 = vpack.c.bf16 %v3774, %v3772
        %v3794 = vpack.c.bf16 %v3777, %v3775
        %v3795 = vpack.c.bf16 %v3778, %v3776
        %v3804 = vunpack.c.l.b16 %v3780
        %v3805 = vunpack.c.l.b16 %v3781
        %v3806 = vunpack.c.l.b16 %v3782
        %v3807 = vunpack.c.l.b16 %v3783
        %v3808 = vunpack.c.l.b16 %v3784
        %v3809 = vunpack.c.l.b16 %v3785
        %v3810 = vunpack.c.l.b16 %v3786
        %v3811 = vunpack.c.l.b16 %v3787
        %v3812 = vpack.c.b16 %v3805, %v3804
        %v3813 = vpack.c.b16 %v3807, %v3806
        %v3814 = vpack.c.b16 %v3809, %v3808
        %v3815 = vpack.c.b16 %v3811, %v3810
        %v3817 = vsel %vm521, %v3812, 0
        %v3820 = vsel %vm521, %v3813, 0
        %v3823 = vsel %vm521, %v3814, 0
        %v3826 = vsel %vm521, %v3815, 0
        %3828 = vmatprep.subr.bf16.mxu0 0
        %3829 = vmatpush1.bf16.msra.mxu0 0
        %3830 = vmatprep.subr.bf16.mxu0 0
        %3831 = vmatpush1.bf16.msra.mxu0 0
        %3832 = vmatprep.subr.bf16.mxu0 0
        %3833 = vmatpush1.bf16.msra.mxu0 0
        %3834 = vmatprep.subr.bf16.mxu0 0
        %3835 = vmatpush1.bf16.msra.mxu0 0
        %3836 = vmatprep.subr.bf16.mxu0 %v3795
        %3837 = vmatpush1.bf16.msra.mxu0 %v3794
        %3838 = vmatprep.subr.bf16.mxu0 %v3793
        %3839 = vmatpush1.bf16.msra.mxu0 %v3792
        %3840 = vmatprep.subr.bf16.mxu0 %v3791
        %3841 = vmatpush1.bf16.msra.mxu0 %v3790
        %3842 = vmatprep.subr.bf16.mxu0 %v3789
        %3843 = vmatpush1.bf16.msra.mxu0 %v3788
        %3844 = vmatprep.subr.bf16.mxu0 0
        %3845 = vmatpush2.bf16.msra.mxu0 0
        %3846 = vmatprep.subr.bf16.mxu0 0
        %3847 = vmatpush2.bf16.msra.mxu0 0
        %3848 = vmatprep.subr.bf16.mxu0 0
        %3849 = vmatpush2.bf16.msra.mxu0 0
        %3850 = vmatprep.subr.bf16.mxu0 0
        %3851 = vmatpush2.bf16.msra.mxu0 0
        %3852 = vmatprep.subr.bf16.mxu0 0
        %3853 = vmatpush2.bf16.msra.mxu0 0
        %3854 = vmatprep.subr.bf16.mxu0 0
        %3855 = vmatpush2.bf16.msra.mxu0 0
        %3856 = vmatprep.subr.bf16.mxu0 0
        %3857 = vmatpush2.bf16.msra.mxu0 0
        %3858 = vmatprep.subr.bf16.mxu0 0
        %3859 = vmatpush2.bf16.msra.mxu0 0
        %3860 = vmatprep.mubr.bf16.mxu0 0
        %3861 = vmatmul.mubr.bf16.gmra.mxu0 %v3817
        %v3862 = vpop.f32.mrf.mxu0
        %v3863 = vadd.f32 0.0, %v3862
        %v3864 = vpop.f32.mrf.mxu0
        %v3865 = vadd.f32 0.0, %v3864
        %v3866 = vpop.f32.mrf.mxu0
        %v3867 = vadd.f32 0.0, %v3866
        %v3868 = vpop.f32.mrf.mxu0
        %v3869 = vadd.f32 0.0, %v3868
        %3870 = vmatprep.mubr.bf16.mxu0 0
        %3871 = vmatmul.mubr.bf16.gmra.mxu0 %v3820
        %v3872 = vpop.f32.mrf.mxu0
        %v3873 = vadd.f32 0.0, %v3872
        %v3874 = vpop.f32.mrf.mxu0
        %v3875 = vadd.f32 0.0, %v3874
        %v3876 = vpop.f32.mrf.mxu0
        %v3877 = vadd.f32 0.0, %v3876
        %v3878 = vpop.f32.mrf.mxu0
        %v3879 = vadd.f32 0.0, %v3878
        %3880 = vmatprep.mubr.bf16.mxu0 0
        %3881 = vmatmul.mubr.bf16.gmra.mxu0 %v3823
        %v3882 = vpop.f32.mrf.mxu0
        %v3883 = vadd.f32 0.0, %v3882
        %v3884 = vpop.f32.mrf.mxu0
        %v3885 = vadd.f32 0.0, %v3884
        %v3886 = vpop.f32.mrf.mxu0
        %v3887 = vadd.f32 0.0, %v3886
        %v3888 = vpop.f32.mrf.mxu0
        %v3889 = vadd.f32 0.0, %v3888
        %3890 = vmatprep.mubr.bf16.mxu0 0
        %3891 = vmatmul.mubr.bf16.gmra.mxu0 %v3826
        %v3892 = vpop.f32.mrf.mxu0
        %v3893 = vadd.f32 0.0, %v3892
        %v3894 = vpop.f32.mrf.mxu0
        %v3895 = vadd.f32 0.0, %v3894
        %v3896 = vpop.f32.mrf.mxu0
        %v3897 = vadd.f32 0.0, %v3896
        %v3898 = vpop.f32.mrf.mxu0
        %v3899 = vadd.f32 0.0, %v3898
        %3900 = vdwg.mxu0
        %v3901 = vadd.f32 %v3699, %v3863
        %v3902 = vadd.f32 %v3700, %v3865
        %v3903 = vadd.f32 %v3701, %v3867
        %v3904 = vadd.f32 %v3702, %v3869
        %v3905 = vadd.f32 %v3703, %v3873
        %v3906 = vadd.f32 %v3704, %v3875
        %v3907 = vadd.f32 %v3705, %v3877
        %v3908 = vadd.f32 %v3706, %v3879
        %v3909 = vadd.f32 %v3707, %v3883
        %v3910 = vadd.f32 %v3708, %v3885
        %v3911 = vadd.f32 %v3709, %v3887
        %v3912 = vadd.f32 %v3710, %v3889
        %v3913 = vadd.f32 %v3711, %v3893
        %v3914 = vadd.f32 %v3712, %v3895
        %v3915 = vadd.f32 %v3713, %v3897
        %v3916 = vadd.f32 %v3714, %v3899
        %v3917 = vld [vmem:[%s4] sm:$0xff]
        %v3918 = vld [vmem:[%s4 + $0x8] sm:$0xff]
        %v3919 = vld [vmem:[%s4 + $0x10] sm:$0xff]
        %v3920 = vld [vmem:[%s4 + $0x18] sm:$0xff]
        %v3921 = vld [vmem:[%s4 + $0x20] sm:$0xff]
        %v3922 = vld [vmem:[%s4 + $0x28] sm:$0xff]
        %v3923 = vld [vmem:[%s4 + $0x30] sm:$0xff]
        %v3924 = vld [vmem:[%s4 + $0x38] sm:$0xff]
        %3926 = vset.pattern.permute.xlu0 0
        %3927 = vperm.xlu0 %3926, %v3917
        %v3928 = vpop.permute.xlu0 %3927
        %3931 = vset.pattern.permute.xlu0 0
        %3932 = vperm.xlu0 %3931, %v3918
        %v3933 = vpop.permute.xlu0 %3932
        %3936 = vset.pattern.permute.xlu0 0
        %3937 = vperm.xlu0 %3936, %v3919
        %v3938 = vpop.permute.xlu0 %3937
        %3941 = vset.pattern.permute.xlu0 0
        %3942 = vperm.xlu0 %3941, %v3920
        %v3943 = vpop.permute.xlu0 %3942
        %3946 = vset.pattern.permute.xlu0 0
        %3947 = vperm.xlu0 %3946, %v3921
        %v3948 = vpop.permute.xlu0 %3947
        %3951 = vset.pattern.permute.xlu0 0
        %3952 = vperm.xlu0 %3951, %v3922
        %v3953 = vpop.permute.xlu0 %3952
        %3956 = vset.pattern.permute.xlu0 0
        %3957 = vperm.xlu0 %3956, %v3923
        %v3958 = vpop.permute.xlu0 %3957
        %3961 = vset.pattern.permute.xlu0 0
        %3962 = vperm.xlu0 %3961, %v3924
        %v3963 = vpop.permute.xlu0 %3962
        %v3965 = vadd.f32 %v3901, %v3928
        %v3966 = vadd.f32 %v3902, %v3928
        %v3967 = vadd.f32 %v3903, %v3933
        %v3968 = vadd.f32 %v3904, %v3933
        %v3969 = vadd.f32 %v3905, %v3938
        %v3970 = vadd.f32 %v3906, %v3938
        %v3971 = vadd.f32 %v3907, %v3943
        %v3972 = vadd.f32 %v3908, %v3943
        %v3973 = vadd.f32 %v3909, %v3948
        %v3974 = vadd.f32 %v3910, %v3948
        %v3975 = vadd.f32 %v3911, %v3953
        %v3976 = vadd.f32 %v3912, %v3953
        %v3977 = vadd.f32 %v3913, %v3958
        %v3978 = vadd.f32 %v3914, %v3958
        %v3979 = vadd.f32 %v3915, %v3963
        %v3980 = vadd.f32 %v3916, %v3963
        %v3981 = vadd.f32 %v300, %v3965
        %v3982 = vadd.f32 %v301, %v3966
        %v3983 = vadd.f32 %v302, %v3967
        %v3984 = vadd.f32 %v303, %v3968
        %v3985 = vadd.f32 %v304, %v3969
        %v3986 = vadd.f32 %v305, %v3970
        %v3987 = vadd.f32 %v306, %v3971
        %v3988 = vadd.f32 %v307, %v3972
        %v3989 = vadd.f32 %v308, %v3973
        %v3990 = vadd.f32 %v309, %v3974
        %v3991 = vadd.f32 %v310, %v3975
        %v3992 = vadd.f32 %v311, %v3976
        %v3993 = vadd.f32 %v312, %v3977
        %v3994 = vadd.f32 %v313, %v3978
        %v3995 = vadd.f32 %v314, %v3979
        %v3996 = vadd.f32 %v315, %v3980
        %3997 = vst [vmem:[%s298] sm:$0xff] %v3981
        %3998 = vst [vmem:[%s298 + $0x8] sm:$0xff] %v3982
        %3999 = vst [vmem:[%s298 + $0x10] sm:$0xff] %v3983
        %4000 = vst [vmem:[%s298 + $0x18] sm:$0xff] %v3984
        %4001 = vst [vmem:[%s298 + $0x20] sm:$0xff] %v3985
        %4002 = vst [vmem:[%s298 + $0x28] sm:$0xff] %v3986
        %4003 = vst [vmem:[%s298 + $0x30] sm:$0xff] %v3987
        %4004 = vst [vmem:[%s298 + $0x38] sm:$0xff] %v3988
        %4005 = vst [vmem:[%s298 + $0x40] sm:$0xff] %v3989
        %4006 = vst [vmem:[%s298 + $0x48] sm:$0xff] %v3990
        %4007 = vst [vmem:[%s298 + $0x50] sm:$0xff] %v3991
        %4008 = vst [vmem:[%s298 + $0x58] sm:$0xff] %v3992
        %4009 = vst [vmem:[%s298 + $0x60] sm:$0xff] %v3993
        %4010 = vst [vmem:[%s298 + $0x68] sm:$0xff] %v3994
        %4011 = vst [vmem:[%s298 + $0x70] sm:$0xff] %v3995
        %4012 = vst [vmem:[%s298 + $0x78] sm:$0xff] %v3996
        %s4013 = sand.u32 %s163, 1
        %s4014 = scalar_lea.sflag [#allocation4], %s4013
        %s4015 = sand.u32 %s163, 1
        %s4016 = smul.addr %s4015, 128
        %s4017 = scalar_lea.vmem [#allocation8], %s4016
        // Predicated region
        $region57: #{tpu_custom_call.1} parent=43 // pred_check
          %p4018 = pneg %p173
        $region58: #{tpu_custom_call.1} parent=43 // pred_check_branch
          %4020 = sbr.rel (%p4018) target = $region60
        $region59: #{tpu_custom_call.1} parent=43 // pred_region
          %s4022 = ssub.s32 2048, 2048
          %4023 = vsyncadd %s4014, %s4022
          %s4024 = smul.addr %s24, 16
          %s4025 = smul.addr %s4024, 128
          %s4026 = scalar_lea.hbm %s6, %s4025
          %s4027 = sshll.u32 %s4017, 4
          %s4028 = int_to_ptr.vmem [resolvable:$true] %s4027
          %4033 = dma.vmem_to_hbm [thread:$0]  %s4028, 2048, %s4026, %s4014, 256, 256, 16
        $region60: #{tpu_custom_call.1} parent=43 // pred_fallthru
          _
      $region44: #{tpu_custom_call.1} parent=5 // pred_fallthru
        _
      %p4034 = scmp.le.s32.totalorder 2, %s19
      // Predicated region
      $region61: #{tpu_custom_call.1} parent=5 // pred_check
        %p4035 = pneg %p4034
      $region62: #{tpu_custom_call.1} parent=5 // pred_check_branch
        %4037 = sbr.rel (%p4035) target = $region64
      $region63: #{tpu_custom_call.1} parent=5 // pred_region
        %s4038 = ssub.s32 %s19, 2
        // Predicated region
        $region65: #{tpu_custom_call.1} parent=63 // pred_check
          %p4039 = pneg %p179
        $region66: #{tpu_custom_call.1} parent=63 // pred_check_branch
          %4041 = sbr.rel (%p4039) target = $region68
        $region67: #{tpu_custom_call.1} parent=63 // pred_region
          %s4042 = sand.u32 %s164, 1
          %s4043 = scalar_lea.sflag [#allocation4], %s4042
          %s4044 = sand.u32 %s164, 1
          %s4045 = smul.addr %s4044, 128
          %s4046 = scalar_lea.vmem [#allocation8], %s4045
          %4047 = dma.done %s4043, 2048
        $region68: #{tpu_custom_call.1} parent=63 // pred_fallthru
          _
      $region64: #{tpu_custom_call.1} parent=5 // pred_fallthru
        _
    $region6: #{tpu_custom_call.1} parent=1 // loop_footer
      %s23 = sadd.s32 1, %s19
    $region7: #{tpu_custom_call.1} parent=1 // loop_footer_branch
      %18 = sbr.rel target = $region3
    $region8: #{tpu_custom_call.1} parent=1 // loop_exit
      _
    %4048 = vsyncpa [#allocation3], 1
    %s4049 = scalar_lea.sflag [#allocation3], 1
    %4050 = vsyncpa %s4049, 1
    %4051 = vsyncpa [#allocation6], 1
    %4052 = vsyncpa [#allocation4], 1
    %s4053 = scalar_lea.sflag [#allocation4], 1
    %4054 = vsyncpa %s4053, 1

</llo_original>
